<compile_context>
chip_gen: v7x
topology: tpu7x:2x2x1
jax: 0.10.0
libtpu: 0.0.40
codegen_flags: <defaults>
</compile_context>

<pallas_src>
import numpy as np
import jax
import jax.numpy as jnp
from jax import lax
from jax.experimental import pallas as pl
from jax.experimental.pallas import tpu as pltpu

BN_EPS = 1e-5


# ---------------------------------------------------------------------------
# Fused kernel: one grid step == one image (NHWC, channels on the lane axis).
# ---------------------------------------------------------------------------
def _basic_block2_kernel(x_ref, w1_ref, b1_ref, w2_ref, b2_ref,
                         w3_ref, b3_ref, w4_ref, b4_ref,
                         o_ref, xp_ref, hp_ref):
    _, H, W, Cin = x_ref.shape
    Cout = o_ref.shape[3]

    # ---- stage 1: depthwise 3x3 conv1 + folded BN1 + ReLU6 (VPU) ------------
    xp_ref[...] = jnp.zeros_like(xp_ref)           # zero pad border in VMEM
    xp_ref[1:H + 1, 1:W + 1, :] = x_ref[0]
    w1 = w1_ref[...]                               # (9, Cin), BN1 scale folded in
    h1 = jnp.zeros((H, W, Cin), jnp.float32)
    for k in range(9):                             # 9 shifted VPU MACs, no im2col
        kh, kw = k // 3, k % 3
        h1 = h1 + w1[k:k + 1, :] * xp_ref[kh:kh + H, kw:kw + W, :]
    h1 = jnp.clip(h1 + b1_ref[...], 0.0, 6.0)      # shift + ReLU6

    # ---- stage 2+3: 1x1 conv2 + BN2, then 1x1 conv3 + BN3 + ReLU6 (MXU) -----
    h1_2d = h1.reshape(H * W, Cin).astype(jnp.bfloat16)
    h2 = jnp.dot(h1_2d, w2_ref[...],
                 preferred_element_type=jnp.float32) + b2_ref[...]
    h3 = jnp.dot(h2.astype(jnp.bfloat16), w3_ref[...],
                 preferred_element_type=jnp.float32) + b3_ref[...]
    h3 = jnp.clip(h3, 0.0, 6.0).reshape(H, W, Cout)

    # ---- stage 4: depthwise 3x3 conv4 + folded BN4 (no activation) ----------
    hp_ref[...] = jnp.zeros_like(hp_ref)           # conv4's zero padding
    hp_ref[1:H + 1, 1:W + 1, :] = h3
    w4 = w4_ref[...]                               # (9, Cout), BN4 scale folded in
    out = jnp.zeros((H, W, Cout), jnp.float32)
    for k in range(9):
        kh, kw = k // 3, k % 3
        out = out + w4[k:k + 1, :] * hp_ref[kh:kh + H, kw:kw + W, :]
    o_ref[0] = (out + b4_ref[...]).astype(o_ref.dtype)


# ---------------------------------------------------------------------------
# Parameter folding (eval-mode BN -> scale folded into weights, shift kept).
# ---------------------------------------------------------------------------
def _fold_bn(gamma, beta, mean, var):
    scale = gamma / jnp.sqrt(var + BN_EPS)
    shift = beta - mean * scale
    return scale, shift


def basic_block2_forward(x_nchw, p, stride=1):
    x = jnp.transpose(x_nchw, (0, 2, 3, 1)).astype(jnp.float32)   # NCHW -> NHWC
    N, H, W, Cin = x.shape
    Cmid = Cin // 2
    Cout = p["w3"].shape[0]

    s1, t1 = _fold_bn(*p["bn1"])
    s2, t2 = _fold_bn(*p["bn2"])
    s3, t3 = _fold_bn(*p["bn3"])
    s4, t4 = _fold_bn(*p["bn4"])

    # depthwise weights: (C,1,3,3) -> (9, C), BN scale folded per channel (f32, VPU)
    w1f = (jnp.transpose(p["w1"][:, 0], (1, 2, 0)).reshape(9, Cin) * s1[None, :])
    w4f = (jnp.transpose(p["w4"][:, 0], (1, 2, 0)).reshape(9, Cout) * s4[None, :])
    # 1x1 weights: (Co,Ci,1,1) -> (Ci, Co), BN scale folded per out-channel, bf16 (MXU)
    w2f = (p["w2"][:, :, 0, 0].T * s2[None, :]).astype(jnp.bfloat16)
    w3f = (p["w3"][:, :, 0, 0].T * s3[None, :]).astype(jnp.bfloat16)
    b1 = t1.reshape(1, Cin).astype(jnp.float32)
    b2 = t2.reshape(1, Cmid).astype(jnp.float32)
    b3 = t3.reshape(1, Cout).astype(jnp.float32)
    b4 = t4.reshape(1, Cout).astype(jnp.float32)

    out_nhwc = pl.pallas_call(
        _basic_block2_kernel,
        out_shape=jax.ShapeDtypeStruct((N, H, W, Cout), jnp.float32),
        grid=(N,),
        in_specs=[
            pl.BlockSpec((1, H, W, Cin), lambda n: (n, 0, 0, 0)),   # activations
            pl.BlockSpec((9, Cin), lambda n: (0, 0)),               # w1 (folded)
            pl.BlockSpec((1, Cin), lambda n: (0, 0)),               # bn1 shift
            pl.BlockSpec((Cin, Cmid), lambda n: (0, 0)),            # w2 (bf16, folded)
            pl.BlockSpec((1, Cmid), lambda n: (0, 0)),              # bn2 shift
            pl.BlockSpec((Cmid, Cout), lambda n: (0, 0)),           # w3 (bf16, folded)
            pl.BlockSpec((1, Cout), lambda n: (0, 0)),              # bn3 shift
            pl.BlockSpec((9, Cout), lambda n: (0, 0)),              # w4 (folded)
            pl.BlockSpec((1, Cout), lambda n: (0, 0)),              # bn4 shift
        ],
        out_specs=pl.BlockSpec((1, H, W, Cout), lambda n: (n, 0, 0, 0)),
        scratch_shapes=[
            pltpu.VMEM((H + 2, W + 2, Cin), jnp.float32),   # zero-padded x
            pltpu.VMEM((H + 2, W + 2, Cout), jnp.float32),  # zero-padded conv3 out
        ],
        compiler_params=pltpu.CompilerParams(
            dimension_semantics=("parallel",)),
    )(x, w1f, b1, w2f, b2, w3f, b3, w4f, b4)

    out = jnp.transpose(out_nhwc, (0, 3, 1, 2))              # NHWC -> NCHW
    if stride > 1:
        # 3x3/pad=1 conv with stride s == stride-1 conv subsampled at [::s]
        # (BN4 is pointwise, so it commutes with the subsampling).
        out = out[:, :, ::stride, ::stride]
    return out


# ---------------------------------------------------------------------------
# Pure-JAX reference (unfolded BN) for correctness checking.
# ---------------------------------------------------------------------------
def basic_block2_reference(x_nchw, p, stride=1):
    x = x_nchw.astype(jnp.float32)

    def bn(y, stats):
        g, b, m, v = stats
        s = g / jnp.sqrt(v + BN_EPS)
        return y * s.reshape(1, -1, 1, 1) + (b - m * s).reshape(1, -1, 1, 1)

    def dw3x3(y, w, st=1):
        return lax.conv_general_dilated(
            y, w, window_strides=(st, st), padding=[(1, 1), (1, 1)],
            dimension_numbers=("NCHW", "OIHW", "NCHW"),
            feature_group_count=y.shape[1])

    def pw(y, w):
        return lax.conv_general_dilated(
            y, w, window_strides=(1, 1), padding=[(0, 0), (0, 0)],
            dimension_numbers=("NCHW", "OIHW", "NCHW"))

    relu6 = lambda t: jnp.clip(t, 0.0, 6.0)
    out = relu6(bn(dw3x3(x, p["w1"]), p["bn1"]))
    out = bn(pw(out, p["w2"]), p["bn2"])
    out = relu6(bn(pw(out, p["w3"]), p["bn3"]))
    out = bn(dw3x3(out, p["w4"], stride), p["bn4"])
    return out


# ---------------------------------------------------------------------------
# Deterministic parameter init (shapes follow BasicBlock2.__init__).
# ---------------------------------------------------------------------------
def init_params(key, in_channel, out_channel):
    cmid = in_channel // 2
    ks = iter(jax.random.split(key, 8))

    def bn_params(k, c):
        kg, kb, km, kv = jax.random.split(k, 4)
        gamma = 1.0 + 0.1 * jax.random.normal(kg, (c,), jnp.float32)
        beta = 0.1 * jax.random.normal(kb, (c,), jnp.float32)
        mean = 0.05 * jax.random.normal(km, (c,), jnp.float32)
        var = 1.0 + 0.1 * jax.random.uniform(kv, (c,), jnp.float32)
        return (gamma, beta, mean, var)

    p = {}
    p["w1"] = 0.3 * jax.random.normal(next(ks), (in_channel, 1, 3, 3), jnp.float32)
    p["bn1"] = bn_params(next(ks), in_channel)
    p["w2"] = 0.2 * jax.random.normal(next(ks), (cmid, in_channel, 1, 1), jnp.float32)
    p["bn2"] = bn_params(next(ks), cmid)
    p["w3"] = 0.25 * jax.random.normal(next(ks), (out_channel, cmid, 1, 1), jnp.float32)
    p["bn3"] = bn_params(next(ks), out_channel)
    p["w4"] = 0.3 * jax.random.normal(next(ks), (out_channel, 1, 3, 3), jnp.float32)
    p["bn4"] = bn_params(next(ks), out_channel)
    return p


if __name__ == "__main__":
    N, Cin, Cout, H, W = 2, 32, 32, 16, 16
    stride = 1  # module default

    key = jax.random.PRNGKey(0)
    kx, kp = jax.random.split(key)
    x = jax.random.normal(kx, (N, Cin, H, W), jnp.float32)
    params = init_params(kp, Cin, Cout)

    out = basic_block2_forward(x, params, stride=stride)
    out = jax.block_until_ready(out)
    assert out.shape == (N, Cout, H, W), out.shape

    ref = basic_block2_reference(x, params, stride=stride)
    # tolerance accounts for bf16 MXU matmuls on the two 1x1 convs
    np.testing.assert_allclose(np.asarray(out), np.asarray(ref), rtol=3e-2, atol=3e-2)

    print("KERNEL_OK")
</pallas_src>

<mosaic_0001>
module attributes {stable_mosaic.version = 11 : i64} {
  func.func @_basic_block2_kernel(%arg0: i32, %arg1: memref<1x16x16x32xf32, #tpu.memory_space<vmem>>, %arg2: memref<9x32xf32, #tpu.memory_space<vmem>>, %arg3: memref<1x32xf32, #tpu.memory_space<vmem>>, %arg4: memref<32x16xbf16, #tpu.memory_space<vmem>>, %arg5: memref<1x16xf32, #tpu.memory_space<vmem>>, %arg6: memref<16x32xbf16, #tpu.memory_space<vmem>>, %arg7: memref<1x32xf32, #tpu.memory_space<vmem>>, %arg8: memref<9x32xf32, #tpu.memory_space<vmem>>, %arg9: memref<1x32xf32, #tpu.memory_space<vmem>>, %arg10: memref<1x16x16x32xf32, #tpu.memory_space<vmem>>, %arg11: memref<18x18x32xf32, #tpu.memory_space<vmem>>, %arg12: memref<18x18x32xf32, #tpu.memory_space<vmem>>) attributes {dimension_semantics = [#tpu.dimension_semantics<parallel>], iteration_bounds = array<i64: 2>, scalar_prefetch = 0 : i64, scratch_operands = 2 : i64, tpu.core_type = #tpu.core_type<tc>, window_params = [{transform_indices = @transform_0, window_bounds = array<i64: 1, 16, 16, 32>}, {pipeline_mode = #tpu.pipeline_mode<synchronous>, transform_indices = @transform_1, window_bounds = array<i64: 9, 32>}, {pipeline_mode = #tpu.pipeline_mode<synchronous>, transform_indices = @transform_2, window_bounds = array<i64: 1, 32>}, {pipeline_mode = #tpu.pipeline_mode<synchronous>, transform_indices = @transform_3, window_bounds = array<i64: 32, 16>}, {pipeline_mode = #tpu.pipeline_mode<synchronous>, transform_indices = @transform_4, window_bounds = array<i64: 1, 16>}, {pipeline_mode = #tpu.pipeline_mode<synchronous>, transform_indices = @transform_5, window_bounds = array<i64: 16, 32>}, {pipeline_mode = #tpu.pipeline_mode<synchronous>, transform_indices = @transform_6, window_bounds = array<i64: 1, 32>}, {pipeline_mode = #tpu.pipeline_mode<synchronous>, transform_indices = @transform_7, window_bounds = array<i64: 9, 32>}, {pipeline_mode = #tpu.pipeline_mode<synchronous>, transform_indices = @transform_8, window_bounds = array<i64: 1, 32>}, {transform_indices = @transform_9, window_bounds = array<i64: 1, 16, 16, 32>}]} {
    %cst = arith.constant 0.000000e+00 : f32
    %0 = vector.broadcast %cst : f32 to vector<18x18x32xf32>
    %c0 = arith.constant 0 : index
    %c0_0 = arith.constant 0 : index
    %c0_1 = arith.constant 0 : index
    %1 = vector.load %arg11[%c0, %c0_0, %c0_1] : memref<18x18x32xf32, #tpu.memory_space<vmem>>, vector<18x18x32xf32>
    tpu.vector_store %arg11[%c0, %c0_0, %c0_1], %0 {strides = array<i32>} : memref<18x18x32xf32, #tpu.memory_space<vmem>>, vector<18x18x32xf32>,
    %c0_2 = arith.constant 0 : index
    %c0_3 = arith.constant 0 : index
    %c0_4 = arith.constant 0 : index
    %c0_5 = arith.constant 0 : index
    %2 = vector.load %arg1[%c0_2, %c0_3, %c0_4, %c0_5] : memref<1x16x16x32xf32, #tpu.memory_space<vmem>>, vector<1x16x16x32xf32>
    %3 = vector.shape_cast %2 : vector<1x16x16x32xf32> to vector<16x16x32xf32>
    %c1 = arith.constant 1 : index
    %c1_6 = arith.constant 1 : index
    %c0_7 = arith.constant 0 : index
    %4 = vector.load %arg11[%c1, %c1_6, %c0_7] : memref<18x18x32xf32, #tpu.memory_space<vmem>>, vector<16x16x32xf32>
    tpu.vector_store %arg11[%c1, %c1_6, %c0_7], %3 {strides = array<i32>} : memref<18x18x32xf32, #tpu.memory_space<vmem>>, vector<16x16x32xf32>,
    %c0_8 = arith.constant 0 : index
    %c0_9 = arith.constant 0 : index
    %5 = vector.load %arg2[%c0_8, %c0_9] : memref<9x32xf32, #tpu.memory_space<vmem>>, vector<9x32xf32>
    %cst_10 = arith.constant 0.000000e+00 : f32
    %6 = vector.broadcast %cst_10 : f32 to vector<16x16x32xf32>
    %7 = vector.extract_strided_slice %5 {offsets = [0, 0], sizes = [1, 32], strides = [1, 1]} : vector<9x32xf32> to vector<1x32xf32>
    %c0_11 = arith.constant 0 : index
    %c0_12 = arith.constant 0 : index
    %c0_13 = arith.constant 0 : index
    %8 = vector.load %arg11[%c0_11, %c0_12, %c0_13] : memref<18x18x32xf32, #tpu.memory_space<vmem>>, vector<16x16x32xf32>
    %9 = vector.shape_cast %7 : vector<1x32xf32> to vector<1x1x32xf32>
    %10 = vector.broadcast %9 : vector<1x1x32xf32> to vector<16x16x32xf32>
    %11 = arith.mulf %10, %8 : vector<16x16x32xf32>
    %12 = arith.addf %6, %11 : vector<16x16x32xf32>
    %13 = vector.extract_strided_slice %5 {offsets = [1, 0], sizes = [1, 32], strides = [1, 1]} : vector<9x32xf32> to vector<1x32xf32>
    %c0_14 = arith.constant 0 : index
    %c1_15 = arith.constant 1 : index
    %c0_16 = arith.constant 0 : index
    %14 = vector.load %arg11[%c0_14, %c1_15, %c0_16] : memref<18x18x32xf32, #tpu.memory_space<vmem>>, vector<16x16x32xf32>
    %15 = vector.shape_cast %13 : vector<1x32xf32> to vector<1x1x32xf32>
    %16 = vector.broadcast %15 : vector<1x1x32xf32> to vector<16x16x32xf32>
    %17 = arith.mulf %16, %14 : vector<16x16x32xf32>
    %18 = arith.addf %12, %17 : vector<16x16x32xf32>
    %19 = vector.extract_strided_slice %5 {offsets = [2, 0], sizes = [1, 32], strides = [1, 1]} : vector<9x32xf32> to vector<1x32xf32>
    %c0_17 = arith.constant 0 : index
    %c2 = arith.constant 2 : index
    %c0_18 = arith.constant 0 : index
    %20 = vector.load %arg11[%c0_17, %c2, %c0_18] : memref<18x18x32xf32, #tpu.memory_space<vmem>>, vector<16x16x32xf32>
    %21 = vector.shape_cast %19 : vector<1x32xf32> to vector<1x1x32xf32>
    %22 = vector.broadcast %21 : vector<1x1x32xf32> to vector<16x16x32xf32>
    %23 = arith.mulf %22, %20 : vector<16x16x32xf32>
    %24 = arith.addf %18, %23 : vector<16x16x32xf32>
    %25 = vector.extract_strided_slice %5 {offsets = [3, 0], sizes = [1, 32], strides = [1, 1]} : vector<9x32xf32> to vector<1x32xf32>
    %c1_19 = arith.constant 1 : index
    %c0_20 = arith.constant 0 : index
    %c0_21 = arith.constant 0 : index
    %26 = vector.load %arg11[%c1_19, %c0_20, %c0_21] : memref<18x18x32xf32, #tpu.memory_space<vmem>>, vector<16x16x32xf32>
    %27 = vector.shape_cast %25 : vector<1x32xf32> to vector<1x1x32xf32>
    %28 = vector.broadcast %27 : vector<1x1x32xf32> to vector<16x16x32xf32>
    %29 = arith.mulf %28, %26 : vector<16x16x32xf32>
    %30 = arith.addf %24, %29 : vector<16x16x32xf32>
    %31 = vector.extract_strided_slice %5 {offsets = [4, 0], sizes = [1, 32], strides = [1, 1]} : vector<9x32xf32> to vector<1x32xf32>
    %c1_22 = arith.constant 1 : index
    %c1_23 = arith.constant 1 : index
    %c0_24 = arith.constant 0 : index
    %32 = vector.load %arg11[%c1_22, %c1_23, %c0_24] : memref<18x18x32xf32, #tpu.memory_space<vmem>>, vector<16x16x32xf32>
    %33 = vector.shape_cast %31 : vector<1x32xf32> to vector<1x1x32xf32>
    %34 = vector.broadcast %33 : vector<1x1x32xf32> to vector<16x16x32xf32>
    %35 = arith.mulf %34, %32 : vector<16x16x32xf32>
    %36 = arith.addf %30, %35 : vector<16x16x32xf32>
    %37 = vector.extract_strided_slice %5 {offsets = [5, 0], sizes = [1, 32], strides = [1, 1]} : vector<9x32xf32> to vector<1x32xf32>
    %c1_25 = arith.constant 1 : index
    %c2_26 = arith.constant 2 : index
    %c0_27 = arith.constant 0 : index
    %38 = vector.load %arg11[%c1_25, %c2_26, %c0_27] : memref<18x18x32xf32, #tpu.memory_space<vmem>>, vector<16x16x32xf32>
    %39 = vector.shape_cast %37 : vector<1x32xf32> to vector<1x1x32xf32>
    %40 = vector.broadcast %39 : vector<1x1x32xf32> to vector<16x16x32xf32>
    %41 = arith.mulf %40, %38 : vector<16x16x32xf32>
    %42 = arith.addf %36, %41 : vector<16x16x32xf32>
    %43 = vector.extract_strided_slice %5 {offsets = [6, 0], sizes = [1, 32], strides = [1, 1]} : vector<9x32xf32> to vector<1x32xf32>
    %c2_28 = arith.constant 2 : index
    %c0_29 = arith.constant 0 : index
    %c0_30 = arith.constant 0 : index
    %44 = vector.load %arg11[%c2_28, %c0_29, %c0_30] : memref<18x18x32xf32, #tpu.memory_space<vmem>>, vector<16x16x32xf32>
    %45 = vector.shape_cast %43 : vector<1x32xf32> to vector<1x1x32xf32>
    %46 = vector.broadcast %45 : vector<1x1x32xf32> to vector<16x16x32xf32>
    %47 = arith.mulf %46, %44 : vector<16x16x32xf32>
    %48 = arith.addf %42, %47 : vector<16x16x32xf32>
    %49 = vector.extract_strided_slice %5 {offsets = [7, 0], sizes = [1, 32], strides = [1, 1]} : vector<9x32xf32> to vector<1x32xf32>
    %c2_31 = arith.constant 2 : index
    %c1_32 = arith.constant 1 : index
    %c0_33 = arith.constant 0 : index
    %50 = vector.load %arg11[%c2_31, %c1_32, %c0_33] : memref<18x18x32xf32, #tpu.memory_space<vmem>>, vector<16x16x32xf32>
    %51 = vector.shape_cast %49 : vector<1x32xf32> to vector<1x1x32xf32>
    %52 = vector.broadcast %51 : vector<1x1x32xf32> to vector<16x16x32xf32>
    %53 = arith.mulf %52, %50 : vector<16x16x32xf32>
    %54 = arith.addf %48, %53 : vector<16x16x32xf32>
    %55 = vector.extract_strided_slice %5 {offsets = [8, 0], sizes = [1, 32], strides = [1, 1]} : vector<9x32xf32> to vector<1x32xf32>
    %c2_34 = arith.constant 2 : index
    %c2_35 = arith.constant 2 : index
    %c0_36 = arith.constant 0 : index
    %56 = vector.load %arg11[%c2_34, %c2_35, %c0_36] : memref<18x18x32xf32, #tpu.memory_space<vmem>>, vector<16x16x32xf32>
    %57 = vector.shape_cast %55 : vector<1x32xf32> to vector<1x1x32xf32>
    %58 = vector.broadcast %57 : vector<1x1x32xf32> to vector<16x16x32xf32>
    %59 = arith.mulf %58, %56 : vector<16x16x32xf32>
    %60 = arith.addf %54, %59 : vector<16x16x32xf32>
    %c0_37 = arith.constant 0 : index
    %c0_38 = arith.constant 0 : index
    %61 = vector.load %arg3[%c0_37, %c0_38] : memref<1x32xf32, #tpu.memory_space<vmem>>, vector<1x32xf32>
    %62 = vector.shape_cast %61 : vector<1x32xf32> to vector<1x1x32xf32>
    %63 = vector.broadcast %62 : vector<1x1x32xf32> to vector<16x16x32xf32>
    %64 = arith.addf %60, %63 : vector<16x16x32xf32>
    %cst_39 = arith.constant 0.000000e+00 : f32
    %cst_40 = arith.constant 6.000000e+00 : f32
    %65 = vector.broadcast %cst_39 : f32 to vector<16x16x32xf32>
    %66 = arith.maximumf %65, %64 : vector<16x16x32xf32>
    %67 = vector.broadcast %cst_40 : f32 to vector<16x16x32xf32>
    %68 = arith.minimumf %67, %66 : vector<16x16x32xf32>
    %69 = vector.shape_cast %68 : vector<16x16x32xf32> to vector<256x32xf32>
    %70 = arith.truncf %69 : vector<256x32xf32> to vector<256x32xbf16>
    %c0_41 = arith.constant 0 : index
    %c0_42 = arith.constant 0 : index
    %71 = vector.load %arg4[%c0_41, %c0_42] : memref<32x16xbf16, #tpu.memory_space<vmem>>, vector<32x16xbf16>
    %cst_43 = arith.constant dense<0.000000e+00> : vector<256x16xf32>
    %72 = tpu.matmul %70, %71, %cst_43 {dimension_numbers = #tpu.dot_dimension_numbers<[1], [0], [0], [1], [0, 0, 1, 1], [], []>} : vector<256x32xbf16>, vector<32x16xbf16>, vector<256x16xf32> -> vector<256x16xf32>
    %c0_44 = arith.constant 0 : index
    %c0_45 = arith.constant 0 : index
    %73 = vector.load %arg5[%c0_44, %c0_45] : memref<1x16xf32, #tpu.memory_space<vmem>>, vector<1x16xf32>
    %74 = vector.broadcast %73 : vector<1x16xf32> to vector<256x16xf32>
    %75 = arith.addf %72, %74 : vector<256x16xf32>
    %76 = arith.truncf %75 : vector<256x16xf32> to vector<256x16xbf16>
    %c0_46 = arith.constant 0 : index
    %c0_47 = arith.constant 0 : index
    %77 = vector.load %arg6[%c0_46, %c0_47] : memref<16x32xbf16, #tpu.memory_space<vmem>>, vector<16x32xbf16>
    %cst_48 = arith.constant dense<0.000000e+00> : vector<256x32xf32>
    %78 = tpu.matmul %76, %77, %cst_48 {dimension_numbers = #tpu.dot_dimension_numbers<[1], [0], [0], [1], [0, 0, 1, 1], [], []>} : vector<256x16xbf16>, vector<16x32xbf16>, vector<256x32xf32> -> vector<256x32xf32>
    %c0_49 = arith.constant 0 : index
    %c0_50 = arith.constant 0 : index
    %79 = vector.load %arg7[%c0_49, %c0_50] : memref<1x32xf32, #tpu.memory_space<vmem>>, vector<1x32xf32>
    %80 = vector.broadcast %79 : vector<1x32xf32> to vector<256x32xf32>
    %81 = arith.addf %78, %80 : vector<256x32xf32>
    %cst_51 = arith.constant 0.000000e+00 : f32
    %cst_52 = arith.constant 6.000000e+00 : f32
    %82 = vector.broadcast %cst_51 : f32 to vector<256x32xf32>
    %83 = arith.maximumf %82, %81 : vector<256x32xf32>
    %84 = vector.broadcast %cst_52 : f32 to vector<256x32xf32>
    %85 = arith.minimumf %84, %83 : vector<256x32xf32>
    %86 = vector.shape_cast %85 : vector<256x32xf32> to vector<16x16x32xf32>
    %cst_53 = arith.constant 0.000000e+00 : f32
    %87 = vector.broadcast %cst_53 : f32 to vector<18x18x32xf32>
    %c0_54 = arith.constant 0 : index
    %c0_55 = arith.constant 0 : index
    %c0_56 = arith.constant 0 : index
    %88 = vector.load %arg12[%c0_54, %c0_55, %c0_56] : memref<18x18x32xf32, #tpu.memory_space<vmem>>, vector<18x18x32xf32>
    tpu.vector_store %arg12[%c0_54, %c0_55, %c0_56], %87 {strides = array<i32>} : memref<18x18x32xf32, #tpu.memory_space<vmem>>, vector<18x18x32xf32>,
    %c1_57 = arith.constant 1 : index
    %c1_58 = arith.constant 1 : index
    %c0_59 = arith.constant 0 : index
    %89 = vector.load %arg12[%c1_57, %c1_58, %c0_59] : memref<18x18x32xf32, #tpu.memory_space<vmem>>, vector<16x16x32xf32>
    tpu.vector_store %arg12[%c1_57, %c1_58, %c0_59], %86 {strides = array<i32>} : memref<18x18x32xf32, #tpu.memory_space<vmem>>, vector<16x16x32xf32>,
    %c0_60 = arith.constant 0 : index
    %c0_61 = arith.constant 0 : index
    %90 = vector.load %arg8[%c0_60, %c0_61] : memref<9x32xf32, #tpu.memory_space<vmem>>, vector<9x32xf32>
    %cst_62 = arith.constant 0.000000e+00 : f32
    %91 = vector.broadcast %cst_62 : f32 to vector<16x16x32xf32>
    %92 = vector.extract_strided_slice %90 {offsets = [0, 0], sizes = [1, 32], strides = [1, 1]} : vector<9x32xf32> to vector<1x32xf32>
    %c0_63 = arith.constant 0 : index
    %c0_64 = arith.constant 0 : index
    %c0_65 = arith.constant 0 : index
    %93 = vector.load %arg12[%c0_63, %c0_64, %c0_65] : memref<18x18x32xf32, #tpu.memory_space<vmem>>, vector<16x16x32xf32>
    %94 = vector.shape_cast %92 : vector<1x32xf32> to vector<1x1x32xf32>
    %95 = vector.broadcast %94 : vector<1x1x32xf32> to vector<16x16x32xf32>
    %96 = arith.mulf %95, %93 : vector<16x16x32xf32>
    %97 = arith.addf %91, %96 : vector<16x16x32xf32>
    %98 = vector.extract_strided_slice %90 {offsets = [1, 0], sizes = [1, 32], strides = [1, 1]} : vector<9x32xf32> to vector<1x32xf32>
    %c0_66 = arith.constant 0 : index
    %c1_67 = arith.constant 1 : index
    %c0_68 = arith.constant 0 : index
    %99 = vector.load %arg12[%c0_66, %c1_67, %c0_68] : memref<18x18x32xf32, #tpu.memory_space<vmem>>, vector<16x16x32xf32>
    %100 = vector.shape_cast %98 : vector<1x32xf32> to vector<1x1x32xf32>
    %101 = vector.broadcast %100 : vector<1x1x32xf32> to vector<16x16x32xf32>
    %102 = arith.mulf %101, %99 : vector<16x16x32xf32>
    %103 = arith.addf %97, %102 : vector<16x16x32xf32>
    %104 = vector.extract_strided_slice %90 {offsets = [2, 0], sizes = [1, 32], strides = [1, 1]} : vector<9x32xf32> to vector<1x32xf32>
    %c0_69 = arith.constant 0 : index
    %c2_70 = arith.constant 2 : index
    %c0_71 = arith.constant 0 : index
    %105 = vector.load %arg12[%c0_69, %c2_70, %c0_71] : memref<18x18x32xf32, #tpu.memory_space<vmem>>, vector<16x16x32xf32>
    %106 = vector.shape_cast %104 : vector<1x32xf32> to vector<1x1x32xf32>
    %107 = vector.broadcast %106 : vector<1x1x32xf32> to vector<16x16x32xf32>
    %108 = arith.mulf %107, %105 : vector<16x16x32xf32>
    %109 = arith.addf %103, %108 : vector<16x16x32xf32>
    %110 = vector.extract_strided_slice %90 {offsets = [3, 0], sizes = [1, 32], strides = [1, 1]} : vector<9x32xf32> to vector<1x32xf32>
    %c1_72 = arith.constant 1 : index
    %c0_73 = arith.constant 0 : index
    %c0_74 = arith.constant 0 : index
    %111 = vector.load %arg12[%c1_72, %c0_73, %c0_74] : memref<18x18x32xf32, #tpu.memory_space<vmem>>, vector<16x16x32xf32>
    %112 = vector.shape_cast %110 : vector<1x32xf32> to vector<1x1x32xf32>
    %113 = vector.broadcast %112 : vector<1x1x32xf32> to vector<16x16x32xf32>
    %114 = arith.mulf %113, %111 : vector<16x16x32xf32>
    %115 = arith.addf %109, %114 : vector<16x16x32xf32>
    %116 = vector.extract_strided_slice %90 {offsets = [4, 0], sizes = [1, 32], strides = [1, 1]} : vector<9x32xf32> to vector<1x32xf32>
    %c1_75 = arith.constant 1 : index
    %c1_76 = arith.constant 1 : index
    %c0_77 = arith.constant 0 : index
    %117 = vector.load %arg12[%c1_75, %c1_76, %c0_77] : memref<18x18x32xf32, #tpu.memory_space<vmem>>, vector<16x16x32xf32>
    %118 = vector.shape_cast %116 : vector<1x32xf32> to vector<1x1x32xf32>
    %119 = vector.broadcast %118 : vector<1x1x32xf32> to vector<16x16x32xf32>
    %120 = arith.mulf %119, %117 : vector<16x16x32xf32>
    %121 = arith.addf %115, %120 : vector<16x16x32xf32>
    %122 = vector.extract_strided_slice %90 {offsets = [5, 0], sizes = [1, 32], strides = [1, 1]} : vector<9x32xf32> to vector<1x32xf32>
    %c1_78 = arith.constant 1 : index
    %c2_79 = arith.constant 2 : index
    %c0_80 = arith.constant 0 : index
    %123 = vector.load %arg12[%c1_78, %c2_79, %c0_80] : memref<18x18x32xf32, #tpu.memory_space<vmem>>, vector<16x16x32xf32>
    %124 = vector.shape_cast %122 : vector<1x32xf32> to vector<1x1x32xf32>
    %125 = vector.broadcast %124 : vector<1x1x32xf32> to vector<16x16x32xf32>
    %126 = arith.mulf %125, %123 : vector<16x16x32xf32>
    %127 = arith.addf %121, %126 : vector<16x16x32xf32>
    %128 = vector.extract_strided_slice %90 {offsets = [6, 0], sizes = [1, 32], strides = [1, 1]} : vector<9x32xf32> to vector<1x32xf32>
    %c2_81 = arith.constant 2 : index
    %c0_82 = arith.constant 0 : index
    %c0_83 = arith.constant 0 : index
    %129 = vector.load %arg12[%c2_81, %c0_82, %c0_83] : memref<18x18x32xf32, #tpu.memory_space<vmem>>, vector<16x16x32xf32>
    %130 = vector.shape_cast %128 : vector<1x32xf32> to vector<1x1x32xf32>
    %131 = vector.broadcast %130 : vector<1x1x32xf32> to vector<16x16x32xf32>
    %132 = arith.mulf %131, %129 : vector<16x16x32xf32>
    %133 = arith.addf %127, %132 : vector<16x16x32xf32>
    %134 = vector.extract_strided_slice %90 {offsets = [7, 0], sizes = [1, 32], strides = [1, 1]} : vector<9x32xf32> to vector<1x32xf32>
    %c2_84 = arith.constant 2 : index
    %c1_85 = arith.constant 1 : index
    %c0_86 = arith.constant 0 : index
    %135 = vector.load %arg12[%c2_84, %c1_85, %c0_86] : memref<18x18x32xf32, #tpu.memory_space<vmem>>, vector<16x16x32xf32>
    %136 = vector.shape_cast %134 : vector<1x32xf32> to vector<1x1x32xf32>
    %137 = vector.broadcast %136 : vector<1x1x32xf32> to vector<16x16x32xf32>
    %138 = arith.mulf %137, %135 : vector<16x16x32xf32>
    %139 = arith.addf %133, %138 : vector<16x16x32xf32>
    %140 = vector.extract_strided_slice %90 {offsets = [8, 0], sizes = [1, 32], strides = [1, 1]} : vector<9x32xf32> to vector<1x32xf32>
    %c2_87 = arith.constant 2 : index
    %c2_88 = arith.constant 2 : index
    %c0_89 = arith.constant 0 : index
    %141 = vector.load %arg12[%c2_87, %c2_88, %c0_89] : memref<18x18x32xf32, #tpu.memory_space<vmem>>, vector<16x16x32xf32>
    %142 = vector.shape_cast %140 : vector<1x32xf32> to vector<1x1x32xf32>
    %143 = vector.broadcast %142 : vector<1x1x32xf32> to vector<16x16x32xf32>
    %144 = arith.mulf %143, %141 : vector<16x16x32xf32>
    %145 = arith.addf %139, %144 : vector<16x16x32xf32>
    %c0_90 = arith.constant 0 : index
    %c0_91 = arith.constant 0 : index
    %146 = vector.load %arg9[%c0_90, %c0_91] : memref<1x32xf32, #tpu.memory_space<vmem>>, vector<1x32xf32>
    %147 = vector.shape_cast %146 : vector<1x32xf32> to vector<1x1x32xf32>
    %148 = vector.broadcast %147 : vector<1x1x32xf32> to vector<16x16x32xf32>
    %149 = arith.addf %145, %148 : vector<16x16x32xf32>
    %c0_92 = arith.constant 0 : index
    %c0_93 = arith.constant 0 : index
    %c0_94 = arith.constant 0 : index
    %c0_95 = arith.constant 0 : index
    %150 = vector.load %arg10[%c0_92, %c0_93, %c0_94, %c0_95] : memref<1x16x16x32xf32, #tpu.memory_space<vmem>>, vector<1x16x16x32xf32>
    %151 = vector.shape_cast %150 : vector<1x16x16x32xf32> to vector<16x16x32xf32>
    %152 = vector.shape_cast %149 : vector<16x16x32xf32> to vector<1x16x16x32xf32>
    tpu.vector_store %arg10[%c0_92, %c0_93, %c0_94, %c0_95], %152 {strides = array<i32>} : memref<1x16x16x32xf32, #tpu.memory_space<vmem>>, vector<1x16x16x32xf32>,
    return
  }
  func.func @transform_0(%arg0: i32) -> (i32, i32, i32, i32) {
    %c0_i32 = arith.constant 0 : i32
    %c0_i32_0 = arith.constant 0 : i32
    %c0_i32_1 = arith.constant 0 : i32
    %c0_i32_2 = arith.constant 0 : i32
    return %arg0, %c0_i32, %c0_i32_0, %c0_i32_1 : i32, i32, i32, i32
  }
  func.func @transform_1(%arg0: i32) -> (i32, i32) {
    %c0_i32 = arith.constant 0 : i32
    %c0_i32_0 = arith.constant 0 : i32
    %c0_i32_1 = arith.constant 0 : i32
    return %c0_i32, %c0_i32_0 : i32, i32
  }
  func.func @transform_2(%arg0: i32) -> (i32, i32) {
    %c0_i32 = arith.constant 0 : i32
    %c0_i32_0 = arith.constant 0 : i32
    %c0_i32_1 = arith.constant 0 : i32
    return %c0_i32, %c0_i32_0 : i32, i32
  }
  func.func @transform_3(%arg0: i32) -> (i32, i32) {
    %c0_i32 = arith.constant 0 : i32
    %c0_i32_0 = arith.constant 0 : i32
    %c0_i32_1 = arith.constant 0 : i32
    return %c0_i32, %c0_i32_0 : i32, i32
  }
  func.func @transform_4(%arg0: i32) -> (i32, i32) {
    %c0_i32 = arith.constant 0 : i32
    %c0_i32_0 = arith.constant 0 : i32
    %c0_i32_1 = arith.constant 0 : i32
    return %c0_i32, %c0_i32_0 : i32, i32
  }
  func.func @transform_5(%arg0: i32) -> (i32, i32) {
    %c0_i32 = arith.constant 0 : i32
    %c0_i32_0 = arith.constant 0 : i32
    %c0_i32_1 = arith.constant 0 : i32
    return %c0_i32, %c0_i32_0 : i32, i32
  }
  func.func @transform_6(%arg0: i32) -> (i32, i32) {
    %c0_i32 = arith.constant 0 : i32
    %c0_i32_0 = arith.constant 0 : i32
    %c0_i32_1 = arith.constant 0 : i32
    return %c0_i32, %c0_i32_0 : i32, i32
  }
  func.func @transform_7(%arg0: i32) -> (i32, i32) {
    %c0_i32 = arith.constant 0 : i32
    %c0_i32_0 = arith.constant 0 : i32
    %c0_i32_1 = arith.constant 0 : i32
    return %c0_i32, %c0_i32_0 : i32, i32
  }
  func.func @transform_8(%arg0: i32) -> (i32, i32) {
    %c0_i32 = arith.constant 0 : i32
    %c0_i32_0 = arith.constant 0 : i32
    %c0_i32_1 = arith.constant 0 : i32
    return %c0_i32, %c0_i32_0 : i32, i32
  }
  func.func @transform_9(%arg0: i32) -> (i32, i32, i32, i32) {
    %c0_i32 = arith.constant 0 : i32
    %c0_i32_0 = arith.constant 0 : i32
    %c0_i32_1 = arith.constant 0 : i32
    %c0_i32_2 = arith.constant 0 : i32
    return %arg0, %c0_i32, %c0_i32_0, %c0_i32_1 : i32, i32, i32, i32
  }
}

</mosaic_0001>

<llo_original>
// kernel: tpu_custom_call.1
$region0: #{tpu_custom_call.1}
  #allocation0 [shape = 'u32[]', space=smem, size = 0x4, offset = 0x4, fixed_abs, tag = 'smem constant byte address 0x4 - core index']
  #allocation1 [shape = 'u32[144,128]{1,0:T(1,128)}', space=vmem, size = 0x12000, scoped, tag = 'internal scratch']
  #allocation2 [shape = 'f32[18,18,32]{2,1,0:T(8,128)}', space=vmem, size = 0x36000, scoped, tag = 'scratch operand']
  #allocation3 [shape = 'f32[18,18,32]{2,1,0:T(8,128)}', space=vmem, size = 0x36000, scoped, tag = 'scratch operand']
  %s0 = inlined_call_operand.hbm [shape: f32[2,16,16,32], index: 0, kind: input, shape index: {}]
  %s1 = inlined_call_operand.vmem [shape: f32[9,32], index: 1, kind: input, shape index: {}]
  %s2 = inlined_call_operand.vmem [shape: f32[1,32], index: 2, kind: input, shape index: {}]
  %s3 = inlined_call_operand.vmem [shape: bf16[32,16], index: 3, kind: input, shape index: {}]
  %s4 = inlined_call_operand.vmem [shape: f32[1,16], index: 4, kind: input, shape index: {}]
  %s5 = inlined_call_operand.vmem [shape: bf16[16,32], index: 5, kind: input, shape index: {}]
  %s6 = inlined_call_operand.vmem [shape: f32[1,32], index: 6, kind: input, shape index: {}]
  %s7 = inlined_call_operand.vmem [shape: f32[9,32], index: 7, kind: input, shape index: {}]
  %s8 = inlined_call_operand.vmem [shape: f32[1,32], index: 8, kind: input, shape index: {}]
  %s9 = inlined_call_operand.hbm [shape: f32[2,16,16,32], index: 9, kind: output, shape index: {}]
  %s10 = sld [smem:[#allocation0]]
  $region73: #{tpu_custom_call.1} parent=0
    _
  %s12 = ssub.s32 1, %s10
  %s13 = scalar_select 0, %s12, %s10
  $region1: #{tpu_custom_call.1} parent=0
    #allocation4 [shape = 'u8[262144]{0}', space=vmem, size = 0x40000, scoped, tag = 'input window, operand 0']
    #allocation5 [shape = 's32[2]{0}', space=sflag, size = 0x8, scoped, tag = 'scoped memory for tpu_custom_call.1']
    #allocation6 [shape = 's32[2]{0}', space=sflag, size = 0x8, scoped, tag = 'scoped memory for tpu_custom_call.1']
    #allocation7 [shape = 'u8[262144]{0}', space=vmem, size = 0x40000, scoped, tag = 'output window, operand 0']
    %14 = vsyncpa [#allocation5], 0
    %s15 = scalar_lea.sflag [#allocation5], 1
    %16 = vsyncpa %s15, 0
    %17 = vsyncpa [#allocation6], 0
    %s18 = scalar_lea.sflag [#allocation6], 1
    %19 = vsyncpa %s18, 0
    loop: start=0, step=1, limit=4
    $region2: #{tpu_custom_call.1} parent=1 // loop_pre_header
      _
    $region3: #{tpu_custom_call.1} parent=1 // loop_header
      %s21 = sphi 0, %s25
      %p22 = scmp.ge.s32.totalorder %s21, 4
      %s31 = sphi 0, %s33
      %s34 = sphi 0, %s31
      %s35 = sphi 0, %s34
      %s51 = sphi 0, %s35
      %s55 = sphi 0, %s55
      %s57 = sphi 0, %s55
      %s58 = sphi 0, %s57
      %s72 = sphi 0, %s58
      %s76 = sphi 0, %s76
      %s78 = sphi 0, %s76
      %s79 = sphi 0, %s78
      %s93 = sphi 0, %s79
      %s97 = sphi 0, %s97
      %s99 = sphi 0, %s97
      %s100 = sphi 0, %s99
      %s114 = sphi 0, %s100
      %s118 = sphi 0, %s118
      %s120 = sphi 0, %s118
      %s121 = sphi 0, %s120
      %s135 = sphi 0, %s121
      %s139 = sphi 0, %s139
      %s141 = sphi 0, %s139
      %s142 = sphi 0, %s141
      %s156 = sphi 0, %s142
      %s160 = sphi 0, %s160
      %s162 = sphi 0, %s160
      %s163 = sphi 0, %s162
      %s177 = sphi 0, %s163
      %s181 = sphi 0, %s181
      %s183 = sphi 0, %s181
      %s184 = sphi 0, %s183
      %s198 = sphi 0, %s184
      %s202 = sphi 0, %s202
      %s204 = sphi 0, %s202
      %s205 = sphi 0, %s204
      %s219 = sphi 0, %s205
      %s225 = sphi 0, %s227
      %s228 = sphi 0, %s225
      %s229 = sphi 0, %s228
      %s245 = sphi 0, %s229
    $region4: #{tpu_custom_call.1} parent=1 // loop_header_branch
      %24 = sbr.rel (%p22) target = $region8
    $region5: #{tpu_custom_call.1} parent=1 // loop_body
      %s26 = ssub.s32 %s21, 1
      %s27 = ssub.s32 %s21, 2
      %s28 = sadd.s32 %s21, 1
      %s29 = ssub.s32 %s21, %s28
      %p30 = scmp.eq.s32.totalorder %s29, 0
      %s32 = sadd.s32 %s31, 1
      %s33 = scalar_select %p30, %s31, %s32
      %p36 = pneg %p30
      %p37 = scmp.eq.s32.totalorder %s21, 1
      %p38 = por %p36, %p37
      %p39 = scmp.ne.s32.totalorder %s31, %s34
      %p40 = scmp.eq.s32.totalorder %s21, 0
      %p41 = por %p39, %p40
      %p42 = scmp.ne.s32.totalorder %s31, %s34
      %p43 = scmp.eq.s32.totalorder %s26, 1
      %p44 = por %p42, %p43
      %p45 = scmp.ne.s32.totalorder %s34, %s35
      %p46 = scmp.eq.s32.totalorder %s26, 0
      %p47 = por %p45, %p46
      %p48 = scmp.ne.s32.totalorder %s34, %s35
      %p49 = scmp.eq.s32.totalorder %s27, 1
      %p50 = por %p48, %p49
      %p52 = scmp.ne.s32.totalorder %s35, %s51
      %p53 = scmp.eq.s32.totalorder %s27, 0
      %p54 = por %p52, %p53
      %s56 = sadd.s32 %s55, 1
      %p59 = scmp.eq.s32.totalorder %s21, 1
      %p60 = scmp.ne.s32.totalorder %s55, %s57
      %p61 = scmp.eq.s32.totalorder %s21, 0
      %p62 = por %p60, %p61
      %p63 = scmp.ne.s32.totalorder %s55, %s57
      %p64 = scmp.eq.s32.totalorder %s26, 1
      %p65 = por %p63, %p64
      %p66 = scmp.ne.s32.totalorder %s57, %s58
      %p67 = scmp.eq.s32.totalorder %s26, 0
      %p68 = por %p66, %p67
      %p69 = scmp.ne.s32.totalorder %s57, %s58
      %p70 = scmp.eq.s32.totalorder %s27, 1
      %p71 = por %p69, %p70
      %p73 = scmp.ne.s32.totalorder %s58, %s72
      %p74 = scmp.eq.s32.totalorder %s27, 0
      %p75 = por %p73, %p74
      %s77 = sadd.s32 %s76, 1
      %p80 = scmp.eq.s32.totalorder %s21, 1
      %p81 = scmp.ne.s32.totalorder %s76, %s78
      %p82 = scmp.eq.s32.totalorder %s21, 0
      %p83 = por %p81, %p82
      %p84 = scmp.ne.s32.totalorder %s76, %s78
      %p85 = scmp.eq.s32.totalorder %s26, 1
      %p86 = por %p84, %p85
      %p87 = scmp.ne.s32.totalorder %s78, %s79
      %p88 = scmp.eq.s32.totalorder %s26, 0
      %p89 = por %p87, %p88
      %p90 = scmp.ne.s32.totalorder %s78, %s79
      %p91 = scmp.eq.s32.totalorder %s27, 1
      %p92 = por %p90, %p91
      %p94 = scmp.ne.s32.totalorder %s79, %s93
      %p95 = scmp.eq.s32.totalorder %s27, 0
      %p96 = por %p94, %p95
      %s98 = sadd.s32 %s97, 1
      %p101 = scmp.eq.s32.totalorder %s21, 1
      %p102 = scmp.ne.s32.totalorder %s97, %s99
      %p103 = scmp.eq.s32.totalorder %s21, 0
      %p104 = por %p102, %p103
      %p105 = scmp.ne.s32.totalorder %s97, %s99
      %p106 = scmp.eq.s32.totalorder %s26, 1
      %p107 = por %p105, %p106
      %p108 = scmp.ne.s32.totalorder %s99, %s100
      %p109 = scmp.eq.s32.totalorder %s26, 0
      %p110 = por %p108, %p109
      %p111 = scmp.ne.s32.totalorder %s99, %s100
      %p112 = scmp.eq.s32.totalorder %s27, 1
      %p113 = por %p111, %p112
      %p115 = scmp.ne.s32.totalorder %s100, %s114
      %p116 = scmp.eq.s32.totalorder %s27, 0
      %p117 = por %p115, %p116
      %s119 = sadd.s32 %s118, 1
      %p122 = scmp.eq.s32.totalorder %s21, 1
      %p123 = scmp.ne.s32.totalorder %s118, %s120
      %p124 = scmp.eq.s32.totalorder %s21, 0
      %p125 = por %p123, %p124
      %p126 = scmp.ne.s32.totalorder %s118, %s120
      %p127 = scmp.eq.s32.totalorder %s26, 1
      %p128 = por %p126, %p127
      %p129 = scmp.ne.s32.totalorder %s120, %s121
      %p130 = scmp.eq.s32.totalorder %s26, 0
      %p131 = por %p129, %p130
      %p132 = scmp.ne.s32.totalorder %s120, %s121
      %p133 = scmp.eq.s32.totalorder %s27, 1
      %p134 = por %p132, %p133
      %p136 = scmp.ne.s32.totalorder %s121, %s135
      %p137 = scmp.eq.s32.totalorder %s27, 0
      %p138 = por %p136, %p137
      %s140 = sadd.s32 %s139, 1
      %p143 = scmp.eq.s32.totalorder %s21, 1
      %p144 = scmp.ne.s32.totalorder %s139, %s141
      %p145 = scmp.eq.s32.totalorder %s21, 0
      %p146 = por %p144, %p145
      %p147 = scmp.ne.s32.totalorder %s139, %s141
      %p148 = scmp.eq.s32.totalorder %s26, 1
      %p149 = por %p147, %p148
      %p150 = scmp.ne.s32.totalorder %s141, %s142
      %p151 = scmp.eq.s32.totalorder %s26, 0
      %p152 = por %p150, %p151
      %p153 = scmp.ne.s32.totalorder %s141, %s142
      %p154 = scmp.eq.s32.totalorder %s27, 1
      %p155 = por %p153, %p154
      %p157 = scmp.ne.s32.totalorder %s142, %s156
      %p158 = scmp.eq.s32.totalorder %s27, 0
      %p159 = por %p157, %p158
      %s161 = sadd.s32 %s160, 1
      %p164 = scmp.eq.s32.totalorder %s21, 1
      %p165 = scmp.ne.s32.totalorder %s160, %s162
      %p166 = scmp.eq.s32.totalorder %s21, 0
      %p167 = por %p165, %p166
      %p168 = scmp.ne.s32.totalorder %s160, %s162
      %p169 = scmp.eq.s32.totalorder %s26, 1
      %p170 = por %p168, %p169
      %p171 = scmp.ne.s32.totalorder %s162, %s163
      %p172 = scmp.eq.s32.totalorder %s26, 0
      %p173 = por %p171, %p172
      %p174 = scmp.ne.s32.totalorder %s162, %s163
      %p175 = scmp.eq.s32.totalorder %s27, 1
      %p176 = por %p174, %p175
      %p178 = scmp.ne.s32.totalorder %s163, %s177
      %p179 = scmp.eq.s32.totalorder %s27, 0
      %p180 = por %p178, %p179
      %s182 = sadd.s32 %s181, 1
      %p185 = scmp.eq.s32.totalorder %s21, 1
      %p186 = scmp.ne.s32.totalorder %s181, %s183
      %p187 = scmp.eq.s32.totalorder %s21, 0
      %p188 = por %p186, %p187
      %p189 = scmp.ne.s32.totalorder %s181, %s183
      %p190 = scmp.eq.s32.totalorder %s26, 1
      %p191 = por %p189, %p190
      %p192 = scmp.ne.s32.totalorder %s183, %s184
      %p193 = scmp.eq.s32.totalorder %s26, 0
      %p194 = por %p192, %p193
      %p195 = scmp.ne.s32.totalorder %s183, %s184
      %p196 = scmp.eq.s32.totalorder %s27, 1
      %p197 = por %p195, %p196
      %p199 = scmp.ne.s32.totalorder %s184, %s198
      %p200 = scmp.eq.s32.totalorder %s27, 0
      %p201 = por %p199, %p200
      %s203 = sadd.s32 %s202, 1
      %p206 = scmp.eq.s32.totalorder %s21, 1
      %p207 = scmp.ne.s32.totalorder %s202, %s204
      %p208 = scmp.eq.s32.totalorder %s21, 0
      %p209 = por %p207, %p208
      %p210 = scmp.ne.s32.totalorder %s202, %s204
      %p211 = scmp.eq.s32.totalorder %s26, 1
      %p212 = por %p210, %p211
      %p213 = scmp.ne.s32.totalorder %s204, %s205
      %p214 = scmp.eq.s32.totalorder %s26, 0
      %p215 = por %p213, %p214
      %p216 = scmp.ne.s32.totalorder %s204, %s205
      %p217 = scmp.eq.s32.totalorder %s27, 1
      %p218 = por %p216, %p217
      %p220 = scmp.ne.s32.totalorder %s205, %s219
      %p221 = scmp.eq.s32.totalorder %s27, 0
      %p222 = por %p220, %p221
      %s223 = ssub.s32 %s21, %s28
      %p224 = scmp.eq.s32.totalorder %s223, 0
      %s226 = sadd.s32 %s225, 1
      %s227 = scalar_select %p224, %s225, %s226
      %p230 = pneg %p224
      %p231 = scmp.eq.s32.totalorder %s21, 1
      %p232 = por %p230, %p231
      %p233 = scmp.ne.s32.totalorder %s225, %s228
      %p234 = scmp.eq.s32.totalorder %s21, 0
      %p235 = por %p233, %p234
      %p236 = scmp.ne.s32.totalorder %s225, %s228
      %p237 = scmp.eq.s32.totalorder %s26, 1
      %p238 = por %p236, %p237
      %p239 = scmp.ne.s32.totalorder %s228, %s229
      %p240 = scmp.eq.s32.totalorder %s26, 0
      %p241 = por %p239, %p240
      %p242 = scmp.ne.s32.totalorder %s228, %s229
      %p243 = scmp.eq.s32.totalorder %s27, 1
      %p244 = por %p242, %p243
      %p246 = scmp.ne.s32.totalorder %s229, %s245
      %p247 = scmp.eq.s32.totalorder %s27, 0
      %p248 = por %p246, %p247
      %p249 = scmp.le.s32.totalorder 1, %s21
      %p250 = scmp.lt.s32.totalorder %s21, 3
      %p251 = pnand %p249, %p250
      %p252 = pneg %p251
      // Predicated region
      $region9: #{tpu_custom_call.1} parent=5 // pred_check
        _
      $region10: #{tpu_custom_call.1} parent=5 // pred_check_branch
        %254 = sbr.rel (%p251) target = $region12
      $region11: #{tpu_custom_call.1} parent=5 // pred_region
        %s255 = ssub.s32 %s21, 1
        // Predicated region
        $region13: #{tpu_custom_call.1} parent=11 // pred_check
          %p256 = pneg %p68
        $region14: #{tpu_custom_call.1} parent=11 // pred_check_branch
          %258 = sbr.rel (%p256) target = $region16
        $region15: #{tpu_custom_call.1} parent=11 // pred_region
          _
        $region16: #{tpu_custom_call.1} parent=11 // pred_fallthru
          _
        // Predicated region
        $region17: #{tpu_custom_call.1} parent=11 // pred_check
          %p259 = pneg %p89
        $region18: #{tpu_custom_call.1} parent=11 // pred_check_branch
          %261 = sbr.rel (%p259) target = $region20
        $region19: #{tpu_custom_call.1} parent=11 // pred_region
          _
        $region20: #{tpu_custom_call.1} parent=11 // pred_fallthru
          _
        // Predicated region
        $region21: #{tpu_custom_call.1} parent=11 // pred_check
          %p262 = pneg %p110
        $region22: #{tpu_custom_call.1} parent=11 // pred_check_branch
          %264 = sbr.rel (%p262) target = $region24
        $region23: #{tpu_custom_call.1} parent=11 // pred_region
          _
        $region24: #{tpu_custom_call.1} parent=11 // pred_fallthru
          _
        // Predicated region
        $region25: #{tpu_custom_call.1} parent=11 // pred_check
          %p265 = pneg %p131
        $region26: #{tpu_custom_call.1} parent=11 // pred_check_branch
          %267 = sbr.rel (%p265) target = $region28
        $region27: #{tpu_custom_call.1} parent=11 // pred_region
          _
        $region28: #{tpu_custom_call.1} parent=11 // pred_fallthru
          _
        // Predicated region
        $region29: #{tpu_custom_call.1} parent=11 // pred_check
          %p268 = pneg %p152
        $region30: #{tpu_custom_call.1} parent=11 // pred_check_branch
          %270 = sbr.rel (%p268) target = $region32
        $region31: #{tpu_custom_call.1} parent=11 // pred_region
          _
        $region32: #{tpu_custom_call.1} parent=11 // pred_fallthru
          _
        // Predicated region
        $region33: #{tpu_custom_call.1} parent=11 // pred_check
          %p271 = pneg %p173
        $region34: #{tpu_custom_call.1} parent=11 // pred_check_branch
          %273 = sbr.rel (%p271) target = $region36
        $region35: #{tpu_custom_call.1} parent=11 // pred_region
          _
        $region36: #{tpu_custom_call.1} parent=11 // pred_fallthru
          _
        // Predicated region
        $region37: #{tpu_custom_call.1} parent=11 // pred_check
          %p274 = pneg %p194
        $region38: #{tpu_custom_call.1} parent=11 // pred_check_branch
          %276 = sbr.rel (%p274) target = $region40
        $region39: #{tpu_custom_call.1} parent=11 // pred_region
          _
        $region40: #{tpu_custom_call.1} parent=11 // pred_fallthru
          _
        // Predicated region
        $region41: #{tpu_custom_call.1} parent=11 // pred_check
          %p277 = pneg %p215
        $region42: #{tpu_custom_call.1} parent=11 // pred_check_branch
          %279 = sbr.rel (%p277) target = $region44
        $region43: #{tpu_custom_call.1} parent=11 // pred_region
          _
        $region44: #{tpu_custom_call.1} parent=11 // pred_fallthru
          _
      $region12: #{tpu_custom_call.1} parent=5 // pred_fallthru
        _
      %p280 = scmp.lt.s32.totalorder %s21, 2
      // Predicated region
      $region45: #{tpu_custom_call.1} parent=5 // pred_check
        %p281 = pneg %p280
      $region46: #{tpu_custom_call.1} parent=5 // pred_check_branch
        %283 = sbr.rel (%p281) target = $region48
      $region47: #{tpu_custom_call.1} parent=5 // pred_region
        // Predicated region
        $region49: #{tpu_custom_call.1} parent=47 // pred_check
          %p284 = pneg %p41
        $region50: #{tpu_custom_call.1} parent=47 // pred_check_branch
          %286 = sbr.rel (%p284) target = $region52
        $region51: #{tpu_custom_call.1} parent=47 // pred_region
          %s287 = sand.u32 %s31, 1
          %s288 = scalar_lea.sflag [#allocation5], %s287
          %s289 = sand.u32 %s31, 1
          %s290 = smul.addr %s289, 256
          %s291 = scalar_lea.vmem [#allocation4], %s290
          %s293 = ssub.s32 4096, 4096
          %294 = vsyncadd %s288, %s293
          %s295 = smul.addr %s21, 32
          %s296 = smul.addr %s295, 128
          %s297 = scalar_lea.hbm %s0, %s296
          %s298 = sshll.u32 %s291, 4
          %s299 = int_to_ptr.vmem [resolvable:$true] %s298
          %304 = dma.hbm_to_vmem [thread:$0]  %s297, 4096, %s299, %s288, 128, 128, 8
        $region52: #{tpu_custom_call.1} parent=47 // pred_fallthru
          _
      $region48: #{tpu_custom_call.1} parent=5 // pred_fallthru
        _
      %p305 = scmp.le.s32.totalorder 1, %s21
      %p306 = scmp.lt.s32.totalorder %s21, 3
      %p307 = pnand %p305, %p306
      %p308 = pneg %p307
      // Predicated region
      $region53: #{tpu_custom_call.1} parent=5 // pred_check
        _
      $region54: #{tpu_custom_call.1} parent=5 // pred_check_branch
        %310 = sbr.rel (%p307) target = $region56
      $region55: #{tpu_custom_call.1} parent=5 // pred_region
        %s311 = ssub.s32 %s21, 1
        %s312 = sand.u32 %s34, 1
        %s313 = scalar_lea.sflag [#allocation5], %s312
        %s314 = sand.u32 %s34, 1
        %s315 = smul.addr %s314, 256
        %s316 = scalar_lea.vmem [#allocation4], %s315
        // Predicated region
        $region57: #{tpu_custom_call.1} parent=55 // pred_check
          %p317 = pneg %p47
        $region58: #{tpu_custom_call.1} parent=55 // pred_check_branch
          %319 = sbr.rel (%p317) target = $region60
        $region59: #{tpu_custom_call.1} parent=55 // pred_region
          %320 = dma.done %s313, 4096
        $region60: #{tpu_custom_call.1} parent=55 // pred_fallthru
          _
        %s321 = sand.u32 %s34, 1
        %s322 = scalar_lea.sflag [#allocation5], %s321
        %s323 = sand.u32 %s34, 1
        %s324 = smul.addr %s323, 256
        %s325 = scalar_lea.vmem [#allocation4], %s324
        %p326 = pneg %p47
        %p327 = pneg %p44
        %p328 = pneg %p68
        %p329 = pneg %p65
        %p330 = pneg %p89
        %p331 = pneg %p86
        %p332 = pneg %p110
        %p333 = pneg %p107
        %p334 = pneg %p131
        %p335 = pneg %p128
        %p336 = pneg %p152
        %p337 = pneg %p149
        %p338 = pneg %p173
        %p339 = pneg %p170
        %p340 = pneg %p194
        %p341 = pneg %p191
        %p342 = pneg %p215
        %p343 = pneg %p212
        %p344 = pneg %p241
        %p345 = pneg %p238
        %s346 = sand.u32 %s228, 1
        %s347 = scalar_lea.sflag [#allocation6], %s346
        %s348 = sand.u32 %s228, 1
        %s349 = smul.addr %s348, 256
        %s350 = scalar_lea.vmem [#allocation7], %s349
        %vm352 = vcmask 261120
        %353 = vst.msk [vmem:[#allocation2] sm:$0xff] %vm352, 0.0
        %354 = vst.msk [vmem:[#allocation2 + $0x8] sm:$0xff] %vm352, 0.0
        %vm355 = vcmask 254976
        %356 = vst.msk [vmem:[#allocation2 + $0x10] sm:$0x3] %vm355, 0.0
        %357 = vst.msk [vmem:[#allocation2 + $0x18] sm:$0xff] %vm352, 0.0
        %358 = vst.msk [vmem:[#allocation2 + $0x20] sm:$0xff] %vm352, 0.0
        %359 = vst.msk [vmem:[#allocation2 + $0x28] sm:$0x3] %vm355, 0.0
        %360 = vst.msk [vmem:[#allocation2 + $0x30] sm:$0xff] %vm352, 0.0
        %361 = vst.msk [vmem:[#allocation2 + $0x38] sm:$0xff] %vm352, 0.0
        %362 = vst.msk [vmem:[#allocation2 + $0x40] sm:$0x3] %vm355, 0.0
        %363 = vst.msk [vmem:[#allocation2 + $0x48] sm:$0xff] %vm352, 0.0
        %364 = vst.msk [vmem:[#allocation2 + $0x50] sm:$0xff] %vm352, 0.0
        %365 = vst.msk [vmem:[#allocation2 + $0x58] sm:$0x3] %vm355, 0.0
        %366 = vst.msk [vmem:[#allocation2 + $0x60] sm:$0xff] %vm352, 0.0
        %367 = vst.msk [vmem:[#allocation2 + $0x68] sm:$0xff] %vm352, 0.0
        %368 = vst.msk [vmem:[#allocation2 + $0x70] sm:$0x3] %vm355, 0.0
        %369 = vst.msk [vmem:[#allocation2 + $0x78] sm:$0xff] %vm352, 0.0
        %370 = vst.msk [vmem:[#allocation2 + $0x80] sm:$0xff] %vm352, 0.0
        %371 = vst.msk [vmem:[#allocation2 + $0x88] sm:$0x3] %vm355, 0.0
        %372 = vst.msk [vmem:[#allocation2 + $0x90] sm:$0xff] %vm352, 0.0
        %373 = vst.msk [vmem:[#allocation2 + $0x98] sm:$0xff] %vm352, 0.0
        %374 = vst.msk [vmem:[#allocation2 + $0xa0] sm:$0x3] %vm355, 0.0
        %375 = vst.msk [vmem:[#allocation2 + $0xa8] sm:$0xff] %vm352, 0.0
        %376 = vst.msk [vmem:[#allocation2 + $0xb0] sm:$0xff] %vm352, 0.0
        %377 = vst.msk [vmem:[#allocation2 + $0xb8] sm:$0x3] %vm355, 0.0
        %378 = vst.msk [vmem:[#allocation2 + $0xc0] sm:$0xff] %vm352, 0.0
        %379 = vst.msk [vmem:[#allocation2 + $0xc8] sm:$0xff] %vm352, 0.0
        %380 = vst.msk [vmem:[#allocation2 + $0xd0] sm:$0x3] %vm355, 0.0
        %381 = vst.msk [vmem:[#allocation2 + $0xd8] sm:$0xff] %vm352, 0.0
        %382 = vst.msk [vmem:[#allocation2 + $0xe0] sm:$0xff] %vm352, 0.0
        %383 = vst.msk [vmem:[#allocation2 + $0xe8] sm:$0x3] %vm355, 0.0
        %384 = vst.msk [vmem:[#allocation2 + $0xf0] sm:$0xff] %vm352, 0.0
        %385 = vst.msk [vmem:[#allocation2 + $0xf8] sm:$0xff] %vm352, 0.0
        %386 = vst.msk [vmem:[#allocation2 + $0x100] sm:$0x3] %vm355, 0.0
        %387 = vst.msk [vmem:[#allocation2 + $0x108] sm:$0xff] %vm352, 0.0
        %388 = vst.msk [vmem:[#allocation2 + $0x110] sm:$0xff] %vm352, 0.0
        %389 = vst.msk [vmem:[#allocation2 + $0x118] sm:$0x3] %vm355, 0.0
        %390 = vst.msk [vmem:[#allocation2 + $0x120] sm:$0xff] %vm352, 0.0
        %391 = vst.msk [vmem:[#allocation2 + $0x128] sm:$0xff] %vm352, 0.0
        %392 = vst.msk [vmem:[#allocation2 + $0x130] sm:$0x3] %vm355, 0.0
        %393 = vst.msk [vmem:[#allocation2 + $0x138] sm:$0xff] %vm352, 0.0
        %394 = vst.msk [vmem:[#allocation2 + $0x140] sm:$0xff] %vm352, 0.0
        %395 = vst.msk [vmem:[#allocation2 + $0x148] sm:$0x3] %vm355, 0.0
        %396 = vst.msk [vmem:[#allocation2 + $0x150] sm:$0xff] %vm352, 0.0
        %397 = vst.msk [vmem:[#allocation2 + $0x158] sm:$0xff] %vm352, 0.0
        %398 = vst.msk [vmem:[#allocation2 + $0x160] sm:$0x3] %vm355, 0.0
        %399 = vst.msk [vmem:[#allocation2 + $0x168] sm:$0xff] %vm352, 0.0
        %400 = vst.msk [vmem:[#allocation2 + $0x170] sm:$0xff] %vm352, 0.0
        %401 = vst.msk [vmem:[#allocation2 + $0x178] sm:$0x3] %vm355, 0.0
        %402 = vst.msk [vmem:[#allocation2 + $0x180] sm:$0xff] %vm352, 0.0
        %403 = vst.msk [vmem:[#allocation2 + $0x188] sm:$0xff] %vm352, 0.0
        %404 = vst.msk [vmem:[#allocation2 + $0x190] sm:$0x3] %vm355, 0.0
        %405 = vst.msk [vmem:[#allocation2 + $0x198] sm:$0xff] %vm352, 0.0
        %406 = vst.msk [vmem:[#allocation2 + $0x1a0] sm:$0xff] %vm352, 0.0
        %407 = vst.msk [vmem:[#allocation2 + $0x1a8] sm:$0x3] %vm355, 0.0
        %v408 = vld [vmem:[%s316] sm:$0xff]
        %v409 = vld [vmem:[%s316 + $0x8] sm:$0xff]
        %v410 = vld [vmem:[%s316 + $0x10] sm:$0xff]
        %v411 = vld [vmem:[%s316 + $0x18] sm:$0xff]
        %v412 = vld [vmem:[%s316 + $0x20] sm:$0xff]
        %v413 = vld [vmem:[%s316 + $0x28] sm:$0xff]
        %v414 = vld [vmem:[%s316 + $0x30] sm:$0xff]
        %v415 = vld [vmem:[%s316 + $0x38] sm:$0xff]
        %v416 = vld [vmem:[%s316 + $0x40] sm:$0xff]
        %v417 = vld [vmem:[%s316 + $0x48] sm:$0xff]
        %v418 = vld [vmem:[%s316 + $0x50] sm:$0xff]
        %v419 = vld [vmem:[%s316 + $0x58] sm:$0xff]
        %v420 = vld [vmem:[%s316 + $0x60] sm:$0xff]
        %v421 = vld [vmem:[%s316 + $0x68] sm:$0xff]
        %v422 = vld [vmem:[%s316 + $0x70] sm:$0xff]
        %v423 = vld [vmem:[%s316 + $0x78] sm:$0xff]
        %v424 = vld [vmem:[%s316 + $0x80] sm:$0xff]
        %v425 = vld [vmem:[%s316 + $0x88] sm:$0xff]
        %v426 = vld [vmem:[%s316 + $0x90] sm:$0xff]
        %v427 = vld [vmem:[%s316 + $0x98] sm:$0xff]
        %v428 = vld [vmem:[%s316 + $0xa0] sm:$0xff]
        %v429 = vld [vmem:[%s316 + $0xa8] sm:$0xff]
        %v430 = vld [vmem:[%s316 + $0xb0] sm:$0xff]
        %v431 = vld [vmem:[%s316 + $0xb8] sm:$0xff]
        %v432 = vld [vmem:[%s316 + $0xc0] sm:$0xff]
        %v433 = vld [vmem:[%s316 + $0xc8] sm:$0xff]
        %v434 = vld [vmem:[%s316 + $0xd0] sm:$0xff]
        %v435 = vld [vmem:[%s316 + $0xd8] sm:$0xff]
        %v436 = vld [vmem:[%s316 + $0xe0] sm:$0xff]
        %v437 = vld [vmem:[%s316 + $0xe8] sm:$0xff]
        %v438 = vld [vmem:[%s316 + $0xf0] sm:$0xff]
        %v439 = vld [vmem:[%s316 + $0xf8] sm:$0xff]
        %s440 = scalar_lea.vmem [#allocation2], 24
        %441 = vst.msk [vmem:[%s440 + $0x1] sm:$0xff] %vm352, %v408
        %442 = vst.msk [vmem:[%s440 + $0x9] sm:$0xff] %vm352, %v409
        %443 = vst.msk [vmem:[%s440 + $0x19] sm:$0xff] %vm352, %v410
        %444 = vst.msk [vmem:[%s440 + $0x21] sm:$0xff] %vm352, %v411
        %445 = vst.msk [vmem:[%s440 + $0x31] sm:$0xff] %vm352, %v412
        %446 = vst.msk [vmem:[%s440 + $0x39] sm:$0xff] %vm352, %v413
        %447 = vst.msk [vmem:[%s440 + $0x49] sm:$0xff] %vm352, %v414
        %448 = vst.msk [vmem:[%s440 + $0x51] sm:$0xff] %vm352, %v415
        %449 = vst.msk [vmem:[%s440 + $0x61] sm:$0xff] %vm352, %v416
        %450 = vst.msk [vmem:[%s440 + $0x69] sm:$0xff] %vm352, %v417
        %451 = vst.msk [vmem:[%s440 + $0x79] sm:$0xff] %vm352, %v418
        %452 = vst.msk [vmem:[%s440 + $0x81] sm:$0xff] %vm352, %v419
        %453 = vst.msk [vmem:[%s440 + $0x91] sm:$0xff] %vm352, %v420
        %454 = vst.msk [vmem:[%s440 + $0x99] sm:$0xff] %vm352, %v421
        %455 = vst.msk [vmem:[%s440 + $0xa9] sm:$0xff] %vm352, %v422
        %456 = vst.msk [vmem:[%s440 + $0xb1] sm:$0xff] %vm352, %v423
        %457 = vst.msk [vmem:[%s440 + $0xc1] sm:$0xff] %vm352, %v424
        %458 = vst.msk [vmem:[%s440 + $0xc9] sm:$0xff] %vm352, %v425
        %459 = vst.msk [vmem:[%s440 + $0xd9] sm:$0xff] %vm352, %v426
        %460 = vst.msk [vmem:[%s440 + $0xe1] sm:$0xff] %vm352, %v427
        %461 = vst.msk [vmem:[%s440 + $0xf1] sm:$0xff] %vm352, %v428
        %462 = vst.msk [vmem:[%s440 + $0xf9] sm:$0xff] %vm352, %v429
        %463 = vst.msk [vmem:[%s440 + $0x109] sm:$0xff] %vm352, %v430
        %464 = vst.msk [vmem:[%s440 + $0x111] sm:$0xff] %vm352, %v431
        %465 = vst.msk [vmem:[%s440 + $0x121] sm:$0xff] %vm352, %v432
        %466 = vst.msk [vmem:[%s440 + $0x129] sm:$0xff] %vm352, %v433
        %467 = vst.msk [vmem:[%s440 + $0x139] sm:$0xff] %vm352, %v434
        %468 = vst.msk [vmem:[%s440 + $0x141] sm:$0xff] %vm352, %v435
        %469 = vst.msk [vmem:[%s440 + $0x151] sm:$0xff] %vm352, %v436
        %470 = vst.msk [vmem:[%s440 + $0x159] sm:$0xff] %vm352, %v437
        %471 = vst.msk [vmem:[%s440 + $0x169] sm:$0xff] %vm352, %v438
        %472 = vst.msk [vmem:[%s440 + $0x171] sm:$0xff] %vm352, %v439
        %v473 = vld [vmem:[%s1] sm:$0xff]
        %v474 = vld [vmem:[%s1 + $0x8] sm:$0x1]
        %v475 = vld [vmem:[#allocation2] sm:$0xff]
        %v476 = vld [vmem:[#allocation2 + $0x8] sm:$0xff]
        %v477 = vld [vmem:[#allocation2 + $0x18] sm:$0xff]
        %v478 = vld [vmem:[#allocation2 + $0x20] sm:$0xff]
        %v479 = vld [vmem:[#allocation2 + $0x30] sm:$0xff]
        %v480 = vld [vmem:[#allocation2 + $0x38] sm:$0xff]
        %v481 = vld [vmem:[#allocation2 + $0x48] sm:$0xff]
        %v482 = vld [vmem:[#allocation2 + $0x50] sm:$0xff]
        %v483 = vld [vmem:[#allocation2 + $0x60] sm:$0xff]
        %v484 = vld [vmem:[#allocation2 + $0x68] sm:$0xff]
        %v485 = vld [vmem:[#allocation2 + $0x78] sm:$0xff]
        %v486 = vld [vmem:[#allocation2 + $0x80] sm:$0xff]
        %v487 = vld [vmem:[#allocation2 + $0x90] sm:$0xff]
        %v488 = vld [vmem:[#allocation2 + $0x98] sm:$0xff]
        %v489 = vld [vmem:[#allocation2 + $0xa8] sm:$0xff]
        %v490 = vld [vmem:[#allocation2 + $0xb0] sm:$0xff]
        %v491 = vld [vmem:[#allocation2 + $0xc0] sm:$0xff]
        %v492 = vld [vmem:[#allocation2 + $0xc8] sm:$0xff]
        %v493 = vld [vmem:[#allocation2 + $0xd8] sm:$0xff]
        %v494 = vld [vmem:[#allocation2 + $0xe0] sm:$0xff]
        %v495 = vld [vmem:[#allocation2 + $0xf0] sm:$0xff]
        %v496 = vld [vmem:[#allocation2 + $0xf8] sm:$0xff]
        %v497 = vld [vmem:[#allocation2 + $0x108] sm:$0xff]
        %v498 = vld [vmem:[#allocation2 + $0x110] sm:$0xff]
        %v499 = vld [vmem:[#allocation2 + $0x120] sm:$0xff]
        %v500 = vld [vmem:[#allocation2 + $0x128] sm:$0xff]
        %v501 = vld [vmem:[#allocation2 + $0x138] sm:$0xff]
        %v502 = vld [vmem:[#allocation2 + $0x140] sm:$0xff]
        %v503 = vld [vmem:[#allocation2 + $0x150] sm:$0xff]
        %v504 = vld [vmem:[#allocation2 + $0x158] sm:$0xff]
        %v505 = vld [vmem:[#allocation2 + $0x168] sm:$0xff]
        %v506 = vld [vmem:[#allocation2 + $0x170] sm:$0xff]
        %v507 = vlaneseq
        %v508 = vshrl.u32 %v507, 7
        %v509 = vsub.s32 0, %v508
        %v510 = vrot.slane %v473, %v509
        %v511 = vmul.f32 %v510, %v475
        %v512 = vmul.f32 %v510, %v476
        %v513 = vmul.f32 %v510, %v477
        %v514 = vmul.f32 %v510, %v478
        %v515 = vmul.f32 %v510, %v479
        %v516 = vmul.f32 %v510, %v480
        %v517 = vmul.f32 %v510, %v481
        %v518 = vmul.f32 %v510, %v482
        %v519 = vmul.f32 %v510, %v483
        %v520 = vmul.f32 %v510, %v484
        %v521 = vmul.f32 %v510, %v485
        %v522 = vmul.f32 %v510, %v486
        %v523 = vmul.f32 %v510, %v487
        %v524 = vmul.f32 %v510, %v488
        %v525 = vmul.f32 %v510, %v489
        %v526 = vmul.f32 %v510, %v490
        %v527 = vmul.f32 %v510, %v491
        %v528 = vmul.f32 %v510, %v492
        %v529 = vmul.f32 %v510, %v493
        %v530 = vmul.f32 %v510, %v494
        %v531 = vmul.f32 %v510, %v495
        %v532 = vmul.f32 %v510, %v496
        %v533 = vmul.f32 %v510, %v497
        %v534 = vmul.f32 %v510, %v498
        %v535 = vmul.f32 %v510, %v499
        %v536 = vmul.f32 %v510, %v500
        %v537 = vmul.f32 %v510, %v501
        %v538 = vmul.f32 %v510, %v502
        %v539 = vmul.f32 %v510, %v503
        %v540 = vmul.f32 %v510, %v504
        %v541 = vmul.f32 %v510, %v505
        %v542 = vmul.f32 %v510, %v506
        %v543 = vadd.f32 %v511, 0.0
        %v544 = vadd.f32 %v512, 0.0
        %v545 = vadd.f32 %v513, 0.0
        %v546 = vadd.f32 %v514, 0.0
        %v547 = vadd.f32 %v515, 0.0
        %v548 = vadd.f32 %v516, 0.0
        %v549 = vadd.f32 %v517, 0.0
        %v550 = vadd.f32 %v518, 0.0
        %v551 = vadd.f32 %v519, 0.0
        %v552 = vadd.f32 %v520, 0.0
        %v553 = vadd.f32 %v521, 0.0
        %v554 = vadd.f32 %v522, 0.0
        %v555 = vadd.f32 %v523, 0.0
        %v556 = vadd.f32 %v524, 0.0
        %v557 = vadd.f32 %v525, 0.0
        %v558 = vadd.f32 %v526, 0.0
        %v559 = vadd.f32 %v527, 0.0
        %v560 = vadd.f32 %v528, 0.0
        %v561 = vadd.f32 %v529, 0.0
        %v562 = vadd.f32 %v530, 0.0
        %v563 = vadd.f32 %v531, 0.0
        %v564 = vadd.f32 %v532, 0.0
        %v565 = vadd.f32 %v533, 0.0
        %v566 = vadd.f32 %v534, 0.0
        %v567 = vadd.f32 %v535, 0.0
        %v568 = vadd.f32 %v536, 0.0
        %v569 = vadd.f32 %v537, 0.0
        %v570 = vadd.f32 %v538, 0.0
        %v571 = vadd.f32 %v539, 0.0
        %v572 = vadd.f32 %v540, 0.0
        %v573 = vadd.f32 %v541, 0.0
        %v574 = vadd.f32 %v542, 0.0
        %v575 = vld [vmem:[#allocation2 + $0x1] sm:$0xff]
        %v576 = vld [vmem:[#allocation2 + $0x9] sm:$0xff]
        %v577 = vld [vmem:[#allocation2 + $0x19] sm:$0xff]
        %v578 = vld [vmem:[#allocation2 + $0x21] sm:$0xff]
        %v579 = vld [vmem:[#allocation2 + $0x31] sm:$0xff]
        %v580 = vld [vmem:[#allocation2 + $0x39] sm:$0xff]
        %v581 = vld [vmem:[#allocation2 + $0x49] sm:$0xff]
        %v582 = vld [vmem:[#allocation2 + $0x51] sm:$0xff]
        %v583 = vld [vmem:[#allocation2 + $0x61] sm:$0xff]
        %v584 = vld [vmem:[#allocation2 + $0x69] sm:$0xff]
        %v585 = vld [vmem:[#allocation2 + $0x79] sm:$0xff]
        %v586 = vld [vmem:[#allocation2 + $0x81] sm:$0xff]
        %v587 = vld [vmem:[#allocation2 + $0x91] sm:$0xff]
        %v588 = vld [vmem:[#allocation2 + $0x99] sm:$0xff]
        %v589 = vld [vmem:[#allocation2 + $0xa9] sm:$0xff]
        %v590 = vld [vmem:[#allocation2 + $0xb1] sm:$0xff]
        %v591 = vld [vmem:[#allocation2 + $0xc1] sm:$0xff]
        %v592 = vld [vmem:[#allocation2 + $0xc9] sm:$0xff]
        %v593 = vld [vmem:[#allocation2 + $0xd9] sm:$0xff]
        %v594 = vld [vmem:[#allocation2 + $0xe1] sm:$0xff]
        %v595 = vld [vmem:[#allocation2 + $0xf1] sm:$0xff]
        %v596 = vld [vmem:[#allocation2 + $0xf9] sm:$0xff]
        %v597 = vld [vmem:[#allocation2 + $0x109] sm:$0xff]
        %v598 = vld [vmem:[#allocation2 + $0x111] sm:$0xff]
        %v599 = vld [vmem:[#allocation2 + $0x121] sm:$0xff]
        %v600 = vld [vmem:[#allocation2 + $0x129] sm:$0xff]
        %v601 = vld [vmem:[#allocation2 + $0x139] sm:$0xff]
        %v602 = vld [vmem:[#allocation2 + $0x141] sm:$0xff]
        %v603 = vld [vmem:[#allocation2 + $0x151] sm:$0xff]
        %v604 = vld [vmem:[#allocation2 + $0x159] sm:$0xff]
        %v605 = vld [vmem:[#allocation2 + $0x169] sm:$0xff]
        %v606 = vld [vmem:[#allocation2 + $0x171] sm:$0xff]
        %v607 = vlaneseq
        %v608 = vshrl.u32 %v607, 7
        %v609 = vsub.s32 1, %v608
        %v610 = vrot.slane %v473, %v609
        %v611 = vmul.f32 %v610, %v575
        %v612 = vmul.f32 %v610, %v576
        %v613 = vmul.f32 %v610, %v577
        %v614 = vmul.f32 %v610, %v578
        %v615 = vmul.f32 %v610, %v579
        %v616 = vmul.f32 %v610, %v580
        %v617 = vmul.f32 %v610, %v581
        %v618 = vmul.f32 %v610, %v582
        %v619 = vmul.f32 %v610, %v583
        %v620 = vmul.f32 %v610, %v584
        %v621 = vmul.f32 %v610, %v585
        %v622 = vmul.f32 %v610, %v586
        %v623 = vmul.f32 %v610, %v587
        %v624 = vmul.f32 %v610, %v588
        %v625 = vmul.f32 %v610, %v589
        %v626 = vmul.f32 %v610, %v590
        %v627 = vmul.f32 %v610, %v591
        %v628 = vmul.f32 %v610, %v592
        %v629 = vmul.f32 %v610, %v593
        %v630 = vmul.f32 %v610, %v594
        %v631 = vmul.f32 %v610, %v595
        %v632 = vmul.f32 %v610, %v596
        %v633 = vmul.f32 %v610, %v597
        %v634 = vmul.f32 %v610, %v598
        %v635 = vmul.f32 %v610, %v599
        %v636 = vmul.f32 %v610, %v600
        %v637 = vmul.f32 %v610, %v601
        %v638 = vmul.f32 %v610, %v602
        %v639 = vmul.f32 %v610, %v603
        %v640 = vmul.f32 %v610, %v604
        %v641 = vmul.f32 %v610, %v605
        %v642 = vmul.f32 %v610, %v606
        %v643 = vadd.f32 %v543, %v611
        %v644 = vadd.f32 %v544, %v612
        %v645 = vadd.f32 %v545, %v613
        %v646 = vadd.f32 %v546, %v614
        %v647 = vadd.f32 %v547, %v615
        %v648 = vadd.f32 %v548, %v616
        %v649 = vadd.f32 %v549, %v617
        %v650 = vadd.f32 %v550, %v618
        %v651 = vadd.f32 %v551, %v619
        %v652 = vadd.f32 %v552, %v620
        %v653 = vadd.f32 %v553, %v621
        %v654 = vadd.f32 %v554, %v622
        %v655 = vadd.f32 %v555, %v623
        %v656 = vadd.f32 %v556, %v624
        %v657 = vadd.f32 %v557, %v625
        %v658 = vadd.f32 %v558, %v626
        %v659 = vadd.f32 %v559, %v627
        %v660 = vadd.f32 %v560, %v628
        %v661 = vadd.f32 %v561, %v629
        %v662 = vadd.f32 %v562, %v630
        %v663 = vadd.f32 %v563, %v631
        %v664 = vadd.f32 %v564, %v632
        %v665 = vadd.f32 %v565, %v633
        %v666 = vadd.f32 %v566, %v634
        %v667 = vadd.f32 %v567, %v635
        %v668 = vadd.f32 %v568, %v636
        %v669 = vadd.f32 %v569, %v637
        %v670 = vadd.f32 %v570, %v638
        %v671 = vadd.f32 %v571, %v639
        %v672 = vadd.f32 %v572, %v640
        %v673 = vadd.f32 %v573, %v641
        %v674 = vadd.f32 %v574, %v642
        %v675 = vld [vmem:[#allocation2 + $0x2] sm:$0xff]
        %v676 = vld [vmem:[#allocation2 + $0xa] sm:$0xff]
        %v677 = vld [vmem:[#allocation2 + $0x1a] sm:$0xff]
        %v678 = vld [vmem:[#allocation2 + $0x22] sm:$0xff]
        %v679 = vld [vmem:[#allocation2 + $0x32] sm:$0xff]
        %v680 = vld [vmem:[#allocation2 + $0x3a] sm:$0xff]
        %v681 = vld [vmem:[#allocation2 + $0x4a] sm:$0xff]
        %v682 = vld [vmem:[#allocation2 + $0x52] sm:$0xff]
        %v683 = vld [vmem:[#allocation2 + $0x62] sm:$0xff]
        %v684 = vld [vmem:[#allocation2 + $0x6a] sm:$0xff]
        %v685 = vld [vmem:[#allocation2 + $0x7a] sm:$0xff]
        %v686 = vld [vmem:[#allocation2 + $0x82] sm:$0xff]
        %v687 = vld [vmem:[#allocation2 + $0x92] sm:$0xff]
        %v688 = vld [vmem:[#allocation2 + $0x9a] sm:$0xff]
        %v689 = vld [vmem:[#allocation2 + $0xaa] sm:$0xff]
        %v690 = vld [vmem:[#allocation2 + $0xb2] sm:$0xff]
        %v691 = vld [vmem:[#allocation2 + $0xc2] sm:$0xff]
        %v692 = vld [vmem:[#allocation2 + $0xca] sm:$0xff]
        %v693 = vld [vmem:[#allocation2 + $0xda] sm:$0xff]
        %v694 = vld [vmem:[#allocation2 + $0xe2] sm:$0xff]
        %v695 = vld [vmem:[#allocation2 + $0xf2] sm:$0xff]
        %v696 = vld [vmem:[#allocation2 + $0xfa] sm:$0xff]
        %v697 = vld [vmem:[#allocation2 + $0x10a] sm:$0xff]
        %v698 = vld [vmem:[#allocation2 + $0x112] sm:$0xff]
        %v699 = vld [vmem:[#allocation2 + $0x122] sm:$0xff]
        %v700 = vld [vmem:[#allocation2 + $0x12a] sm:$0xff]
        %v701 = vld [vmem:[#allocation2 + $0x13a] sm:$0xff]
        %v702 = vld [vmem:[#allocation2 + $0x142] sm:$0xff]
        %v703 = vld [vmem:[#allocation2 + $0x152] sm:$0xff]
        %v704 = vld [vmem:[#allocation2 + $0x15a] sm:$0xff]
        %v705 = vld [vmem:[#allocation2 + $0x16a] sm:$0xff]
        %v706 = vld [vmem:[#allocation2 + $0x172] sm:$0xff]
        %v707 = vlaneseq
        %v708 = vshrl.u32 %v707, 7
        %v709 = vsub.s32 2, %v708
        %v710 = vrot.slane %v473, %v709
        %v711 = vmul.f32 %v710, %v675
        %v712 = vmul.f32 %v710, %v676
        %v713 = vmul.f32 %v710, %v677
        %v714 = vmul.f32 %v710, %v678
        %v715 = vmul.f32 %v710, %v679
        %v716 = vmul.f32 %v710, %v680
        %v717 = vmul.f32 %v710, %v681
        %v718 = vmul.f32 %v710, %v682
        %v719 = vmul.f32 %v710, %v683
        %v720 = vmul.f32 %v710, %v684
        %v721 = vmul.f32 %v710, %v685
        %v722 = vmul.f32 %v710, %v686
        %v723 = vmul.f32 %v710, %v687
        %v724 = vmul.f32 %v710, %v688
        %v725 = vmul.f32 %v710, %v689
        %v726 = vmul.f32 %v710, %v690
        %v727 = vmul.f32 %v710, %v691
        %v728 = vmul.f32 %v710, %v692
        %v729 = vmul.f32 %v710, %v693
        %v730 = vmul.f32 %v710, %v694
        %v731 = vmul.f32 %v710, %v695
        %v732 = vmul.f32 %v710, %v696
        %v733 = vmul.f32 %v710, %v697
        %v734 = vmul.f32 %v710, %v698
        %v735 = vmul.f32 %v710, %v699
        %v736 = vmul.f32 %v710, %v700
        %v737 = vmul.f32 %v710, %v701
        %v738 = vmul.f32 %v710, %v702
        %v739 = vmul.f32 %v710, %v703
        %v740 = vmul.f32 %v710, %v704
        %v741 = vmul.f32 %v710, %v705
        %v742 = vmul.f32 %v710, %v706
        %v743 = vadd.f32 %v643, %v711
        %v744 = vadd.f32 %v644, %v712
        %v745 = vadd.f32 %v645, %v713
        %v746 = vadd.f32 %v646, %v714
        %v747 = vadd.f32 %v647, %v715
        %v748 = vadd.f32 %v648, %v716
        %v749 = vadd.f32 %v649, %v717
        %v750 = vadd.f32 %v650, %v718
        %v751 = vadd.f32 %v651, %v719
        %v752 = vadd.f32 %v652, %v720
        %v753 = vadd.f32 %v653, %v721
        %v754 = vadd.f32 %v654, %v722
        %v755 = vadd.f32 %v655, %v723
        %v756 = vadd.f32 %v656, %v724
        %v757 = vadd.f32 %v657, %v725
        %v758 = vadd.f32 %v658, %v726
        %v759 = vadd.f32 %v659, %v727
        %v760 = vadd.f32 %v660, %v728
        %v761 = vadd.f32 %v661, %v729
        %v762 = vadd.f32 %v662, %v730
        %v763 = vadd.f32 %v663, %v731
        %v764 = vadd.f32 %v664, %v732
        %v765 = vadd.f32 %v665, %v733
        %v766 = vadd.f32 %v666, %v734
        %v767 = vadd.f32 %v667, %v735
        %v768 = vadd.f32 %v668, %v736
        %v769 = vadd.f32 %v669, %v737
        %v770 = vadd.f32 %v670, %v738
        %v771 = vadd.f32 %v671, %v739
        %v772 = vadd.f32 %v672, %v740
        %v773 = vadd.f32 %v673, %v741
        %v774 = vadd.f32 %v674, %v742
        %v775 = vld [vmem:[%s440] sm:$0xff]
        %v776 = vld [vmem:[%s440 + $0x8] sm:$0xff]
        %v777 = vld [vmem:[%s440 + $0x18] sm:$0xff]
        %v778 = vld [vmem:[%s440 + $0x20] sm:$0xff]
        %v779 = vld [vmem:[%s440 + $0x30] sm:$0xff]
        %v780 = vld [vmem:[%s440 + $0x38] sm:$0xff]
        %v781 = vld [vmem:[%s440 + $0x48] sm:$0xff]
        %v782 = vld [vmem:[%s440 + $0x50] sm:$0xff]
        %v783 = vld [vmem:[%s440 + $0x60] sm:$0xff]
        %v784 = vld [vmem:[%s440 + $0x68] sm:$0xff]
        %v785 = vld [vmem:[%s440 + $0x78] sm:$0xff]
        %v786 = vld [vmem:[%s440 + $0x80] sm:$0xff]
        %v787 = vld [vmem:[%s440 + $0x90] sm:$0xff]
        %v788 = vld [vmem:[%s440 + $0x98] sm:$0xff]
        %v789 = vld [vmem:[%s440 + $0xa8] sm:$0xff]
        %v790 = vld [vmem:[%s440 + $0xb0] sm:$0xff]
        %v791 = vld [vmem:[%s440 + $0xc0] sm:$0xff]
        %v792 = vld [vmem:[%s440 + $0xc8] sm:$0xff]
        %v793 = vld [vmem:[%s440 + $0xd8] sm:$0xff]
        %v794 = vld [vmem:[%s440 + $0xe0] sm:$0xff]
        %v795 = vld [vmem:[%s440 + $0xf0] sm:$0xff]
        %v796 = vld [vmem:[%s440 + $0xf8] sm:$0xff]
        %v797 = vld [vmem:[%s440 + $0x108] sm:$0xff]
        %v798 = vld [vmem:[%s440 + $0x110] sm:$0xff]
        %v799 = vld [vmem:[%s440 + $0x120] sm:$0xff]
        %v800 = vld [vmem:[%s440 + $0x128] sm:$0xff]
        %v801 = vld [vmem:[%s440 + $0x138] sm:$0xff]
        %v802 = vld [vmem:[%s440 + $0x140] sm:$0xff]
        %v803 = vld [vmem:[%s440 + $0x150] sm:$0xff]
        %v804 = vld [vmem:[%s440 + $0x158] sm:$0xff]
        %v805 = vld [vmem:[%s440 + $0x168] sm:$0xff]
        %v806 = vld [vmem:[%s440 + $0x170] sm:$0xff]
        %v807 = vlaneseq
        %v808 = vshrl.u32 %v807, 7
        %v809 = vsub.s32 3, %v808
        %v810 = vrot.slane %v473, %v809
        %v811 = vmul.f32 %v810, %v775
        %v812 = vmul.f32 %v810, %v776
        %v813 = vmul.f32 %v810, %v777
        %v814 = vmul.f32 %v810, %v778
        %v815 = vmul.f32 %v810, %v779
        %v816 = vmul.f32 %v810, %v780
        %v817 = vmul.f32 %v810, %v781
        %v818 = vmul.f32 %v810, %v782
        %v819 = vmul.f32 %v810, %v783
        %v820 = vmul.f32 %v810, %v784
        %v821 = vmul.f32 %v810, %v785
        %v822 = vmul.f32 %v810, %v786
        %v823 = vmul.f32 %v810, %v787
        %v824 = vmul.f32 %v810, %v788
        %v825 = vmul.f32 %v810, %v789
        %v826 = vmul.f32 %v810, %v790
        %v827 = vmul.f32 %v810, %v791
        %v828 = vmul.f32 %v810, %v792
        %v829 = vmul.f32 %v810, %v793
        %v830 = vmul.f32 %v810, %v794
        %v831 = vmul.f32 %v810, %v795
        %v832 = vmul.f32 %v810, %v796
        %v833 = vmul.f32 %v810, %v797
        %v834 = vmul.f32 %v810, %v798
        %v835 = vmul.f32 %v810, %v799
        %v836 = vmul.f32 %v810, %v800
        %v837 = vmul.f32 %v810, %v801
        %v838 = vmul.f32 %v810, %v802
        %v839 = vmul.f32 %v810, %v803
        %v840 = vmul.f32 %v810, %v804
        %v841 = vmul.f32 %v810, %v805
        %v842 = vmul.f32 %v810, %v806
        %v843 = vadd.f32 %v743, %v811
        %v844 = vadd.f32 %v744, %v812
        %v845 = vadd.f32 %v745, %v813
        %v846 = vadd.f32 %v746, %v814
        %v847 = vadd.f32 %v747, %v815
        %v848 = vadd.f32 %v748, %v816
        %v849 = vadd.f32 %v749, %v817
        %v850 = vadd.f32 %v750, %v818
        %v851 = vadd.f32 %v751, %v819
        %v852 = vadd.f32 %v752, %v820
        %v853 = vadd.f32 %v753, %v821
        %v854 = vadd.f32 %v754, %v822
        %v855 = vadd.f32 %v755, %v823
        %v856 = vadd.f32 %v756, %v824
        %v857 = vadd.f32 %v757, %v825
        %v858 = vadd.f32 %v758, %v826
        %v859 = vadd.f32 %v759, %v827
        %v860 = vadd.f32 %v760, %v828
        %v861 = vadd.f32 %v761, %v829
        %v862 = vadd.f32 %v762, %v830
        %v863 = vadd.f32 %v763, %v831
        %v864 = vadd.f32 %v764, %v832
        %v865 = vadd.f32 %v765, %v833
        %v866 = vadd.f32 %v766, %v834
        %v867 = vadd.f32 %v767, %v835
        %v868 = vadd.f32 %v768, %v836
        %v869 = vadd.f32 %v769, %v837
        %v870 = vadd.f32 %v770, %v838
        %v871 = vadd.f32 %v771, %v839
        %v872 = vadd.f32 %v772, %v840
        %v873 = vadd.f32 %v773, %v841
        %v874 = vadd.f32 %v774, %v842
        %v875 = vld [vmem:[%s440 + $0x1] sm:$0xff]
        %v876 = vld [vmem:[%s440 + $0x9] sm:$0xff]
        %v877 = vld [vmem:[%s440 + $0x19] sm:$0xff]
        %v878 = vld [vmem:[%s440 + $0x21] sm:$0xff]
        %v879 = vld [vmem:[%s440 + $0x31] sm:$0xff]
        %v880 = vld [vmem:[%s440 + $0x39] sm:$0xff]
        %v881 = vld [vmem:[%s440 + $0x49] sm:$0xff]
        %v882 = vld [vmem:[%s440 + $0x51] sm:$0xff]
        %v883 = vld [vmem:[%s440 + $0x61] sm:$0xff]
        %v884 = vld [vmem:[%s440 + $0x69] sm:$0xff]
        %v885 = vld [vmem:[%s440 + $0x79] sm:$0xff]
        %v886 = vld [vmem:[%s440 + $0x81] sm:$0xff]
        %v887 = vld [vmem:[%s440 + $0x91] sm:$0xff]
        %v888 = vld [vmem:[%s440 + $0x99] sm:$0xff]
        %v889 = vld [vmem:[%s440 + $0xa9] sm:$0xff]
        %v890 = vld [vmem:[%s440 + $0xb1] sm:$0xff]
        %v891 = vld [vmem:[%s440 + $0xc1] sm:$0xff]
        %v892 = vld [vmem:[%s440 + $0xc9] sm:$0xff]
        %v893 = vld [vmem:[%s440 + $0xd9] sm:$0xff]
        %v894 = vld [vmem:[%s440 + $0xe1] sm:$0xff]
        %v895 = vld [vmem:[%s440 + $0xf1] sm:$0xff]
        %v896 = vld [vmem:[%s440 + $0xf9] sm:$0xff]
        %v897 = vld [vmem:[%s440 + $0x109] sm:$0xff]
        %v898 = vld [vmem:[%s440 + $0x111] sm:$0xff]
        %v899 = vld [vmem:[%s440 + $0x121] sm:$0xff]
        %v900 = vld [vmem:[%s440 + $0x129] sm:$0xff]
        %v901 = vld [vmem:[%s440 + $0x139] sm:$0xff]
        %v902 = vld [vmem:[%s440 + $0x141] sm:$0xff]
        %v903 = vld [vmem:[%s440 + $0x151] sm:$0xff]
        %v904 = vld [vmem:[%s440 + $0x159] sm:$0xff]
        %v905 = vld [vmem:[%s440 + $0x169] sm:$0xff]
        %v906 = vld [vmem:[%s440 + $0x171] sm:$0xff]
        %v907 = vlaneseq
        %v908 = vshrl.u32 %v907, 7
        %v909 = vsub.s32 4, %v908
        %v910 = vrot.slane %v473, %v909
        %v911 = vmul.f32 %v910, %v875
        %v912 = vmul.f32 %v910, %v876
        %v913 = vmul.f32 %v910, %v877
        %v914 = vmul.f32 %v910, %v878
        %v915 = vmul.f32 %v910, %v879
        %v916 = vmul.f32 %v910, %v880
        %v917 = vmul.f32 %v910, %v881
        %v918 = vmul.f32 %v910, %v882
        %v919 = vmul.f32 %v910, %v883
        %v920 = vmul.f32 %v910, %v884
        %v921 = vmul.f32 %v910, %v885
        %v922 = vmul.f32 %v910, %v886
        %v923 = vmul.f32 %v910, %v887
        %v924 = vmul.f32 %v910, %v888
        %v925 = vmul.f32 %v910, %v889
        %v926 = vmul.f32 %v910, %v890
        %v927 = vmul.f32 %v910, %v891
        %v928 = vmul.f32 %v910, %v892
        %v929 = vmul.f32 %v910, %v893
        %v930 = vmul.f32 %v910, %v894
        %v931 = vmul.f32 %v910, %v895
        %v932 = vmul.f32 %v910, %v896
        %v933 = vmul.f32 %v910, %v897
        %v934 = vmul.f32 %v910, %v898
        %v935 = vmul.f32 %v910, %v899
        %v936 = vmul.f32 %v910, %v900
        %v937 = vmul.f32 %v910, %v901
        %v938 = vmul.f32 %v910, %v902
        %v939 = vmul.f32 %v910, %v903
        %v940 = vmul.f32 %v910, %v904
        %v941 = vmul.f32 %v910, %v905
        %v942 = vmul.f32 %v910, %v906
        %v943 = vadd.f32 %v843, %v911
        %v944 = vadd.f32 %v844, %v912
        %v945 = vadd.f32 %v845, %v913
        %v946 = vadd.f32 %v846, %v914
        %v947 = vadd.f32 %v847, %v915
        %v948 = vadd.f32 %v848, %v916
        %v949 = vadd.f32 %v849, %v917
        %v950 = vadd.f32 %v850, %v918
        %v951 = vadd.f32 %v851, %v919
        %v952 = vadd.f32 %v852, %v920
        %v953 = vadd.f32 %v853, %v921
        %v954 = vadd.f32 %v854, %v922
        %v955 = vadd.f32 %v855, %v923
        %v956 = vadd.f32 %v856, %v924
        %v957 = vadd.f32 %v857, %v925
        %v958 = vadd.f32 %v858, %v926
        %v959 = vadd.f32 %v859, %v927
        %v960 = vadd.f32 %v860, %v928
        %v961 = vadd.f32 %v861, %v929
        %v962 = vadd.f32 %v862, %v930
        %v963 = vadd.f32 %v863, %v931
        %v964 = vadd.f32 %v864, %v932
        %v965 = vadd.f32 %v865, %v933
        %v966 = vadd.f32 %v866, %v934
        %v967 = vadd.f32 %v867, %v935
        %v968 = vadd.f32 %v868, %v936
        %v969 = vadd.f32 %v869, %v937
        %v970 = vadd.f32 %v870, %v938
        %v971 = vadd.f32 %v871, %v939
        %v972 = vadd.f32 %v872, %v940
        %v973 = vadd.f32 %v873, %v941
        %v974 = vadd.f32 %v874, %v942
        %v975 = vld [vmem:[%s440 + $0x2] sm:$0xff]
        %v976 = vld [vmem:[%s440 + $0xa] sm:$0xff]
        %v977 = vld [vmem:[%s440 + $0x1a] sm:$0xff]
        %v978 = vld [vmem:[%s440 + $0x22] sm:$0xff]
        %v979 = vld [vmem:[%s440 + $0x32] sm:$0xff]
        %v980 = vld [vmem:[%s440 + $0x3a] sm:$0xff]
        %v981 = vld [vmem:[%s440 + $0x4a] sm:$0xff]
        %v982 = vld [vmem:[%s440 + $0x52] sm:$0xff]
        %v983 = vld [vmem:[%s440 + $0x62] sm:$0xff]
        %v984 = vld [vmem:[%s440 + $0x6a] sm:$0xff]
        %v985 = vld [vmem:[%s440 + $0x7a] sm:$0xff]
        %v986 = vld [vmem:[%s440 + $0x82] sm:$0xff]
        %v987 = vld [vmem:[%s440 + $0x92] sm:$0xff]
        %v988 = vld [vmem:[%s440 + $0x9a] sm:$0xff]
        %v989 = vld [vmem:[%s440 + $0xaa] sm:$0xff]
        %v990 = vld [vmem:[%s440 + $0xb2] sm:$0xff]
        %v991 = vld [vmem:[%s440 + $0xc2] sm:$0xff]
        %v992 = vld [vmem:[%s440 + $0xca] sm:$0xff]
        %v993 = vld [vmem:[%s440 + $0xda] sm:$0xff]
        %v994 = vld [vmem:[%s440 + $0xe2] sm:$0xff]
        %v995 = vld [vmem:[%s440 + $0xf2] sm:$0xff]
        %v996 = vld [vmem:[%s440 + $0xfa] sm:$0xff]
        %v997 = vld [vmem:[%s440 + $0x10a] sm:$0xff]
        %v998 = vld [vmem:[%s440 + $0x112] sm:$0xff]
        %v999 = vld [vmem:[%s440 + $0x122] sm:$0xff]
        %v1000 = vld [vmem:[%s440 + $0x12a] sm:$0xff]
        %v1001 = vld [vmem:[%s440 + $0x13a] sm:$0xff]
        %v1002 = vld [vmem:[%s440 + $0x142] sm:$0xff]
        %v1003 = vld [vmem:[%s440 + $0x152] sm:$0xff]
        %v1004 = vld [vmem:[%s440 + $0x15a] sm:$0xff]
        %v1005 = vld [vmem:[%s440 + $0x16a] sm:$0xff]
        %v1006 = vld [vmem:[%s440 + $0x172] sm:$0xff]
        %v1007 = vlaneseq
        %v1008 = vshrl.u32 %v1007, 7
        %v1009 = vsub.s32 5, %v1008
        %v1010 = vrot.slane %v473, %v1009
        %v1011 = vmul.f32 %v1010, %v975
        %v1012 = vmul.f32 %v1010, %v976
        %v1013 = vmul.f32 %v1010, %v977
        %v1014 = vmul.f32 %v1010, %v978
        %v1015 = vmul.f32 %v1010, %v979
        %v1016 = vmul.f32 %v1010, %v980
        %v1017 = vmul.f32 %v1010, %v981
        %v1018 = vmul.f32 %v1010, %v982
        %v1019 = vmul.f32 %v1010, %v983
        %v1020 = vmul.f32 %v1010, %v984
        %v1021 = vmul.f32 %v1010, %v985
        %v1022 = vmul.f32 %v1010, %v986
        %v1023 = vmul.f32 %v1010, %v987
        %v1024 = vmul.f32 %v1010, %v988
        %v1025 = vmul.f32 %v1010, %v989
        %v1026 = vmul.f32 %v1010, %v990
        %v1027 = vmul.f32 %v1010, %v991
        %v1028 = vmul.f32 %v1010, %v992
        %v1029 = vmul.f32 %v1010, %v993
        %v1030 = vmul.f32 %v1010, %v994
        %v1031 = vmul.f32 %v1010, %v995
        %v1032 = vmul.f32 %v1010, %v996
        %v1033 = vmul.f32 %v1010, %v997
        %v1034 = vmul.f32 %v1010, %v998
        %v1035 = vmul.f32 %v1010, %v999
        %v1036 = vmul.f32 %v1010, %v1000
        %v1037 = vmul.f32 %v1010, %v1001
        %v1038 = vmul.f32 %v1010, %v1002
        %v1039 = vmul.f32 %v1010, %v1003
        %v1040 = vmul.f32 %v1010, %v1004
        %v1041 = vmul.f32 %v1010, %v1005
        %v1042 = vmul.f32 %v1010, %v1006
        %v1043 = vadd.f32 %v943, %v1011
        %v1044 = vadd.f32 %v944, %v1012
        %v1045 = vadd.f32 %v945, %v1013
        %v1046 = vadd.f32 %v946, %v1014
        %v1047 = vadd.f32 %v947, %v1015
        %v1048 = vadd.f32 %v948, %v1016
        %v1049 = vadd.f32 %v949, %v1017
        %v1050 = vadd.f32 %v950, %v1018
        %v1051 = vadd.f32 %v951, %v1019
        %v1052 = vadd.f32 %v952, %v1020
        %v1053 = vadd.f32 %v953, %v1021
        %v1054 = vadd.f32 %v954, %v1022
        %v1055 = vadd.f32 %v955, %v1023
        %v1056 = vadd.f32 %v956, %v1024
        %v1057 = vadd.f32 %v957, %v1025
        %v1058 = vadd.f32 %v958, %v1026
        %v1059 = vadd.f32 %v959, %v1027
        %v1060 = vadd.f32 %v960, %v1028
        %v1061 = vadd.f32 %v961, %v1029
        %v1062 = vadd.f32 %v962, %v1030
        %v1063 = vadd.f32 %v963, %v1031
        %v1064 = vadd.f32 %v964, %v1032
        %v1065 = vadd.f32 %v965, %v1033
        %v1066 = vadd.f32 %v966, %v1034
        %v1067 = vadd.f32 %v967, %v1035
        %v1068 = vadd.f32 %v968, %v1036
        %v1069 = vadd.f32 %v969, %v1037
        %v1070 = vadd.f32 %v970, %v1038
        %v1071 = vadd.f32 %v971, %v1039
        %v1072 = vadd.f32 %v972, %v1040
        %v1073 = vadd.f32 %v973, %v1041
        %v1074 = vadd.f32 %v974, %v1042
        %s1075 = scalar_lea.vmem [#allocation2], 48
        %v1076 = vld [vmem:[%s1075] sm:$0xff]
        %v1077 = vld [vmem:[%s1075 + $0x8] sm:$0xff]
        %v1078 = vld [vmem:[%s1075 + $0x18] sm:$0xff]
        %v1079 = vld [vmem:[%s1075 + $0x20] sm:$0xff]
        %v1080 = vld [vmem:[%s1075 + $0x30] sm:$0xff]
        %v1081 = vld [vmem:[%s1075 + $0x38] sm:$0xff]
        %v1082 = vld [vmem:[%s1075 + $0x48] sm:$0xff]
        %v1083 = vld [vmem:[%s1075 + $0x50] sm:$0xff]
        %v1084 = vld [vmem:[%s1075 + $0x60] sm:$0xff]
        %v1085 = vld [vmem:[%s1075 + $0x68] sm:$0xff]
        %v1086 = vld [vmem:[%s1075 + $0x78] sm:$0xff]
        %v1087 = vld [vmem:[%s1075 + $0x80] sm:$0xff]
        %v1088 = vld [vmem:[%s1075 + $0x90] sm:$0xff]
        %v1089 = vld [vmem:[%s1075 + $0x98] sm:$0xff]
        %v1090 = vld [vmem:[%s1075 + $0xa8] sm:$0xff]
        %v1091 = vld [vmem:[%s1075 + $0xb0] sm:$0xff]
        %v1092 = vld [vmem:[%s1075 + $0xc0] sm:$0xff]
        %v1093 = vld [vmem:[%s1075 + $0xc8] sm:$0xff]
        %v1094 = vld [vmem:[%s1075 + $0xd8] sm:$0xff]
        %v1095 = vld [vmem:[%s1075 + $0xe0] sm:$0xff]
        %v1096 = vld [vmem:[%s1075 + $0xf0] sm:$0xff]
        %v1097 = vld [vmem:[%s1075 + $0xf8] sm:$0xff]
        %v1098 = vld [vmem:[%s1075 + $0x108] sm:$0xff]
        %v1099 = vld [vmem:[%s1075 + $0x110] sm:$0xff]
        %v1100 = vld [vmem:[%s1075 + $0x120] sm:$0xff]
        %v1101 = vld [vmem:[%s1075 + $0x128] sm:$0xff]
        %v1102 = vld [vmem:[%s1075 + $0x138] sm:$0xff]
        %v1103 = vld [vmem:[%s1075 + $0x140] sm:$0xff]
        %v1104 = vld [vmem:[%s1075 + $0x150] sm:$0xff]
        %v1105 = vld [vmem:[%s1075 + $0x158] sm:$0xff]
        %v1106 = vld [vmem:[%s1075 + $0x168] sm:$0xff]
        %v1107 = vld [vmem:[%s1075 + $0x170] sm:$0xff]
        %v1108 = vlaneseq
        %v1109 = vshrl.u32 %v1108, 7
        %v1110 = vsub.s32 6, %v1109
        %v1111 = vrot.slane %v473, %v1110
        %v1112 = vmul.f32 %v1111, %v1076
        %v1113 = vmul.f32 %v1111, %v1077
        %v1114 = vmul.f32 %v1111, %v1078
        %v1115 = vmul.f32 %v1111, %v1079
        %v1116 = vmul.f32 %v1111, %v1080
        %v1117 = vmul.f32 %v1111, %v1081
        %v1118 = vmul.f32 %v1111, %v1082
        %v1119 = vmul.f32 %v1111, %v1083
        %v1120 = vmul.f32 %v1111, %v1084
        %v1121 = vmul.f32 %v1111, %v1085
        %v1122 = vmul.f32 %v1111, %v1086
        %v1123 = vmul.f32 %v1111, %v1087
        %v1124 = vmul.f32 %v1111, %v1088
        %v1125 = vmul.f32 %v1111, %v1089
        %v1126 = vmul.f32 %v1111, %v1090
        %v1127 = vmul.f32 %v1111, %v1091
        %v1128 = vmul.f32 %v1111, %v1092
        %v1129 = vmul.f32 %v1111, %v1093
        %v1130 = vmul.f32 %v1111, %v1094
        %v1131 = vmul.f32 %v1111, %v1095
        %v1132 = vmul.f32 %v1111, %v1096
        %v1133 = vmul.f32 %v1111, %v1097
        %v1134 = vmul.f32 %v1111, %v1098
        %v1135 = vmul.f32 %v1111, %v1099
        %v1136 = vmul.f32 %v1111, %v1100
        %v1137 = vmul.f32 %v1111, %v1101
        %v1138 = vmul.f32 %v1111, %v1102
        %v1139 = vmul.f32 %v1111, %v1103
        %v1140 = vmul.f32 %v1111, %v1104
        %v1141 = vmul.f32 %v1111, %v1105
        %v1142 = vmul.f32 %v1111, %v1106
        %v1143 = vmul.f32 %v1111, %v1107
        %v1144 = vadd.f32 %v1043, %v1112
        %v1145 = vadd.f32 %v1044, %v1113
        %v1146 = vadd.f32 %v1045, %v1114
        %v1147 = vadd.f32 %v1046, %v1115
        %v1148 = vadd.f32 %v1047, %v1116
        %v1149 = vadd.f32 %v1048, %v1117
        %v1150 = vadd.f32 %v1049, %v1118
        %v1151 = vadd.f32 %v1050, %v1119
        %v1152 = vadd.f32 %v1051, %v1120
        %v1153 = vadd.f32 %v1052, %v1121
        %v1154 = vadd.f32 %v1053, %v1122
        %v1155 = vadd.f32 %v1054, %v1123
        %v1156 = vadd.f32 %v1055, %v1124
        %v1157 = vadd.f32 %v1056, %v1125
        %v1158 = vadd.f32 %v1057, %v1126
        %v1159 = vadd.f32 %v1058, %v1127
        %v1160 = vadd.f32 %v1059, %v1128
        %v1161 = vadd.f32 %v1060, %v1129
        %v1162 = vadd.f32 %v1061, %v1130
        %v1163 = vadd.f32 %v1062, %v1131
        %v1164 = vadd.f32 %v1063, %v1132
        %v1165 = vadd.f32 %v1064, %v1133
        %v1166 = vadd.f32 %v1065, %v1134
        %v1167 = vadd.f32 %v1066, %v1135
        %v1168 = vadd.f32 %v1067, %v1136
        %v1169 = vadd.f32 %v1068, %v1137
        %v1170 = vadd.f32 %v1069, %v1138
        %v1171 = vadd.f32 %v1070, %v1139
        %v1172 = vadd.f32 %v1071, %v1140
        %v1173 = vadd.f32 %v1072, %v1141
        %v1174 = vadd.f32 %v1073, %v1142
        %v1175 = vadd.f32 %v1074, %v1143
        %v1176 = vld [vmem:[%s1075 + $0x1] sm:$0xff]
        %v1177 = vld [vmem:[%s1075 + $0x9] sm:$0xff]
        %v1178 = vld [vmem:[%s1075 + $0x19] sm:$0xff]
        %v1179 = vld [vmem:[%s1075 + $0x21] sm:$0xff]
        %v1180 = vld [vmem:[%s1075 + $0x31] sm:$0xff]
        %v1181 = vld [vmem:[%s1075 + $0x39] sm:$0xff]
        %v1182 = vld [vmem:[%s1075 + $0x49] sm:$0xff]
        %v1183 = vld [vmem:[%s1075 + $0x51] sm:$0xff]
        %v1184 = vld [vmem:[%s1075 + $0x61] sm:$0xff]
        %v1185 = vld [vmem:[%s1075 + $0x69] sm:$0xff]
        %v1186 = vld [vmem:[%s1075 + $0x79] sm:$0xff]
        %v1187 = vld [vmem:[%s1075 + $0x81] sm:$0xff]
        %v1188 = vld [vmem:[%s1075 + $0x91] sm:$0xff]
        %v1189 = vld [vmem:[%s1075 + $0x99] sm:$0xff]
        %v1190 = vld [vmem:[%s1075 + $0xa9] sm:$0xff]
        %v1191 = vld [vmem:[%s1075 + $0xb1] sm:$0xff]
        %v1192 = vld [vmem:[%s1075 + $0xc1] sm:$0xff]
        %v1193 = vld [vmem:[%s1075 + $0xc9] sm:$0xff]
        %v1194 = vld [vmem:[%s1075 + $0xd9] sm:$0xff]
        %v1195 = vld [vmem:[%s1075 + $0xe1] sm:$0xff]
        %v1196 = vld [vmem:[%s1075 + $0xf1] sm:$0xff]
        %v1197 = vld [vmem:[%s1075 + $0xf9] sm:$0xff]
        %v1198 = vld [vmem:[%s1075 + $0x109] sm:$0xff]
        %v1199 = vld [vmem:[%s1075 + $0x111] sm:$0xff]
        %v1200 = vld [vmem:[%s1075 + $0x121] sm:$0xff]
        %v1201 = vld [vmem:[%s1075 + $0x129] sm:$0xff]
        %v1202 = vld [vmem:[%s1075 + $0x139] sm:$0xff]
        %v1203 = vld [vmem:[%s1075 + $0x141] sm:$0xff]
        %v1204 = vld [vmem:[%s1075 + $0x151] sm:$0xff]
        %v1205 = vld [vmem:[%s1075 + $0x159] sm:$0xff]
        %v1206 = vld [vmem:[%s1075 + $0x169] sm:$0xff]
        %v1207 = vld [vmem:[%s1075 + $0x171] sm:$0xff]
        %v1208 = vlaneseq
        %v1209 = vshrl.u32 %v1208, 7
        %v1210 = vsub.s32 7, %v1209
        %v1211 = vrot.slane %v473, %v1210
        %v1212 = vmul.f32 %v1211, %v1176
        %v1213 = vmul.f32 %v1211, %v1177
        %v1214 = vmul.f32 %v1211, %v1178
        %v1215 = vmul.f32 %v1211, %v1179
        %v1216 = vmul.f32 %v1211, %v1180
        %v1217 = vmul.f32 %v1211, %v1181
        %v1218 = vmul.f32 %v1211, %v1182
        %v1219 = vmul.f32 %v1211, %v1183
        %v1220 = vmul.f32 %v1211, %v1184
        %v1221 = vmul.f32 %v1211, %v1185
        %v1222 = vmul.f32 %v1211, %v1186
        %v1223 = vmul.f32 %v1211, %v1187
        %v1224 = vmul.f32 %v1211, %v1188
        %v1225 = vmul.f32 %v1211, %v1189
        %v1226 = vmul.f32 %v1211, %v1190
        %v1227 = vmul.f32 %v1211, %v1191
        %v1228 = vmul.f32 %v1211, %v1192
        %v1229 = vmul.f32 %v1211, %v1193
        %v1230 = vmul.f32 %v1211, %v1194
        %v1231 = vmul.f32 %v1211, %v1195
        %v1232 = vmul.f32 %v1211, %v1196
        %v1233 = vmul.f32 %v1211, %v1197
        %v1234 = vmul.f32 %v1211, %v1198
        %v1235 = vmul.f32 %v1211, %v1199
        %v1236 = vmul.f32 %v1211, %v1200
        %v1237 = vmul.f32 %v1211, %v1201
        %v1238 = vmul.f32 %v1211, %v1202
        %v1239 = vmul.f32 %v1211, %v1203
        %v1240 = vmul.f32 %v1211, %v1204
        %v1241 = vmul.f32 %v1211, %v1205
        %v1242 = vmul.f32 %v1211, %v1206
        %v1243 = vmul.f32 %v1211, %v1207
        %v1244 = vadd.f32 %v1144, %v1212
        %v1245 = vadd.f32 %v1145, %v1213
        %v1246 = vadd.f32 %v1146, %v1214
        %v1247 = vadd.f32 %v1147, %v1215
        %v1248 = vadd.f32 %v1148, %v1216
        %v1249 = vadd.f32 %v1149, %v1217
        %v1250 = vadd.f32 %v1150, %v1218
        %v1251 = vadd.f32 %v1151, %v1219
        %v1252 = vadd.f32 %v1152, %v1220
        %v1253 = vadd.f32 %v1153, %v1221
        %v1254 = vadd.f32 %v1154, %v1222
        %v1255 = vadd.f32 %v1155, %v1223
        %v1256 = vadd.f32 %v1156, %v1224
        %v1257 = vadd.f32 %v1157, %v1225
        %v1258 = vadd.f32 %v1158, %v1226
        %v1259 = vadd.f32 %v1159, %v1227
        %v1260 = vadd.f32 %v1160, %v1228
        %v1261 = vadd.f32 %v1161, %v1229
        %v1262 = vadd.f32 %v1162, %v1230
        %v1263 = vadd.f32 %v1163, %v1231
        %v1264 = vadd.f32 %v1164, %v1232
        %v1265 = vadd.f32 %v1165, %v1233
        %v1266 = vadd.f32 %v1166, %v1234
        %v1267 = vadd.f32 %v1167, %v1235
        %v1268 = vadd.f32 %v1168, %v1236
        %v1269 = vadd.f32 %v1169, %v1237
        %v1270 = vadd.f32 %v1170, %v1238
        %v1271 = vadd.f32 %v1171, %v1239
        %v1272 = vadd.f32 %v1172, %v1240
        %v1273 = vadd.f32 %v1173, %v1241
        %v1274 = vadd.f32 %v1174, %v1242
        %v1275 = vadd.f32 %v1175, %v1243
        %v1276 = vld [vmem:[%s1075 + $0x2] sm:$0xff]
        %v1277 = vld [vmem:[%s1075 + $0xa] sm:$0xff]
        %v1278 = vld [vmem:[%s1075 + $0x1a] sm:$0xff]
        %v1279 = vld [vmem:[%s1075 + $0x22] sm:$0xff]
        %v1280 = vld [vmem:[%s1075 + $0x32] sm:$0xff]
        %v1281 = vld [vmem:[%s1075 + $0x3a] sm:$0xff]
        %v1282 = vld [vmem:[%s1075 + $0x4a] sm:$0xff]
        %v1283 = vld [vmem:[%s1075 + $0x52] sm:$0xff]
        %v1284 = vld [vmem:[%s1075 + $0x62] sm:$0xff]
        %v1285 = vld [vmem:[%s1075 + $0x6a] sm:$0xff]
        %v1286 = vld [vmem:[%s1075 + $0x7a] sm:$0xff]
        %v1287 = vld [vmem:[%s1075 + $0x82] sm:$0xff]
        %v1288 = vld [vmem:[%s1075 + $0x92] sm:$0xff]
        %v1289 = vld [vmem:[%s1075 + $0x9a] sm:$0xff]
        %v1290 = vld [vmem:[%s1075 + $0xaa] sm:$0xff]
        %v1291 = vld [vmem:[%s1075 + $0xb2] sm:$0xff]
        %v1292 = vld [vmem:[%s1075 + $0xc2] sm:$0xff]
        %v1293 = vld [vmem:[%s1075 + $0xca] sm:$0xff]
        %v1294 = vld [vmem:[%s1075 + $0xda] sm:$0xff]
        %v1295 = vld [vmem:[%s1075 + $0xe2] sm:$0xff]
        %v1296 = vld [vmem:[%s1075 + $0xf2] sm:$0xff]
        %v1297 = vld [vmem:[%s1075 + $0xfa] sm:$0xff]
        %v1298 = vld [vmem:[%s1075 + $0x10a] sm:$0xff]
        %v1299 = vld [vmem:[%s1075 + $0x112] sm:$0xff]
        %v1300 = vld [vmem:[%s1075 + $0x122] sm:$0xff]
        %v1301 = vld [vmem:[%s1075 + $0x12a] sm:$0xff]
        %v1302 = vld [vmem:[%s1075 + $0x13a] sm:$0xff]
        %v1303 = vld [vmem:[%s1075 + $0x142] sm:$0xff]
        %v1304 = vld [vmem:[%s1075 + $0x152] sm:$0xff]
        %v1305 = vld [vmem:[%s1075 + $0x15a] sm:$0xff]
        %v1306 = vld [vmem:[%s1075 + $0x16a] sm:$0xff]
        %v1307 = vld [vmem:[%s1075 + $0x172] sm:$0xff]
        %v1308 = vlaneseq
        %v1309 = vshrl.u32 %v1308, 7
        %v1310 = vsub.s32 0, %v1309
        %v1311 = vrot.slane %v474, %v1310
        %v1312 = vmul.f32 %v1311, %v1276
        %v1313 = vmul.f32 %v1311, %v1277
        %v1314 = vmul.f32 %v1311, %v1278
        %v1315 = vmul.f32 %v1311, %v1279
        %v1316 = vmul.f32 %v1311, %v1280
        %v1317 = vmul.f32 %v1311, %v1281
        %v1318 = vmul.f32 %v1311, %v1282
        %v1319 = vmul.f32 %v1311, %v1283
        %v1320 = vmul.f32 %v1311, %v1284
        %v1321 = vmul.f32 %v1311, %v1285
        %v1322 = vmul.f32 %v1311, %v1286
        %v1323 = vmul.f32 %v1311, %v1287
        %v1324 = vmul.f32 %v1311, %v1288
        %v1325 = vmul.f32 %v1311, %v1289
        %v1326 = vmul.f32 %v1311, %v1290
        %v1327 = vmul.f32 %v1311, %v1291
        %v1328 = vmul.f32 %v1311, %v1292
        %v1329 = vmul.f32 %v1311, %v1293
        %v1330 = vmul.f32 %v1311, %v1294
        %v1331 = vmul.f32 %v1311, %v1295
        %v1332 = vmul.f32 %v1311, %v1296
        %v1333 = vmul.f32 %v1311, %v1297
        %v1334 = vmul.f32 %v1311, %v1298
        %v1335 = vmul.f32 %v1311, %v1299
        %v1336 = vmul.f32 %v1311, %v1300
        %v1337 = vmul.f32 %v1311, %v1301
        %v1338 = vmul.f32 %v1311, %v1302
        %v1339 = vmul.f32 %v1311, %v1303
        %v1340 = vmul.f32 %v1311, %v1304
        %v1341 = vmul.f32 %v1311, %v1305
        %v1342 = vmul.f32 %v1311, %v1306
        %v1343 = vmul.f32 %v1311, %v1307
        %v1344 = vadd.f32 %v1244, %v1312
        %v1345 = vadd.f32 %v1245, %v1313
        %v1346 = vadd.f32 %v1246, %v1314
        %v1347 = vadd.f32 %v1247, %v1315
        %v1348 = vadd.f32 %v1248, %v1316
        %v1349 = vadd.f32 %v1249, %v1317
        %v1350 = vadd.f32 %v1250, %v1318
        %v1351 = vadd.f32 %v1251, %v1319
        %v1352 = vadd.f32 %v1252, %v1320
        %v1353 = vadd.f32 %v1253, %v1321
        %v1354 = vadd.f32 %v1254, %v1322
        %v1355 = vadd.f32 %v1255, %v1323
        %v1356 = vadd.f32 %v1256, %v1324
        %v1357 = vadd.f32 %v1257, %v1325
        %v1358 = vadd.f32 %v1258, %v1326
        %v1359 = vadd.f32 %v1259, %v1327
        %v1360 = vadd.f32 %v1260, %v1328
        %v1361 = vadd.f32 %v1261, %v1329
        %v1362 = vadd.f32 %v1262, %v1330
        %v1363 = vadd.f32 %v1263, %v1331
        %v1364 = vadd.f32 %v1264, %v1332
        %v1365 = vadd.f32 %v1265, %v1333
        %v1366 = vadd.f32 %v1266, %v1334
        %v1367 = vadd.f32 %v1267, %v1335
        %v1368 = vadd.f32 %v1268, %v1336
        %v1369 = vadd.f32 %v1269, %v1337
        %v1370 = vadd.f32 %v1270, %v1338
        %v1371 = vadd.f32 %v1271, %v1339
        %v1372 = vadd.f32 %v1272, %v1340
        %v1373 = vadd.f32 %v1273, %v1341
        %v1374 = vadd.f32 %v1274, %v1342
        %v1375 = vadd.f32 %v1275, %v1343
        %v1376 = vld [vmem:[%s2] sm:$0x1]
        %v1378 = vlaneseq
        %v1379 = vshrl.u32 %v1378, 7
        %v1380 = vsub.s32 0, %v1379
        %v1381 = vrot.slane %v1376, %v1380
        %v1383 = vadd.f32 %v1344, %v1381
        %v1384 = vadd.f32 %v1345, %v1381
        %v1385 = vadd.f32 %v1346, %v1381
        %v1386 = vadd.f32 %v1347, %v1381
        %v1387 = vadd.f32 %v1348, %v1381
        %v1388 = vadd.f32 %v1349, %v1381
        %v1389 = vadd.f32 %v1350, %v1381
        %v1390 = vadd.f32 %v1351, %v1381
        %v1391 = vadd.f32 %v1352, %v1381
        %v1392 = vadd.f32 %v1353, %v1381
        %v1393 = vadd.f32 %v1354, %v1381
        %v1394 = vadd.f32 %v1355, %v1381
        %v1395 = vadd.f32 %v1356, %v1381
        %v1396 = vadd.f32 %v1357, %v1381
        %v1397 = vadd.f32 %v1358, %v1381
        %v1398 = vadd.f32 %v1359, %v1381
        %v1399 = vadd.f32 %v1360, %v1381
        %v1400 = vadd.f32 %v1361, %v1381
        %v1401 = vadd.f32 %v1362, %v1381
        %v1402 = vadd.f32 %v1363, %v1381
        %v1403 = vadd.f32 %v1364, %v1381
        %v1404 = vadd.f32 %v1365, %v1381
        %v1405 = vadd.f32 %v1366, %v1381
        %v1406 = vadd.f32 %v1367, %v1381
        %v1407 = vadd.f32 %v1368, %v1381
        %v1408 = vadd.f32 %v1369, %v1381
        %v1409 = vadd.f32 %v1370, %v1381
        %v1410 = vadd.f32 %v1371, %v1381
        %v1411 = vadd.f32 %v1372, %v1381
        %v1412 = vadd.f32 %v1373, %v1381
        %v1413 = vadd.f32 %v1374, %v1381
        %v1414 = vadd.f32 %v1375, %v1381
        %v1415 = vmax.f32 %v1383, 0.0
        %v1416 = vmax.f32 %v1384, 0.0
        %v1417 = vmax.f32 %v1385, 0.0
        %v1418 = vmax.f32 %v1386, 0.0
        %v1419 = vmax.f32 %v1387, 0.0
        %v1420 = vmax.f32 %v1388, 0.0
        %v1421 = vmax.f32 %v1389, 0.0
        %v1422 = vmax.f32 %v1390, 0.0
        %v1423 = vmax.f32 %v1391, 0.0
        %v1424 = vmax.f32 %v1392, 0.0
        %v1425 = vmax.f32 %v1393, 0.0
        %v1426 = vmax.f32 %v1394, 0.0
        %v1427 = vmax.f32 %v1395, 0.0
        %v1428 = vmax.f32 %v1396, 0.0
        %v1429 = vmax.f32 %v1397, 0.0
        %v1430 = vmax.f32 %v1398, 0.0
        %v1431 = vmax.f32 %v1399, 0.0
        %v1432 = vmax.f32 %v1400, 0.0
        %v1433 = vmax.f32 %v1401, 0.0
        %v1434 = vmax.f32 %v1402, 0.0
        %v1435 = vmax.f32 %v1403, 0.0
        %v1436 = vmax.f32 %v1404, 0.0
        %v1437 = vmax.f32 %v1405, 0.0
        %v1438 = vmax.f32 %v1406, 0.0
        %v1439 = vmax.f32 %v1407, 0.0
        %v1440 = vmax.f32 %v1408, 0.0
        %v1441 = vmax.f32 %v1409, 0.0
        %v1442 = vmax.f32 %v1410, 0.0
        %v1443 = vmax.f32 %v1411, 0.0
        %v1444 = vmax.f32 %v1412, 0.0
        %v1445 = vmax.f32 %v1413, 0.0
        %v1446 = vmax.f32 %v1414, 0.0
        %v1447 = vmin.f32 %v1415, 6.0
        %v1448 = vmin.f32 %v1416, 6.0
        %v1449 = vmin.f32 %v1417, 6.0
        %v1450 = vmin.f32 %v1418, 6.0
        %v1451 = vmin.f32 %v1419, 6.0
        %v1452 = vmin.f32 %v1420, 6.0
        %v1453 = vmin.f32 %v1421, 6.0
        %v1454 = vmin.f32 %v1422, 6.0
        %v1455 = vmin.f32 %v1423, 6.0
        %v1456 = vmin.f32 %v1424, 6.0
        %v1457 = vmin.f32 %v1425, 6.0
        %v1458 = vmin.f32 %v1426, 6.0
        %v1459 = vmin.f32 %v1427, 6.0
        %v1460 = vmin.f32 %v1428, 6.0
        %v1461 = vmin.f32 %v1429, 6.0
        %v1462 = vmin.f32 %v1430, 6.0
        %v1463 = vmin.f32 %v1431, 6.0
        %v1464 = vmin.f32 %v1432, 6.0
        %v1465 = vmin.f32 %v1433, 6.0
        %v1466 = vmin.f32 %v1434, 6.0
        %v1467 = vmin.f32 %v1435, 6.0
        %v1468 = vmin.f32 %v1436, 6.0
        %v1469 = vmin.f32 %v1437, 6.0
        %v1470 = vmin.f32 %v1438, 6.0
        %v1471 = vmin.f32 %v1439, 6.0
        %v1472 = vmin.f32 %v1440, 6.0
        %v1473 = vmin.f32 %v1441, 6.0
        %v1474 = vmin.f32 %v1442, 6.0
        %v1475 = vmin.f32 %v1443, 6.0
        %v1476 = vmin.f32 %v1444, 6.0
        %v1477 = vmin.f32 %v1445, 6.0
        %v1478 = vmin.f32 %v1446, 6.0
        %v1479 = vpack.c.bf16 %v1448, %v1447
        %v1480 = vpack.c.bf16 %v1450, %v1449
        %v1481 = vpack.c.bf16 %v1452, %v1451
        %v1482 = vpack.c.bf16 %v1454, %v1453
        %v1483 = vpack.c.bf16 %v1456, %v1455
        %v1484 = vpack.c.bf16 %v1458, %v1457
        %v1485 = vpack.c.bf16 %v1460, %v1459
        %v1486 = vpack.c.bf16 %v1462, %v1461
        %v1487 = vpack.c.bf16 %v1464, %v1463
        %v1488 = vpack.c.bf16 %v1466, %v1465
        %v1489 = vpack.c.bf16 %v1468, %v1467
        %v1490 = vpack.c.bf16 %v1470, %v1469
        %v1491 = vpack.c.bf16 %v1472, %v1471
        %v1492 = vpack.c.bf16 %v1474, %v1473
        %v1493 = vpack.c.bf16 %v1476, %v1475
        %v1494 = vpack.c.bf16 %v1478, %v1477
        %v1495 = vld [vmem:[%s3] sm:$0xf]
        %v1496 = vld [vmem:[%s3 + $0x4] sm:$0xf]
        %v1497 = vld [vmem:[%s3 + $0x8] sm:$0xf]
        %v1498 = vld [vmem:[%s3 + $0xc] sm:$0xf]
        %v1499 = vld [vmem:[%s4] sm:$0x1]
        %v1501 = vlaneseq
        %v1502 = vshrl.u32 %v1501, 7
        %v1503 = vsub.s32 0, %v1502
        %v1504 = vrot.slane %v1499, %v1503
        %v1510 = vunpack.c.l.b16 %v1495
        %v1511 = vunpack.c.l.b16 %v1496
        %v1512 = vunpack.c.l.b16 %v1497
        %v1513 = vunpack.c.l.b16 %v1498
        %v1514 = vpack.c.b16 %v1511, %v1510
        %v1515 = vpack.c.b16 %v1513, %v1512
        %v1519 = vsel %vm352, %v1479, 0
        %v1522 = vsel %vm352, %v1480, 0
        %v1525 = vsel %vm352, %v1481, 0
        %v1528 = vsel %vm352, %v1482, 0
        %v1531 = vsel %vm352, %v1483, 0
        %v1534 = vsel %vm352, %v1484, 0
        %v1537 = vsel %vm352, %v1485, 0
        %v1540 = vsel %vm352, %v1486, 0
        %v1543 = vsel %vm352, %v1487, 0
        %v1546 = vsel %vm352, %v1488, 0
        %v1549 = vsel %vm352, %v1489, 0
        %v1552 = vsel %vm352, %v1490, 0
        %v1555 = vsel %vm352, %v1491, 0
        %v1558 = vsel %vm352, %v1492, 0
        %v1561 = vsel %vm352, %v1493, 0
        %v1564 = vsel %vm352, %v1494, 0
        %1566 = vmatprep.subr.bf16.mxu0 0
        %1567 = vmatpush1.bf16.msra.mxu0 %v1514
        %1568 = vmatprep.subr.bf16.mxu0 0
        %1569 = vmatpush1.bf16.msra.mxu0 %v1515
        %1570 = vmatprep.subr.bf16.mxu0 0
        %1571 = vmatpush1.bf16.msra.mxu0 0
        %1572 = vmatprep.subr.bf16.mxu0 0
        %1573 = vmatpush1.bf16.msra.mxu0 0
        %1574 = vmatprep.subr.bf16.mxu0 0
        %1575 = vmatpush1.bf16.msra.mxu0 0
        %1576 = vmatprep.subr.bf16.mxu0 0
        %1577 = vmatpush1.bf16.msra.mxu0 0
        %1578 = vmatprep.subr.bf16.mxu0 0
        %1579 = vmatpush1.bf16.msra.mxu0 0
        %1580 = vmatprep.subr.bf16.mxu0 0
        %1581 = vmatpush1.bf16.msra.mxu0 0
        %1582 = vmatprep.subr.bf16.mxu0 0
        %1583 = vmatpush1.bf16.msra.mxu0 0
        %1584 = vmatprep.subr.bf16.mxu0 0
        %1585 = vmatpush1.bf16.msra.mxu0 0
        %1586 = vmatprep.subr.bf16.mxu0 0
        %1587 = vmatpush1.bf16.msra.mxu0 0
        %1588 = vmatprep.subr.bf16.mxu0 0
        %1589 = vmatpush1.bf16.msra.mxu0 0
        %1590 = vmatprep.subr.bf16.mxu0 0
        %1591 = vmatpush1.bf16.msra.mxu0 0
        %1592 = vmatprep.subr.bf16.mxu0 0
        %1593 = vmatpush1.bf16.msra.mxu0 0
        %1594 = vmatprep.subr.bf16.mxu0 0
        %1595 = vmatpush1.bf16.msra.mxu0 0
        %1596 = vmatprep.subr.bf16.mxu0 0
        %1597 = vmatpush1.bf16.msra.mxu0 0
        %1598 = vmatprep.mubr.bf16.mxu0 0
        %1599 = vmatmul.mubr.bf16.gmra.mrb[0].mxu0 %v1519
        %v1600 = vpop.f32.mrb[0].mxu0
        %v1601 = vadd.f32 %v1504, %v1600
        %v1602 = vpop.f32.mrb[0].mxu0
        %v1603 = vpop.f32.mrb[0].mxu0
        %v1604 = vadd.f32 %v1504, %v1603
        %v1605 = vpop.f32.mrb[0].mxu0
        %1606 = vmatprep.mubr.bf16.mxu0 0
        %1607 = vmatmul.mubr.bf16.gmra.mrb[0].mxu0 %v1522
        %v1608 = vpop.f32.mrb[0].mxu0
        %v1609 = vadd.f32 %v1504, %v1608
        %v1610 = vpop.f32.mrb[0].mxu0
        %v1611 = vpop.f32.mrb[0].mxu0
        %v1612 = vadd.f32 %v1504, %v1611
        %v1613 = vpop.f32.mrb[0].mxu0
        %1614 = vmatprep.mubr.bf16.mxu0 0
        %1615 = vmatmul.mubr.bf16.gmra.mrb[0].mxu0 %v1525
        %v1616 = vpop.f32.mrb[0].mxu0
        %v1617 = vadd.f32 %v1504, %v1616
        %v1618 = vpop.f32.mrb[0].mxu0
        %v1619 = vpop.f32.mrb[0].mxu0
        %v1620 = vadd.f32 %v1504, %v1619
        %v1621 = vpop.f32.mrb[0].mxu0
        %1622 = vmatprep.mubr.bf16.mxu0 0
        %1623 = vmatmul.mubr.bf16.gmra.mrb[0].mxu0 %v1528
        %v1624 = vpop.f32.mrb[0].mxu0
        %v1625 = vadd.f32 %v1504, %v1624
        %v1626 = vpop.f32.mrb[0].mxu0
        %v1627 = vpop.f32.mrb[0].mxu0
        %v1628 = vadd.f32 %v1504, %v1627
        %v1629 = vpop.f32.mrb[0].mxu0
        %1630 = vmatprep.mubr.bf16.mxu0 0
        %1631 = vmatmul.mubr.bf16.gmra.mrb[0].mxu0 %v1531
        %v1632 = vpop.f32.mrb[0].mxu0
        %v1633 = vadd.f32 %v1504, %v1632
        %v1634 = vpop.f32.mrb[0].mxu0
        %v1635 = vpop.f32.mrb[0].mxu0
        %v1636 = vadd.f32 %v1504, %v1635
        %v1637 = vpop.f32.mrb[0].mxu0
        %1638 = vmatprep.mubr.bf16.mxu0 0
        %1639 = vmatmul.mubr.bf16.gmra.mrb[0].mxu0 %v1534
        %v1640 = vpop.f32.mrb[0].mxu0
        %v1641 = vadd.f32 %v1504, %v1640
        %v1642 = vpop.f32.mrb[0].mxu0
        %v1643 = vpop.f32.mrb[0].mxu0
        %v1644 = vadd.f32 %v1504, %v1643
        %v1645 = vpop.f32.mrb[0].mxu0
        %1646 = vmatprep.mubr.bf16.mxu0 0
        %1647 = vmatmul.mubr.bf16.gmra.mrb[0].mxu0 %v1537
        %v1648 = vpop.f32.mrb[0].mxu0
        %v1649 = vadd.f32 %v1504, %v1648
        %v1650 = vpop.f32.mrb[0].mxu0
        %v1651 = vpop.f32.mrb[0].mxu0
        %v1652 = vadd.f32 %v1504, %v1651
        %v1653 = vpop.f32.mrb[0].mxu0
        %1654 = vmatprep.mubr.bf16.mxu0 0
        %1655 = vmatmul.mubr.bf16.gmra.mrb[0].mxu0 %v1540
        %v1656 = vpop.f32.mrb[0].mxu0
        %v1657 = vadd.f32 %v1504, %v1656
        %v1658 = vpop.f32.mrb[0].mxu0
        %v1659 = vpop.f32.mrb[0].mxu0
        %v1660 = vadd.f32 %v1504, %v1659
        %v1661 = vpop.f32.mrb[0].mxu0
        %1662 = vmatprep.mubr.bf16.mxu0 0
        %1663 = vmatmul.mubr.bf16.gmra.mrb[0].mxu0 %v1543
        %v1664 = vpop.f32.mrb[0].mxu0
        %v1665 = vadd.f32 %v1504, %v1664
        %v1666 = vpop.f32.mrb[0].mxu0
        %v1667 = vpop.f32.mrb[0].mxu0
        %v1668 = vadd.f32 %v1504, %v1667
        %v1669 = vpop.f32.mrb[0].mxu0
        %1670 = vmatprep.mubr.bf16.mxu0 0
        %1671 = vmatmul.mubr.bf16.gmra.mrb[0].mxu0 %v1546
        %v1672 = vpop.f32.mrb[0].mxu0
        %v1673 = vadd.f32 %v1504, %v1672
        %v1674 = vpop.f32.mrb[0].mxu0
        %v1675 = vpop.f32.mrb[0].mxu0
        %v1676 = vadd.f32 %v1504, %v1675
        %v1677 = vpop.f32.mrb[0].mxu0
        %1678 = vmatprep.mubr.bf16.mxu0 0
        %1679 = vmatmul.mubr.bf16.gmra.mrb[0].mxu0 %v1549
        %v1680 = vpop.f32.mrb[0].mxu0
        %v1681 = vadd.f32 %v1504, %v1680
        %v1682 = vpop.f32.mrb[0].mxu0
        %v1683 = vpop.f32.mrb[0].mxu0
        %v1684 = vadd.f32 %v1504, %v1683
        %v1685 = vpop.f32.mrb[0].mxu0
        %1686 = vmatprep.mubr.bf16.mxu0 0
        %1687 = vmatmul.mubr.bf16.gmra.mrb[0].mxu0 %v1552
        %v1688 = vpop.f32.mrb[0].mxu0
        %v1689 = vadd.f32 %v1504, %v1688
        %v1690 = vpop.f32.mrb[0].mxu0
        %v1691 = vpop.f32.mrb[0].mxu0
        %v1692 = vadd.f32 %v1504, %v1691
        %v1693 = vpop.f32.mrb[0].mxu0
        %1694 = vmatprep.mubr.bf16.mxu0 0
        %1695 = vmatmul.mubr.bf16.gmra.mrb[0].mxu0 %v1555
        %v1696 = vpop.f32.mrb[0].mxu0
        %v1697 = vadd.f32 %v1504, %v1696
        %v1698 = vpop.f32.mrb[0].mxu0
        %v1699 = vpop.f32.mrb[0].mxu0
        %v1700 = vadd.f32 %v1504, %v1699
        %v1701 = vpop.f32.mrb[0].mxu0
        %1702 = vmatprep.mubr.bf16.mxu0 0
        %1703 = vmatmul.mubr.bf16.gmra.mrb[0].mxu0 %v1558
        %v1704 = vpop.f32.mrb[0].mxu0
        %v1705 = vadd.f32 %v1504, %v1704
        %v1706 = vpop.f32.mrb[0].mxu0
        %v1707 = vpop.f32.mrb[0].mxu0
        %v1708 = vadd.f32 %v1504, %v1707
        %v1709 = vpop.f32.mrb[0].mxu0
        %1710 = vmatprep.mubr.bf16.mxu0 0
        %1711 = vmatmul.mubr.bf16.gmra.mrb[0].mxu0 %v1561
        %v1712 = vpop.f32.mrb[0].mxu0
        %v1713 = vadd.f32 %v1504, %v1712
        %v1714 = vpop.f32.mrb[0].mxu0
        %v1715 = vpop.f32.mrb[0].mxu0
        %v1716 = vadd.f32 %v1504, %v1715
        %v1717 = vpop.f32.mrb[0].mxu0
        %1718 = vmatprep.mubr.bf16.mxu0 0
        %1719 = vmatmul.mubr.bf16.gmra.mrb[0].mxu0 %v1564
        %v1720 = vpop.f32.mrb[0].mxu0
        %v1721 = vadd.f32 %v1504, %v1720
        %v1722 = vpop.f32.mrb[0].mxu0
        %v1723 = vpop.f32.mrb[0].mxu0
        %v1724 = vadd.f32 %v1504, %v1723
        %v1725 = vpop.f32.mrb[0].mxu0
        %1726 = vdwg.mxu0
        %v1727 = vpack.c.bf16 %v1604, %v1601
        %v1728 = vpack.c.bf16 %v1612, %v1609
        %v1729 = vpack.c.bf16 %v1620, %v1617
        %v1730 = vpack.c.bf16 %v1628, %v1625
        %v1731 = vpack.c.bf16 %v1636, %v1633
        %v1732 = vpack.c.bf16 %v1644, %v1641
        %v1733 = vpack.c.bf16 %v1652, %v1649
        %v1734 = vpack.c.bf16 %v1660, %v1657
        %v1735 = vpack.c.bf16 %v1668, %v1665
        %v1736 = vpack.c.bf16 %v1676, %v1673
        %v1737 = vpack.c.bf16 %v1684, %v1681
        %v1738 = vpack.c.bf16 %v1692, %v1689
        %v1739 = vpack.c.bf16 %v1700, %v1697
        %v1740 = vpack.c.bf16 %v1708, %v1705
        %v1741 = vpack.c.bf16 %v1716, %v1713
        %v1742 = vpack.c.bf16 %v1724, %v1721
        %v1743 = vld [vmem:[%s5] sm:$0xf]
        %v1744 = vld [vmem:[%s5 + $0x4] sm:$0xf]
        %v1745 = vld [vmem:[%s6] sm:$0x1]
        %v1747 = vlaneseq
        %v1748 = vshrl.u32 %v1747, 7
        %v1749 = vsub.s32 0, %v1748
        %v1750 = vrot.slane %v1745, %v1749
        %v1754 = vunpack.c.l.b16 %v1743
        %v1755 = vunpack.c.l.b16 %v1744
        %v1756 = vpack.c.b16 %v1755, %v1754
        %vm1758 = vcmask 130048
        %v1760 = vsel %vm1758, %v1727, 0
        %v1763 = vsel %vm1758, %v1728, 0
        %v1766 = vsel %vm1758, %v1729, 0
        %v1769 = vsel %vm1758, %v1730, 0
        %v1772 = vsel %vm1758, %v1731, 0
        %v1775 = vsel %vm1758, %v1732, 0
        %v1778 = vsel %vm1758, %v1733, 0
        %v1781 = vsel %vm1758, %v1734, 0
        %v1784 = vsel %vm1758, %v1735, 0
        %v1787 = vsel %vm1758, %v1736, 0
        %v1790 = vsel %vm1758, %v1737, 0
        %v1793 = vsel %vm1758, %v1738, 0
        %v1796 = vsel %vm1758, %v1739, 0
        %v1799 = vsel %vm1758, %v1740, 0
        %v1802 = vsel %vm1758, %v1741, 0
        %v1805 = vsel %vm1758, %v1742, 0
        %1807 = vmatprep.subr.bf16.mxu0 0
        %1808 = vmatpush1.bf16.msra.mxu0 %v1756
        %1809 = vmatprep.subr.bf16.mxu0 0
        %1810 = vmatpush1.bf16.msra.mxu0 0
        %1811 = vmatprep.subr.bf16.mxu0 0
        %1812 = vmatpush1.bf16.msra.mxu0 0
        %1813 = vmatprep.subr.bf16.mxu0 0
        %1814 = vmatpush1.bf16.msra.mxu0 0
        %1815 = vmatprep.subr.bf16.mxu0 0
        %1816 = vmatpush1.bf16.msra.mxu0 0
        %1817 = vmatprep.subr.bf16.mxu0 0
        %1818 = vmatpush1.bf16.msra.mxu0 0
        %1819 = vmatprep.subr.bf16.mxu0 0
        %1820 = vmatpush1.bf16.msra.mxu0 0
        %1821 = vmatprep.subr.bf16.mxu0 0
        %1822 = vmatpush1.bf16.msra.mxu0 0
        %1823 = vmatprep.subr.bf16.mxu0 0
        %1824 = vmatpush1.bf16.msra.mxu0 0
        %1825 = vmatprep.subr.bf16.mxu0 0
        %1826 = vmatpush1.bf16.msra.mxu0 0
        %1827 = vmatprep.subr.bf16.mxu0 0
        %1828 = vmatpush1.bf16.msra.mxu0 0
        %1829 = vmatprep.subr.bf16.mxu0 0
        %1830 = vmatpush1.bf16.msra.mxu0 0
        %1831 = vmatprep.subr.bf16.mxu0 0
        %1832 = vmatpush1.bf16.msra.mxu0 0
        %1833 = vmatprep.subr.bf16.mxu0 0
        %1834 = vmatpush1.bf16.msra.mxu0 0
        %1835 = vmatprep.subr.bf16.mxu0 0
        %1836 = vmatpush1.bf16.msra.mxu0 0
        %1837 = vmatprep.subr.bf16.mxu0 0
        %1838 = vmatpush1.bf16.msra.mxu0 0
        %1839 = vmatprep.mubr.bf16.mxu0 0
        %1840 = vmatmul.mubr.bf16.gmra.mrb[0].mxu0 %v1760
        %v1841 = vpop.f32.mrb[0].mxu0
        %v1842 = vadd.f32 %v1750, %v1841
        %v1843 = vpop.f32.mrb[0].mxu0
        %v1844 = vpop.f32.mrb[0].mxu0
        %v1845 = vadd.f32 %v1750, %v1844
        %v1846 = vpop.f32.mrb[0].mxu0
        %1847 = vmatprep.mubr.bf16.mxu0 0
        %1848 = vmatmul.mubr.bf16.gmra.mrb[0].mxu0 %v1763
        %v1849 = vpop.f32.mrb[0].mxu0
        %v1850 = vadd.f32 %v1750, %v1849
        %v1851 = vpop.f32.mrb[0].mxu0
        %v1852 = vpop.f32.mrb[0].mxu0
        %v1853 = vadd.f32 %v1750, %v1852
        %v1854 = vpop.f32.mrb[0].mxu0
        %1855 = vmatprep.mubr.bf16.mxu0 0
        %1856 = vmatmul.mubr.bf16.gmra.mrb[0].mxu0 %v1766
        %v1857 = vpop.f32.mrb[0].mxu0
        %v1858 = vadd.f32 %v1750, %v1857
        %v1859 = vpop.f32.mrb[0].mxu0
        %v1860 = vpop.f32.mrb[0].mxu0
        %v1861 = vadd.f32 %v1750, %v1860
        %v1862 = vpop.f32.mrb[0].mxu0
        %1863 = vmatprep.mubr.bf16.mxu0 0
        %1864 = vmatmul.mubr.bf16.gmra.mrb[0].mxu0 %v1769
        %v1865 = vpop.f32.mrb[0].mxu0
        %v1866 = vadd.f32 %v1750, %v1865
        %v1867 = vpop.f32.mrb[0].mxu0
        %v1868 = vpop.f32.mrb[0].mxu0
        %v1869 = vadd.f32 %v1750, %v1868
        %v1870 = vpop.f32.mrb[0].mxu0
        %1871 = vmatprep.mubr.bf16.mxu0 0
        %1872 = vmatmul.mubr.bf16.gmra.mrb[0].mxu0 %v1772
        %v1873 = vpop.f32.mrb[0].mxu0
        %v1874 = vadd.f32 %v1750, %v1873
        %v1875 = vpop.f32.mrb[0].mxu0
        %v1876 = vpop.f32.mrb[0].mxu0
        %v1877 = vadd.f32 %v1750, %v1876
        %v1878 = vpop.f32.mrb[0].mxu0
        %1879 = vmatprep.mubr.bf16.mxu0 0
        %1880 = vmatmul.mubr.bf16.gmra.mrb[0].mxu0 %v1775
        %v1881 = vpop.f32.mrb[0].mxu0
        %v1882 = vadd.f32 %v1750, %v1881
        %v1883 = vpop.f32.mrb[0].mxu0
        %v1884 = vpop.f32.mrb[0].mxu0
        %v1885 = vadd.f32 %v1750, %v1884
        %v1886 = vpop.f32.mrb[0].mxu0
        %1887 = vmatprep.mubr.bf16.mxu0 0
        %1888 = vmatmul.mubr.bf16.gmra.mrb[0].mxu0 %v1778
        %v1889 = vpop.f32.mrb[0].mxu0
        %v1890 = vadd.f32 %v1750, %v1889
        %v1891 = vpop.f32.mrb[0].mxu0
        %v1892 = vpop.f32.mrb[0].mxu0
        %v1893 = vadd.f32 %v1750, %v1892
        %v1894 = vpop.f32.mrb[0].mxu0
        %1895 = vmatprep.mubr.bf16.mxu0 0
        %1896 = vmatmul.mubr.bf16.gmra.mrb[0].mxu0 %v1781
        %v1897 = vpop.f32.mrb[0].mxu0
        %v1898 = vadd.f32 %v1750, %v1897
        %v1899 = vpop.f32.mrb[0].mxu0
        %v1900 = vpop.f32.mrb[0].mxu0
        %v1901 = vadd.f32 %v1750, %v1900
        %v1902 = vpop.f32.mrb[0].mxu0
        %1903 = vmatprep.mubr.bf16.mxu0 0
        %1904 = vmatmul.mubr.bf16.gmra.mrb[0].mxu0 %v1784
        %v1905 = vpop.f32.mrb[0].mxu0
        %v1906 = vadd.f32 %v1750, %v1905
        %v1907 = vpop.f32.mrb[0].mxu0
        %v1908 = vpop.f32.mrb[0].mxu0
        %v1909 = vadd.f32 %v1750, %v1908
        %v1910 = vpop.f32.mrb[0].mxu0
        %1911 = vmatprep.mubr.bf16.mxu0 0
        %1912 = vmatmul.mubr.bf16.gmra.mrb[0].mxu0 %v1787
        %v1913 = vpop.f32.mrb[0].mxu0
        %v1914 = vadd.f32 %v1750, %v1913
        %v1915 = vpop.f32.mrb[0].mxu0
        %v1916 = vpop.f32.mrb[0].mxu0
        %v1917 = vadd.f32 %v1750, %v1916
        %v1918 = vpop.f32.mrb[0].mxu0
        %1919 = vmatprep.mubr.bf16.mxu0 0
        %1920 = vmatmul.mubr.bf16.gmra.mrb[0].mxu0 %v1790
        %v1921 = vpop.f32.mrb[0].mxu0
        %v1922 = vadd.f32 %v1750, %v1921
        %v1923 = vpop.f32.mrb[0].mxu0
        %v1924 = vpop.f32.mrb[0].mxu0
        %v1925 = vadd.f32 %v1750, %v1924
        %v1926 = vpop.f32.mrb[0].mxu0
        %1927 = vmatprep.mubr.bf16.mxu0 0
        %1928 = vmatmul.mubr.bf16.gmra.mrb[0].mxu0 %v1793
        %v1929 = vpop.f32.mrb[0].mxu0
        %v1930 = vadd.f32 %v1750, %v1929
        %v1931 = vpop.f32.mrb[0].mxu0
        %v1932 = vpop.f32.mrb[0].mxu0
        %v1933 = vadd.f32 %v1750, %v1932
        %v1934 = vpop.f32.mrb[0].mxu0
        %1935 = vmatprep.mubr.bf16.mxu0 0
        %1936 = vmatmul.mubr.bf16.gmra.mrb[0].mxu0 %v1796
        %v1937 = vpop.f32.mrb[0].mxu0
        %v1938 = vadd.f32 %v1750, %v1937
        %v1939 = vpop.f32.mrb[0].mxu0
        %v1940 = vpop.f32.mrb[0].mxu0
        %v1941 = vadd.f32 %v1750, %v1940
        %v1942 = vpop.f32.mrb[0].mxu0
        %1943 = vmatprep.mubr.bf16.mxu0 0
        %1944 = vmatmul.mubr.bf16.gmra.mrb[0].mxu0 %v1799
        %v1945 = vpop.f32.mrb[0].mxu0
        %v1946 = vadd.f32 %v1750, %v1945
        %v1947 = vpop.f32.mrb[0].mxu0
        %v1948 = vpop.f32.mrb[0].mxu0
        %v1949 = vadd.f32 %v1750, %v1948
        %v1950 = vpop.f32.mrb[0].mxu0
        %1951 = vmatprep.mubr.bf16.mxu0 0
        %1952 = vmatmul.mubr.bf16.gmra.mrb[0].mxu0 %v1802
        %v1953 = vpop.f32.mrb[0].mxu0
        %v1954 = vadd.f32 %v1750, %v1953
        %v1955 = vpop.f32.mrb[0].mxu0
        %v1956 = vpop.f32.mrb[0].mxu0
        %v1957 = vadd.f32 %v1750, %v1956
        %v1958 = vpop.f32.mrb[0].mxu0
        %1959 = vmatprep.mubr.bf16.mxu0 0
        %1960 = vmatmul.mubr.bf16.gmra.mrb[0].mxu0 %v1805
        %v1961 = vpop.f32.mrb[0].mxu0
        %v1962 = vadd.f32 %v1750, %v1961
        %v1963 = vpop.f32.mrb[0].mxu0
        %v1964 = vpop.f32.mrb[0].mxu0
        %v1965 = vadd.f32 %v1750, %v1964
        %v1966 = vpop.f32.mrb[0].mxu0
        %1967 = vdwg.mxu0
        %v1968 = vmax.f32 %v1842, 0.0
        %v1969 = vmax.f32 %v1845, 0.0
        %v1970 = vmax.f32 %v1850, 0.0
        %v1971 = vmax.f32 %v1853, 0.0
        %v1972 = vmax.f32 %v1858, 0.0
        %v1973 = vmax.f32 %v1861, 0.0
        %v1974 = vmax.f32 %v1866, 0.0
        %v1975 = vmax.f32 %v1869, 0.0
        %v1976 = vmax.f32 %v1874, 0.0
        %v1977 = vmax.f32 %v1877, 0.0
        %v1978 = vmax.f32 %v1882, 0.0
        %v1979 = vmax.f32 %v1885, 0.0
        %v1980 = vmax.f32 %v1890, 0.0
        %v1981 = vmax.f32 %v1893, 0.0
        %v1982 = vmax.f32 %v1898, 0.0
        %v1983 = vmax.f32 %v1901, 0.0
        %v1984 = vmax.f32 %v1906, 0.0
        %v1985 = vmax.f32 %v1909, 0.0
        %v1986 = vmax.f32 %v1914, 0.0
        %v1987 = vmax.f32 %v1917, 0.0
        %v1988 = vmax.f32 %v1922, 0.0
        %v1989 = vmax.f32 %v1925, 0.0
        %v1990 = vmax.f32 %v1930, 0.0
        %v1991 = vmax.f32 %v1933, 0.0
        %v1992 = vmax.f32 %v1938, 0.0
        %v1993 = vmax.f32 %v1941, 0.0
        %v1994 = vmax.f32 %v1946, 0.0
        %v1995 = vmax.f32 %v1949, 0.0
        %v1996 = vmax.f32 %v1954, 0.0
        %v1997 = vmax.f32 %v1957, 0.0
        %v1998 = vmax.f32 %v1962, 0.0
        %v1999 = vmax.f32 %v1965, 0.0
        %v2000 = vmin.f32 %v1968, 6.0
        %v2001 = vmin.f32 %v1969, 6.0
        %v2002 = vmin.f32 %v1970, 6.0
        %v2003 = vmin.f32 %v1971, 6.0
        %v2004 = vmin.f32 %v1972, 6.0
        %v2005 = vmin.f32 %v1973, 6.0
        %v2006 = vmin.f32 %v1974, 6.0
        %v2007 = vmin.f32 %v1975, 6.0
        %v2008 = vmin.f32 %v1976, 6.0
        %v2009 = vmin.f32 %v1977, 6.0
        %v2010 = vmin.f32 %v1978, 6.0
        %v2011 = vmin.f32 %v1979, 6.0
        %v2012 = vmin.f32 %v1980, 6.0
        %v2013 = vmin.f32 %v1981, 6.0
        %v2014 = vmin.f32 %v1982, 6.0
        %v2015 = vmin.f32 %v1983, 6.0
        %v2016 = vmin.f32 %v1984, 6.0
        %v2017 = vmin.f32 %v1985, 6.0
        %v2018 = vmin.f32 %v1986, 6.0
        %v2019 = vmin.f32 %v1987, 6.0
        %v2020 = vmin.f32 %v1988, 6.0
        %v2021 = vmin.f32 %v1989, 6.0
        %v2022 = vmin.f32 %v1990, 6.0
        %v2023 = vmin.f32 %v1991, 6.0
        %v2024 = vmin.f32 %v1992, 6.0
        %v2025 = vmin.f32 %v1993, 6.0
        %v2026 = vmin.f32 %v1994, 6.0
        %v2027 = vmin.f32 %v1995, 6.0
        %v2028 = vmin.f32 %v1996, 6.0
        %v2029 = vmin.f32 %v1997, 6.0
        %v2030 = vmin.f32 %v1998, 6.0
        %v2031 = vmin.f32 %v1999, 6.0
        %2032 = vst.msk [vmem:[#allocation3] sm:$0xff] %vm352, 0.0
        %2033 = vst.msk [vmem:[#allocation3 + $0x8] sm:$0xff] %vm352, 0.0
        %2034 = vst.msk [vmem:[#allocation3 + $0x10] sm:$0x3] %vm355, 0.0
        %2035 = vst.msk [vmem:[#allocation3 + $0x18] sm:$0xff] %vm352, 0.0
        %2036 = vst.msk [vmem:[#allocation3 + $0x20] sm:$0xff] %vm352, 0.0
        %2037 = vst.msk [vmem:[#allocation3 + $0x28] sm:$0x3] %vm355, 0.0
        %2038 = vst.msk [vmem:[#allocation3 + $0x30] sm:$0xff] %vm352, 0.0
        %2039 = vst.msk [vmem:[#allocation3 + $0x38] sm:$0xff] %vm352, 0.0
        %2040 = vst.msk [vmem:[#allocation3 + $0x40] sm:$0x3] %vm355, 0.0
        %2041 = vst.msk [vmem:[#allocation3 + $0x48] sm:$0xff] %vm352, 0.0
        %2042 = vst.msk [vmem:[#allocation3 + $0x50] sm:$0xff] %vm352, 0.0
        %2043 = vst.msk [vmem:[#allocation3 + $0x58] sm:$0x3] %vm355, 0.0
        %2044 = vst.msk [vmem:[#allocation3 + $0x60] sm:$0xff] %vm352, 0.0
        %2045 = vst.msk [vmem:[#allocation3 + $0x68] sm:$0xff] %vm352, 0.0
        %2046 = vst.msk [vmem:[#allocation3 + $0x70] sm:$0x3] %vm355, 0.0
        %2047 = vst.msk [vmem:[#allocation3 + $0x78] sm:$0xff] %vm352, 0.0
        %2048 = vst.msk [vmem:[#allocation3 + $0x80] sm:$0xff] %vm352, 0.0
        %2049 = vst.msk [vmem:[#allocation3 + $0x88] sm:$0x3] %vm355, 0.0
        %2050 = vst.msk [vmem:[#allocation3 + $0x90] sm:$0xff] %vm352, 0.0
        %2051 = vst.msk [vmem:[#allocation3 + $0x98] sm:$0xff] %vm352, 0.0
        %2052 = vst.msk [vmem:[#allocation3 + $0xa0] sm:$0x3] %vm355, 0.0
        %2053 = vst.msk [vmem:[#allocation3 + $0xa8] sm:$0xff] %vm352, 0.0
        %2054 = vst.msk [vmem:[#allocation3 + $0xb0] sm:$0xff] %vm352, 0.0
        %2055 = vst.msk [vmem:[#allocation3 + $0xb8] sm:$0x3] %vm355, 0.0
        %2056 = vst.msk [vmem:[#allocation3 + $0xc0] sm:$0xff] %vm352, 0.0
        %2057 = vst.msk [vmem:[#allocation3 + $0xc8] sm:$0xff] %vm352, 0.0
        %2058 = vst.msk [vmem:[#allocation3 + $0xd0] sm:$0x3] %vm355, 0.0
        %2059 = vst.msk [vmem:[#allocation3 + $0xd8] sm:$0xff] %vm352, 0.0
        %2060 = vst.msk [vmem:[#allocation3 + $0xe0] sm:$0xff] %vm352, 0.0
        %2061 = vst.msk [vmem:[#allocation3 + $0xe8] sm:$0x3] %vm355, 0.0
        %2062 = vst.msk [vmem:[#allocation3 + $0xf0] sm:$0xff] %vm352, 0.0
        %2063 = vst.msk [vmem:[#allocation3 + $0xf8] sm:$0xff] %vm352, 0.0
        %2064 = vst.msk [vmem:[#allocation3 + $0x100] sm:$0x3] %vm355, 0.0
        %2065 = vst.msk [vmem:[#allocation3 + $0x108] sm:$0xff] %vm352, 0.0
        %2066 = vst.msk [vmem:[#allocation3 + $0x110] sm:$0xff] %vm352, 0.0
        %2067 = vst.msk [vmem:[#allocation3 + $0x118] sm:$0x3] %vm355, 0.0
        %2068 = vst.msk [vmem:[#allocation3 + $0x120] sm:$0xff] %vm352, 0.0
        %2069 = vst.msk [vmem:[#allocation3 + $0x128] sm:$0xff] %vm352, 0.0
        %2070 = vst.msk [vmem:[#allocation3 + $0x130] sm:$0x3] %vm355, 0.0
        %2071 = vst.msk [vmem:[#allocation3 + $0x138] sm:$0xff] %vm352, 0.0
        %2072 = vst.msk [vmem:[#allocation3 + $0x140] sm:$0xff] %vm352, 0.0
        %2073 = vst.msk [vmem:[#allocation3 + $0x148] sm:$0x3] %vm355, 0.0
        %2074 = vst.msk [vmem:[#allocation3 + $0x150] sm:$0xff] %vm352, 0.0
        %2075 = vst.msk [vmem:[#allocation3 + $0x158] sm:$0xff] %vm352, 0.0
        %2076 = vst.msk [vmem:[#allocation3 + $0x160] sm:$0x3] %vm355, 0.0
        %2077 = vst.msk [vmem:[#allocation3 + $0x168] sm:$0xff] %vm352, 0.0
        %2078 = vst.msk [vmem:[#allocation3 + $0x170] sm:$0xff] %vm352, 0.0
        %2079 = vst.msk [vmem:[#allocation3 + $0x178] sm:$0x3] %vm355, 0.0
        %2080 = vst.msk [vmem:[#allocation3 + $0x180] sm:$0xff] %vm352, 0.0
        %2081 = vst.msk [vmem:[#allocation3 + $0x188] sm:$0xff] %vm352, 0.0
        %2082 = vst.msk [vmem:[#allocation3 + $0x190] sm:$0x3] %vm355, 0.0
        %2083 = vst.msk [vmem:[#allocation3 + $0x198] sm:$0xff] %vm352, 0.0
        %2084 = vst.msk [vmem:[#allocation3 + $0x1a0] sm:$0xff] %vm352, 0.0
        %2085 = vst.msk [vmem:[#allocation3 + $0x1a8] sm:$0x3] %vm355, 0.0
        %s2086 = scalar_lea.vmem [#allocation3], 24
        %2087 = vst.msk [vmem:[%s2086 + $0x1] sm:$0xff] %vm352, %v2000
        %2088 = vst.msk [vmem:[%s2086 + $0x9] sm:$0xff] %vm352, %v2001
        %2089 = vst.msk [vmem:[%s2086 + $0x19] sm:$0xff] %vm352, %v2002
        %2090 = vst.msk [vmem:[%s2086 + $0x21] sm:$0xff] %vm352, %v2003
        %2091 = vst.msk [vmem:[%s2086 + $0x31] sm:$0xff] %vm352, %v2004
        %2092 = vst.msk [vmem:[%s2086 + $0x39] sm:$0xff] %vm352, %v2005
        %2093 = vst.msk [vmem:[%s2086 + $0x49] sm:$0xff] %vm352, %v2006
        %2094 = vst.msk [vmem:[%s2086 + $0x51] sm:$0xff] %vm352, %v2007
        %2095 = vst.msk [vmem:[%s2086 + $0x61] sm:$0xff] %vm352, %v2008
        %2096 = vst.msk [vmem:[%s2086 + $0x69] sm:$0xff] %vm352, %v2009
        %2097 = vst.msk [vmem:[%s2086 + $0x79] sm:$0xff] %vm352, %v2010
        %2098 = vst.msk [vmem:[%s2086 + $0x81] sm:$0xff] %vm352, %v2011
        %2099 = vst.msk [vmem:[%s2086 + $0x91] sm:$0xff] %vm352, %v2012
        %2100 = vst.msk [vmem:[%s2086 + $0x99] sm:$0xff] %vm352, %v2013
        %2101 = vst.msk [vmem:[%s2086 + $0xa9] sm:$0xff] %vm352, %v2014
        %2102 = vst.msk [vmem:[%s2086 + $0xb1] sm:$0xff] %vm352, %v2015
        %2103 = vst.msk [vmem:[%s2086 + $0xc1] sm:$0xff] %vm352, %v2016
        %2104 = vst.msk [vmem:[%s2086 + $0xc9] sm:$0xff] %vm352, %v2017
        %2105 = vst.msk [vmem:[%s2086 + $0xd9] sm:$0xff] %vm352, %v2018
        %2106 = vst.msk [vmem:[%s2086 + $0xe1] sm:$0xff] %vm352, %v2019
        %2107 = vst.msk [vmem:[%s2086 + $0xf1] sm:$0xff] %vm352, %v2020
        %2108 = vst.msk [vmem:[%s2086 + $0xf9] sm:$0xff] %vm352, %v2021
        %2109 = vst.msk [vmem:[%s2086 + $0x109] sm:$0xff] %vm352, %v2022
        %2110 = vst.msk [vmem:[%s2086 + $0x111] sm:$0xff] %vm352, %v2023
        %2111 = vst.msk [vmem:[%s2086 + $0x121] sm:$0xff] %vm352, %v2024
        %2112 = vst.msk [vmem:[%s2086 + $0x129] sm:$0xff] %vm352, %v2025
        %2113 = vst.msk [vmem:[%s2086 + $0x139] sm:$0xff] %vm352, %v2026
        %2114 = vst.msk [vmem:[%s2086 + $0x141] sm:$0xff] %vm352, %v2027
        %2115 = vst.msk [vmem:[%s2086 + $0x151] sm:$0xff] %vm352, %v2028
        %2116 = vst.msk [vmem:[%s2086 + $0x159] sm:$0xff] %vm352, %v2029
        %2117 = vst.msk [vmem:[%s2086 + $0x169] sm:$0xff] %vm352, %v2030
        %2118 = vst.msk [vmem:[%s2086 + $0x171] sm:$0xff] %vm352, %v2031
        %v2119 = vld [vmem:[%s7] sm:$0xff]
        %v2120 = vld [vmem:[%s7 + $0x8] sm:$0x1]
        %v2121 = vld [vmem:[#allocation3] sm:$0xff]
        %v2122 = vld [vmem:[#allocation3 + $0x8] sm:$0xff]
        %v2123 = vld [vmem:[#allocation3 + $0x18] sm:$0xff]
        %v2124 = vld [vmem:[#allocation3 + $0x20] sm:$0xff]
        %v2125 = vld [vmem:[#allocation3 + $0x30] sm:$0xff]
        %v2126 = vld [vmem:[#allocation3 + $0x38] sm:$0xff]
        %v2127 = vld [vmem:[#allocation3 + $0x48] sm:$0xff]
        %v2128 = vld [vmem:[#allocation3 + $0x50] sm:$0xff]
        %v2129 = vld [vmem:[#allocation3 + $0x60] sm:$0xff]
        %v2130 = vld [vmem:[#allocation3 + $0x68] sm:$0xff]
        %v2131 = vld [vmem:[#allocation3 + $0x78] sm:$0xff]
        %v2132 = vld [vmem:[#allocation3 + $0x80] sm:$0xff]
        %v2133 = vld [vmem:[#allocation3 + $0x90] sm:$0xff]
        %v2134 = vld [vmem:[#allocation3 + $0x98] sm:$0xff]
        %v2135 = vld [vmem:[#allocation3 + $0xa8] sm:$0xff]
        %v2136 = vld [vmem:[#allocation3 + $0xb0] sm:$0xff]
        %v2137 = vld [vmem:[#allocation3 + $0xc0] sm:$0xff]
        %v2138 = vld [vmem:[#allocation3 + $0xc8] sm:$0xff]
        %v2139 = vld [vmem:[#allocation3 + $0xd8] sm:$0xff]
        %v2140 = vld [vmem:[#allocation3 + $0xe0] sm:$0xff]
        %v2141 = vld [vmem:[#allocation3 + $0xf0] sm:$0xff]
        %v2142 = vld [vmem:[#allocation3 + $0xf8] sm:$0xff]
        %v2143 = vld [vmem:[#allocation3 + $0x108] sm:$0xff]
        %v2144 = vld [vmem:[#allocation3 + $0x110] sm:$0xff]
        %v2145 = vld [vmem:[#allocation3 + $0x120] sm:$0xff]
        %v2146 = vld [vmem:[#allocation3 + $0x128] sm:$0xff]
        %v2147 = vld [vmem:[#allocation3 + $0x138] sm:$0xff]
        %v2148 = vld [vmem:[#allocation3 + $0x140] sm:$0xff]
        %v2149 = vld [vmem:[#allocation3 + $0x150] sm:$0xff]
        %v2150 = vld [vmem:[#allocation3 + $0x158] sm:$0xff]
        %v2151 = vld [vmem:[#allocation3 + $0x168] sm:$0xff]
        %v2152 = vld [vmem:[#allocation3 + $0x170] sm:$0xff]
        %v2153 = vlaneseq
        %v2154 = vshrl.u32 %v2153, 7
        %v2155 = vsub.s32 0, %v2154
        %v2156 = vrot.slane %v2119, %v2155
        %v2157 = vmul.f32 %v2156, %v2121
        %v2158 = vmul.f32 %v2156, %v2122
        %v2159 = vmul.f32 %v2156, %v2123
        %v2160 = vmul.f32 %v2156, %v2124
        %v2161 = vmul.f32 %v2156, %v2125
        %v2162 = vmul.f32 %v2156, %v2126
        %v2163 = vmul.f32 %v2156, %v2127
        %v2164 = vmul.f32 %v2156, %v2128
        %v2165 = vmul.f32 %v2156, %v2129
        %v2166 = vmul.f32 %v2156, %v2130
        %v2167 = vmul.f32 %v2156, %v2131
        %v2168 = vmul.f32 %v2156, %v2132
        %v2169 = vmul.f32 %v2156, %v2133
        %v2170 = vmul.f32 %v2156, %v2134
        %v2171 = vmul.f32 %v2156, %v2135
        %v2172 = vmul.f32 %v2156, %v2136
        %v2173 = vmul.f32 %v2156, %v2137
        %v2174 = vmul.f32 %v2156, %v2138
        %v2175 = vmul.f32 %v2156, %v2139
        %v2176 = vmul.f32 %v2156, %v2140
        %v2177 = vmul.f32 %v2156, %v2141
        %v2178 = vmul.f32 %v2156, %v2142
        %v2179 = vmul.f32 %v2156, %v2143
        %v2180 = vmul.f32 %v2156, %v2144
        %v2181 = vmul.f32 %v2156, %v2145
        %v2182 = vmul.f32 %v2156, %v2146
        %v2183 = vmul.f32 %v2156, %v2147
        %v2184 = vmul.f32 %v2156, %v2148
        %v2185 = vmul.f32 %v2156, %v2149
        %v2186 = vmul.f32 %v2156, %v2150
        %v2187 = vmul.f32 %v2156, %v2151
        %v2188 = vmul.f32 %v2156, %v2152
        %v2189 = vadd.f32 %v2157, 0.0
        %v2190 = vadd.f32 %v2158, 0.0
        %v2191 = vadd.f32 %v2159, 0.0
        %v2192 = vadd.f32 %v2160, 0.0
        %v2193 = vadd.f32 %v2161, 0.0
        %v2194 = vadd.f32 %v2162, 0.0
        %v2195 = vadd.f32 %v2163, 0.0
        %v2196 = vadd.f32 %v2164, 0.0
        %v2197 = vadd.f32 %v2165, 0.0
        %v2198 = vadd.f32 %v2166, 0.0
        %v2199 = vadd.f32 %v2167, 0.0
        %v2200 = vadd.f32 %v2168, 0.0
        %v2201 = vadd.f32 %v2169, 0.0
        %v2202 = vadd.f32 %v2170, 0.0
        %v2203 = vadd.f32 %v2171, 0.0
        %v2204 = vadd.f32 %v2172, 0.0
        %v2205 = vadd.f32 %v2173, 0.0
        %v2206 = vadd.f32 %v2174, 0.0
        %v2207 = vadd.f32 %v2175, 0.0
        %v2208 = vadd.f32 %v2176, 0.0
        %v2209 = vadd.f32 %v2177, 0.0
        %v2210 = vadd.f32 %v2178, 0.0
        %v2211 = vadd.f32 %v2179, 0.0
        %v2212 = vadd.f32 %v2180, 0.0
        %v2213 = vadd.f32 %v2181, 0.0
        %v2214 = vadd.f32 %v2182, 0.0
        %v2215 = vadd.f32 %v2183, 0.0
        %v2216 = vadd.f32 %v2184, 0.0
        %v2217 = vadd.f32 %v2185, 0.0
        %v2218 = vadd.f32 %v2186, 0.0
        %v2219 = vadd.f32 %v2187, 0.0
        %v2220 = vadd.f32 %v2188, 0.0
        %v2221 = vld [vmem:[#allocation3 + $0x1] sm:$0xff]
        %v2222 = vld [vmem:[#allocation3 + $0x9] sm:$0xff]
        %v2223 = vld [vmem:[#allocation3 + $0x19] sm:$0xff]
        %v2224 = vld [vmem:[#allocation3 + $0x21] sm:$0xff]
        %v2225 = vld [vmem:[#allocation3 + $0x31] sm:$0xff]
        %v2226 = vld [vmem:[#allocation3 + $0x39] sm:$0xff]
        %v2227 = vld [vmem:[#allocation3 + $0x49] sm:$0xff]
        %v2228 = vld [vmem:[#allocation3 + $0x51] sm:$0xff]
        %v2229 = vld [vmem:[#allocation3 + $0x61] sm:$0xff]
        %v2230 = vld [vmem:[#allocation3 + $0x69] sm:$0xff]
        %v2231 = vld [vmem:[#allocation3 + $0x79] sm:$0xff]
        %v2232 = vld [vmem:[#allocation3 + $0x81] sm:$0xff]
        %v2233 = vld [vmem:[#allocation3 + $0x91] sm:$0xff]
        %v2234 = vld [vmem:[#allocation3 + $0x99] sm:$0xff]
        %v2235 = vld [vmem:[#allocation3 + $0xa9] sm:$0xff]
        %v2236 = vld [vmem:[#allocation3 + $0xb1] sm:$0xff]
        %v2237 = vld [vmem:[#allocation3 + $0xc1] sm:$0xff]
        %v2238 = vld [vmem:[#allocation3 + $0xc9] sm:$0xff]
        %v2239 = vld [vmem:[#allocation3 + $0xd9] sm:$0xff]
        %v2240 = vld [vmem:[#allocation3 + $0xe1] sm:$0xff]
        %v2241 = vld [vmem:[#allocation3 + $0xf1] sm:$0xff]
        %v2242 = vld [vmem:[#allocation3 + $0xf9] sm:$0xff]
        %v2243 = vld [vmem:[#allocation3 + $0x109] sm:$0xff]
        %v2244 = vld [vmem:[#allocation3 + $0x111] sm:$0xff]
        %v2245 = vld [vmem:[#allocation3 + $0x121] sm:$0xff]
        %v2246 = vld [vmem:[#allocation3 + $0x129] sm:$0xff]
        %v2247 = vld [vmem:[#allocation3 + $0x139] sm:$0xff]
        %v2248 = vld [vmem:[#allocation3 + $0x141] sm:$0xff]
        %v2249 = vld [vmem:[#allocation3 + $0x151] sm:$0xff]
        %v2250 = vld [vmem:[#allocation3 + $0x159] sm:$0xff]
        %v2251 = vld [vmem:[#allocation3 + $0x169] sm:$0xff]
        %v2252 = vld [vmem:[#allocation3 + $0x171] sm:$0xff]
        %v2253 = vlaneseq
        %v2254 = vshrl.u32 %v2253, 7
        %v2255 = vsub.s32 1, %v2254
        %v2256 = vrot.slane %v2119, %v2255
        %v2257 = vmul.f32 %v2256, %v2221
        %v2258 = vmul.f32 %v2256, %v2222
        %v2259 = vmul.f32 %v2256, %v2223
        %v2260 = vmul.f32 %v2256, %v2224
        %v2261 = vmul.f32 %v2256, %v2225
        %v2262 = vmul.f32 %v2256, %v2226
        %v2263 = vmul.f32 %v2256, %v2227
        %v2264 = vmul.f32 %v2256, %v2228
        %v2265 = vmul.f32 %v2256, %v2229
        %v2266 = vmul.f32 %v2256, %v2230
        %v2267 = vmul.f32 %v2256, %v2231
        %v2268 = vmul.f32 %v2256, %v2232
        %v2269 = vmul.f32 %v2256, %v2233
        %v2270 = vmul.f32 %v2256, %v2234
        %v2271 = vmul.f32 %v2256, %v2235
        %v2272 = vmul.f32 %v2256, %v2236
        %v2273 = vmul.f32 %v2256, %v2237
        %v2274 = vmul.f32 %v2256, %v2238
        %v2275 = vmul.f32 %v2256, %v2239
        %v2276 = vmul.f32 %v2256, %v2240
        %v2277 = vmul.f32 %v2256, %v2241
        %v2278 = vmul.f32 %v2256, %v2242
        %v2279 = vmul.f32 %v2256, %v2243
        %v2280 = vmul.f32 %v2256, %v2244
        %v2281 = vmul.f32 %v2256, %v2245
        %v2282 = vmul.f32 %v2256, %v2246
        %v2283 = vmul.f32 %v2256, %v2247
        %v2284 = vmul.f32 %v2256, %v2248
        %v2285 = vmul.f32 %v2256, %v2249
        %v2286 = vmul.f32 %v2256, %v2250
        %v2287 = vmul.f32 %v2256, %v2251
        %v2288 = vmul.f32 %v2256, %v2252
        %v2289 = vadd.f32 %v2189, %v2257
        %v2290 = vadd.f32 %v2190, %v2258
        %v2291 = vadd.f32 %v2191, %v2259
        %v2292 = vadd.f32 %v2192, %v2260
        %v2293 = vadd.f32 %v2193, %v2261
        %v2294 = vadd.f32 %v2194, %v2262
        %v2295 = vadd.f32 %v2195, %v2263
        %v2296 = vadd.f32 %v2196, %v2264
        %v2297 = vadd.f32 %v2197, %v2265
        %v2298 = vadd.f32 %v2198, %v2266
        %v2299 = vadd.f32 %v2199, %v2267
        %v2300 = vadd.f32 %v2200, %v2268
        %v2301 = vadd.f32 %v2201, %v2269
        %v2302 = vadd.f32 %v2202, %v2270
        %v2303 = vadd.f32 %v2203, %v2271
        %v2304 = vadd.f32 %v2204, %v2272
        %v2305 = vadd.f32 %v2205, %v2273
        %v2306 = vadd.f32 %v2206, %v2274
        %v2307 = vadd.f32 %v2207, %v2275
        %v2308 = vadd.f32 %v2208, %v2276
        %v2309 = vadd.f32 %v2209, %v2277
        %v2310 = vadd.f32 %v2210, %v2278
        %v2311 = vadd.f32 %v2211, %v2279
        %v2312 = vadd.f32 %v2212, %v2280
        %v2313 = vadd.f32 %v2213, %v2281
        %v2314 = vadd.f32 %v2214, %v2282
        %v2315 = vadd.f32 %v2215, %v2283
        %v2316 = vadd.f32 %v2216, %v2284
        %v2317 = vadd.f32 %v2217, %v2285
        %v2318 = vadd.f32 %v2218, %v2286
        %v2319 = vadd.f32 %v2219, %v2287
        %v2320 = vadd.f32 %v2220, %v2288
        %v2321 = vld [vmem:[#allocation3 + $0x2] sm:$0xff]
        %v2322 = vld [vmem:[#allocation3 + $0xa] sm:$0xff]
        %v2323 = vld [vmem:[#allocation3 + $0x1a] sm:$0xff]
        %v2324 = vld [vmem:[#allocation3 + $0x22] sm:$0xff]
        %v2325 = vld [vmem:[#allocation3 + $0x32] sm:$0xff]
        %v2326 = vld [vmem:[#allocation3 + $0x3a] sm:$0xff]
        %v2327 = vld [vmem:[#allocation3 + $0x4a] sm:$0xff]
        %v2328 = vld [vmem:[#allocation3 + $0x52] sm:$0xff]
        %v2329 = vld [vmem:[#allocation3 + $0x62] sm:$0xff]
        %v2330 = vld [vmem:[#allocation3 + $0x6a] sm:$0xff]
        %v2331 = vld [vmem:[#allocation3 + $0x7a] sm:$0xff]
        %v2332 = vld [vmem:[#allocation3 + $0x82] sm:$0xff]
        %v2333 = vld [vmem:[#allocation3 + $0x92] sm:$0xff]
        %v2334 = vld [vmem:[#allocation3 + $0x9a] sm:$0xff]
        %v2335 = vld [vmem:[#allocation3 + $0xaa] sm:$0xff]
        %v2336 = vld [vmem:[#allocation3 + $0xb2] sm:$0xff]
        %v2337 = vld [vmem:[#allocation3 + $0xc2] sm:$0xff]
        %v2338 = vld [vmem:[#allocation3 + $0xca] sm:$0xff]
        %v2339 = vld [vmem:[#allocation3 + $0xda] sm:$0xff]
        %v2340 = vld [vmem:[#allocation3 + $0xe2] sm:$0xff]
        %v2341 = vld [vmem:[#allocation3 + $0xf2] sm:$0xff]
        %v2342 = vld [vmem:[#allocation3 + $0xfa] sm:$0xff]
        %v2343 = vld [vmem:[#allocation3 + $0x10a] sm:$0xff]
        %v2344 = vld [vmem:[#allocation3 + $0x112] sm:$0xff]
        %v2345 = vld [vmem:[#allocation3 + $0x122] sm:$0xff]
        %v2346 = vld [vmem:[#allocation3 + $0x12a] sm:$0xff]
        %v2347 = vld [vmem:[#allocation3 + $0x13a] sm:$0xff]
        %v2348 = vld [vmem:[#allocation3 + $0x142] sm:$0xff]
        %v2349 = vld [vmem:[#allocation3 + $0x152] sm:$0xff]
        %v2350 = vld [vmem:[#allocation3 + $0x15a] sm:$0xff]
        %v2351 = vld [vmem:[#allocation3 + $0x16a] sm:$0xff]
        %v2352 = vld [vmem:[#allocation3 + $0x172] sm:$0xff]
        %v2353 = vlaneseq
        %v2354 = vshrl.u32 %v2353, 7
        %v2355 = vsub.s32 2, %v2354
        %v2356 = vrot.slane %v2119, %v2355
        %v2357 = vmul.f32 %v2356, %v2321
        %v2358 = vmul.f32 %v2356, %v2322
        %v2359 = vmul.f32 %v2356, %v2323
        %v2360 = vmul.f32 %v2356, %v2324
        %v2361 = vmul.f32 %v2356, %v2325
        %v2362 = vmul.f32 %v2356, %v2326
        %v2363 = vmul.f32 %v2356, %v2327
        %v2364 = vmul.f32 %v2356, %v2328
        %v2365 = vmul.f32 %v2356, %v2329
        %v2366 = vmul.f32 %v2356, %v2330
        %v2367 = vmul.f32 %v2356, %v2331
        %v2368 = vmul.f32 %v2356, %v2332
        %v2369 = vmul.f32 %v2356, %v2333
        %v2370 = vmul.f32 %v2356, %v2334
        %v2371 = vmul.f32 %v2356, %v2335
        %v2372 = vmul.f32 %v2356, %v2336
        %v2373 = vmul.f32 %v2356, %v2337
        %v2374 = vmul.f32 %v2356, %v2338
        %v2375 = vmul.f32 %v2356, %v2339
        %v2376 = vmul.f32 %v2356, %v2340
        %v2377 = vmul.f32 %v2356, %v2341
        %v2378 = vmul.f32 %v2356, %v2342
        %v2379 = vmul.f32 %v2356, %v2343
        %v2380 = vmul.f32 %v2356, %v2344
        %v2381 = vmul.f32 %v2356, %v2345
        %v2382 = vmul.f32 %v2356, %v2346
        %v2383 = vmul.f32 %v2356, %v2347
        %v2384 = vmul.f32 %v2356, %v2348
        %v2385 = vmul.f32 %v2356, %v2349
        %v2386 = vmul.f32 %v2356, %v2350
        %v2387 = vmul.f32 %v2356, %v2351
        %v2388 = vmul.f32 %v2356, %v2352
        %v2389 = vadd.f32 %v2289, %v2357
        %v2390 = vadd.f32 %v2290, %v2358
        %v2391 = vadd.f32 %v2291, %v2359
        %v2392 = vadd.f32 %v2292, %v2360
        %v2393 = vadd.f32 %v2293, %v2361
        %v2394 = vadd.f32 %v2294, %v2362
        %v2395 = vadd.f32 %v2295, %v2363
        %v2396 = vadd.f32 %v2296, %v2364
        %v2397 = vadd.f32 %v2297, %v2365
        %v2398 = vadd.f32 %v2298, %v2366
        %v2399 = vadd.f32 %v2299, %v2367
        %v2400 = vadd.f32 %v2300, %v2368
        %v2401 = vadd.f32 %v2301, %v2369
        %v2402 = vadd.f32 %v2302, %v2370
        %v2403 = vadd.f32 %v2303, %v2371
        %v2404 = vadd.f32 %v2304, %v2372
        %v2405 = vadd.f32 %v2305, %v2373
        %v2406 = vadd.f32 %v2306, %v2374
        %v2407 = vadd.f32 %v2307, %v2375
        %v2408 = vadd.f32 %v2308, %v2376
        %v2409 = vadd.f32 %v2309, %v2377
        %v2410 = vadd.f32 %v2310, %v2378
        %v2411 = vadd.f32 %v2311, %v2379
        %v2412 = vadd.f32 %v2312, %v2380
        %v2413 = vadd.f32 %v2313, %v2381
        %v2414 = vadd.f32 %v2314, %v2382
        %v2415 = vadd.f32 %v2315, %v2383
        %v2416 = vadd.f32 %v2316, %v2384
        %v2417 = vadd.f32 %v2317, %v2385
        %v2418 = vadd.f32 %v2318, %v2386
        %v2419 = vadd.f32 %v2319, %v2387
        %v2420 = vadd.f32 %v2320, %v2388
        %v2421 = vld [vmem:[%s2086] sm:$0xff]
        %v2422 = vld [vmem:[%s2086 + $0x8] sm:$0xff]
        %v2423 = vld [vmem:[%s2086 + $0x18] sm:$0xff]
        %v2424 = vld [vmem:[%s2086 + $0x20] sm:$0xff]
        %v2425 = vld [vmem:[%s2086 + $0x30] sm:$0xff]
        %v2426 = vld [vmem:[%s2086 + $0x38] sm:$0xff]
        %v2427 = vld [vmem:[%s2086 + $0x48] sm:$0xff]
        %v2428 = vld [vmem:[%s2086 + $0x50] sm:$0xff]
        %v2429 = vld [vmem:[%s2086 + $0x60] sm:$0xff]
        %v2430 = vld [vmem:[%s2086 + $0x68] sm:$0xff]
        %v2431 = vld [vmem:[%s2086 + $0x78] sm:$0xff]
        %v2432 = vld [vmem:[%s2086 + $0x80] sm:$0xff]
        %v2433 = vld [vmem:[%s2086 + $0x90] sm:$0xff]
        %v2434 = vld [vmem:[%s2086 + $0x98] sm:$0xff]
        %v2435 = vld [vmem:[%s2086 + $0xa8] sm:$0xff]
        %v2436 = vld [vmem:[%s2086 + $0xb0] sm:$0xff]
        %v2437 = vld [vmem:[%s2086 + $0xc0] sm:$0xff]
        %v2438 = vld [vmem:[%s2086 + $0xc8] sm:$0xff]
        %v2439 = vld [vmem:[%s2086 + $0xd8] sm:$0xff]
        %v2440 = vld [vmem:[%s2086 + $0xe0] sm:$0xff]
        %v2441 = vld [vmem:[%s2086 + $0xf0] sm:$0xff]
        %v2442 = vld [vmem:[%s2086 + $0xf8] sm:$0xff]
        %v2443 = vld [vmem:[%s2086 + $0x108] sm:$0xff]
        %v2444 = vld [vmem:[%s2086 + $0x110] sm:$0xff]
        %v2445 = vld [vmem:[%s2086 + $0x120] sm:$0xff]
        %v2446 = vld [vmem:[%s2086 + $0x128] sm:$0xff]
        %v2447 = vld [vmem:[%s2086 + $0x138] sm:$0xff]
        %v2448 = vld [vmem:[%s2086 + $0x140] sm:$0xff]
        %v2449 = vld [vmem:[%s2086 + $0x150] sm:$0xff]
        %v2450 = vld [vmem:[%s2086 + $0x158] sm:$0xff]
        %v2451 = vld [vmem:[%s2086 + $0x168] sm:$0xff]
        %v2452 = vld [vmem:[%s2086 + $0x170] sm:$0xff]
        %v2453 = vlaneseq
        %v2454 = vshrl.u32 %v2453, 7
        %v2455 = vsub.s32 3, %v2454
        %v2456 = vrot.slane %v2119, %v2455
        %v2457 = vmul.f32 %v2456, %v2421
        %v2458 = vmul.f32 %v2456, %v2422
        %v2459 = vmul.f32 %v2456, %v2423
        %v2460 = vmul.f32 %v2456, %v2424
        %v2461 = vmul.f32 %v2456, %v2425
        %v2462 = vmul.f32 %v2456, %v2426
        %v2463 = vmul.f32 %v2456, %v2427
        %v2464 = vmul.f32 %v2456, %v2428
        %v2465 = vmul.f32 %v2456, %v2429
        %v2466 = vmul.f32 %v2456, %v2430
        %v2467 = vmul.f32 %v2456, %v2431
        %v2468 = vmul.f32 %v2456, %v2432
        %v2469 = vmul.f32 %v2456, %v2433
        %v2470 = vmul.f32 %v2456, %v2434
        %v2471 = vmul.f32 %v2456, %v2435
        %v2472 = vmul.f32 %v2456, %v2436
        %v2473 = vmul.f32 %v2456, %v2437
        %v2474 = vmul.f32 %v2456, %v2438
        %v2475 = vmul.f32 %v2456, %v2439
        %v2476 = vmul.f32 %v2456, %v2440
        %v2477 = vmul.f32 %v2456, %v2441
        %v2478 = vmul.f32 %v2456, %v2442
        %v2479 = vmul.f32 %v2456, %v2443
        %v2480 = vmul.f32 %v2456, %v2444
        %v2481 = vmul.f32 %v2456, %v2445
        %v2482 = vmul.f32 %v2456, %v2446
        %v2483 = vmul.f32 %v2456, %v2447
        %v2484 = vmul.f32 %v2456, %v2448
        %v2485 = vmul.f32 %v2456, %v2449
        %v2486 = vmul.f32 %v2456, %v2450
        %v2487 = vmul.f32 %v2456, %v2451
        %v2488 = vmul.f32 %v2456, %v2452
        %v2489 = vadd.f32 %v2389, %v2457
        %v2490 = vadd.f32 %v2390, %v2458
        %v2491 = vadd.f32 %v2391, %v2459
        %v2492 = vadd.f32 %v2392, %v2460
        %v2493 = vadd.f32 %v2393, %v2461
        %v2494 = vadd.f32 %v2394, %v2462
        %v2495 = vadd.f32 %v2395, %v2463
        %v2496 = vadd.f32 %v2396, %v2464
        %v2497 = vadd.f32 %v2397, %v2465
        %v2498 = vadd.f32 %v2398, %v2466
        %v2499 = vadd.f32 %v2399, %v2467
        %v2500 = vadd.f32 %v2400, %v2468
        %v2501 = vadd.f32 %v2401, %v2469
        %v2502 = vadd.f32 %v2402, %v2470
        %v2503 = vadd.f32 %v2403, %v2471
        %v2504 = vadd.f32 %v2404, %v2472
        %v2505 = vadd.f32 %v2405, %v2473
        %v2506 = vadd.f32 %v2406, %v2474
        %v2507 = vadd.f32 %v2407, %v2475
        %v2508 = vadd.f32 %v2408, %v2476
        %v2509 = vadd.f32 %v2409, %v2477
        %v2510 = vadd.f32 %v2410, %v2478
        %v2511 = vadd.f32 %v2411, %v2479
        %v2512 = vadd.f32 %v2412, %v2480
        %v2513 = vadd.f32 %v2413, %v2481
        %v2514 = vadd.f32 %v2414, %v2482
        %v2515 = vadd.f32 %v2415, %v2483
        %v2516 = vadd.f32 %v2416, %v2484
        %v2517 = vadd.f32 %v2417, %v2485
        %v2518 = vadd.f32 %v2418, %v2486
        %v2519 = vadd.f32 %v2419, %v2487
        %v2520 = vadd.f32 %v2420, %v2488
        %v2521 = vld [vmem:[%s2086 + $0x1] sm:$0xff]
        %v2522 = vld [vmem:[%s2086 + $0x9] sm:$0xff]
        %v2523 = vld [vmem:[%s2086 + $0x19] sm:$0xff]
        %v2524 = vld [vmem:[%s2086 + $0x21] sm:$0xff]
        %v2525 = vld [vmem:[%s2086 + $0x31] sm:$0xff]
        %v2526 = vld [vmem:[%s2086 + $0x39] sm:$0xff]
        %v2527 = vld [vmem:[%s2086 + $0x49] sm:$0xff]
        %v2528 = vld [vmem:[%s2086 + $0x51] sm:$0xff]
        %v2529 = vld [vmem:[%s2086 + $0x61] sm:$0xff]
        %v2530 = vld [vmem:[%s2086 + $0x69] sm:$0xff]
        %v2531 = vld [vmem:[%s2086 + $0x79] sm:$0xff]
        %v2532 = vld [vmem:[%s2086 + $0x81] sm:$0xff]
        %v2533 = vld [vmem:[%s2086 + $0x91] sm:$0xff]
        %v2534 = vld [vmem:[%s2086 + $0x99] sm:$0xff]
        %v2535 = vld [vmem:[%s2086 + $0xa9] sm:$0xff]
        %v2536 = vld [vmem:[%s2086 + $0xb1] sm:$0xff]
        %v2537 = vld [vmem:[%s2086 + $0xc1] sm:$0xff]
        %v2538 = vld [vmem:[%s2086 + $0xc9] sm:$0xff]
        %v2539 = vld [vmem:[%s2086 + $0xd9] sm:$0xff]
        %v2540 = vld [vmem:[%s2086 + $0xe1] sm:$0xff]
        %v2541 = vld [vmem:[%s2086 + $0xf1] sm:$0xff]
        %v2542 = vld [vmem:[%s2086 + $0xf9] sm:$0xff]
        %v2543 = vld [vmem:[%s2086 + $0x109] sm:$0xff]
        %v2544 = vld [vmem:[%s2086 + $0x111] sm:$0xff]
        %v2545 = vld [vmem:[%s2086 + $0x121] sm:$0xff]
        %v2546 = vld [vmem:[%s2086 + $0x129] sm:$0xff]
        %v2547 = vld [vmem:[%s2086 + $0x139] sm:$0xff]
        %v2548 = vld [vmem:[%s2086 + $0x141] sm:$0xff]
        %v2549 = vld [vmem:[%s2086 + $0x151] sm:$0xff]
        %v2550 = vld [vmem:[%s2086 + $0x159] sm:$0xff]
        %v2551 = vld [vmem:[%s2086 + $0x169] sm:$0xff]
        %v2552 = vld [vmem:[%s2086 + $0x171] sm:$0xff]
        %v2553 = vlaneseq
        %v2554 = vshrl.u32 %v2553, 7
        %v2555 = vsub.s32 4, %v2554
        %v2556 = vrot.slane %v2119, %v2555
        %v2557 = vmul.f32 %v2556, %v2521
        %v2558 = vmul.f32 %v2556, %v2522
        %v2559 = vmul.f32 %v2556, %v2523
        %v2560 = vmul.f32 %v2556, %v2524
        %v2561 = vmul.f32 %v2556, %v2525
        %v2562 = vmul.f32 %v2556, %v2526
        %v2563 = vmul.f32 %v2556, %v2527
        %v2564 = vmul.f32 %v2556, %v2528
        %v2565 = vmul.f32 %v2556, %v2529
        %v2566 = vmul.f32 %v2556, %v2530
        %v2567 = vmul.f32 %v2556, %v2531
        %v2568 = vmul.f32 %v2556, %v2532
        %v2569 = vmul.f32 %v2556, %v2533
        %v2570 = vmul.f32 %v2556, %v2534
        %v2571 = vmul.f32 %v2556, %v2535
        %v2572 = vmul.f32 %v2556, %v2536
        %v2573 = vmul.f32 %v2556, %v2537
        %v2574 = vmul.f32 %v2556, %v2538
        %v2575 = vmul.f32 %v2556, %v2539
        %v2576 = vmul.f32 %v2556, %v2540
        %v2577 = vmul.f32 %v2556, %v2541
        %v2578 = vmul.f32 %v2556, %v2542
        %v2579 = vmul.f32 %v2556, %v2543
        %v2580 = vmul.f32 %v2556, %v2544
        %v2581 = vmul.f32 %v2556, %v2545
        %v2582 = vmul.f32 %v2556, %v2546
        %v2583 = vmul.f32 %v2556, %v2547
        %v2584 = vmul.f32 %v2556, %v2548
        %v2585 = vmul.f32 %v2556, %v2549
        %v2586 = vmul.f32 %v2556, %v2550
        %v2587 = vmul.f32 %v2556, %v2551
        %v2588 = vmul.f32 %v2556, %v2552
        %v2589 = vadd.f32 %v2489, %v2557
        %v2590 = vadd.f32 %v2490, %v2558
        %v2591 = vadd.f32 %v2491, %v2559
        %v2592 = vadd.f32 %v2492, %v2560
        %v2593 = vadd.f32 %v2493, %v2561
        %v2594 = vadd.f32 %v2494, %v2562
        %v2595 = vadd.f32 %v2495, %v2563
        %v2596 = vadd.f32 %v2496, %v2564
        %v2597 = vadd.f32 %v2497, %v2565
        %v2598 = vadd.f32 %v2498, %v2566
        %v2599 = vadd.f32 %v2499, %v2567
        %v2600 = vadd.f32 %v2500, %v2568
        %v2601 = vadd.f32 %v2501, %v2569
        %v2602 = vadd.f32 %v2502, %v2570
        %v2603 = vadd.f32 %v2503, %v2571
        %v2604 = vadd.f32 %v2504, %v2572
        %v2605 = vadd.f32 %v2505, %v2573
        %v2606 = vadd.f32 %v2506, %v2574
        %v2607 = vadd.f32 %v2507, %v2575
        %v2608 = vadd.f32 %v2508, %v2576
        %v2609 = vadd.f32 %v2509, %v2577
        %v2610 = vadd.f32 %v2510, %v2578
        %v2611 = vadd.f32 %v2511, %v2579
        %v2612 = vadd.f32 %v2512, %v2580
        %v2613 = vadd.f32 %v2513, %v2581
        %v2614 = vadd.f32 %v2514, %v2582
        %v2615 = vadd.f32 %v2515, %v2583
        %v2616 = vadd.f32 %v2516, %v2584
        %v2617 = vadd.f32 %v2517, %v2585
        %v2618 = vadd.f32 %v2518, %v2586
        %v2619 = vadd.f32 %v2519, %v2587
        %v2620 = vadd.f32 %v2520, %v2588
        %v2621 = vld [vmem:[%s2086 + $0x2] sm:$0xff]
        %v2622 = vld [vmem:[%s2086 + $0xa] sm:$0xff]
        %v2623 = vld [vmem:[%s2086 + $0x1a] sm:$0xff]
        %v2624 = vld [vmem:[%s2086 + $0x22] sm:$0xff]
        %v2625 = vld [vmem:[%s2086 + $0x32] sm:$0xff]
        %v2626 = vld [vmem:[%s2086 + $0x3a] sm:$0xff]
        %v2627 = vld [vmem:[%s2086 + $0x4a] sm:$0xff]
        %v2628 = vld [vmem:[%s2086 + $0x52] sm:$0xff]
        %v2629 = vld [vmem:[%s2086 + $0x62] sm:$0xff]
        %v2630 = vld [vmem:[%s2086 + $0x6a] sm:$0xff]
        %v2631 = vld [vmem:[%s2086 + $0x7a] sm:$0xff]
        %v2632 = vld [vmem:[%s2086 + $0x82] sm:$0xff]
        %v2633 = vld [vmem:[%s2086 + $0x92] sm:$0xff]
        %v2634 = vld [vmem:[%s2086 + $0x9a] sm:$0xff]
        %v2635 = vld [vmem:[%s2086 + $0xaa] sm:$0xff]
        %v2636 = vld [vmem:[%s2086 + $0xb2] sm:$0xff]
        %v2637 = vld [vmem:[%s2086 + $0xc2] sm:$0xff]
        %v2638 = vld [vmem:[%s2086 + $0xca] sm:$0xff]
        %v2639 = vld [vmem:[%s2086 + $0xda] sm:$0xff]
        %v2640 = vld [vmem:[%s2086 + $0xe2] sm:$0xff]
        %v2641 = vld [vmem:[%s2086 + $0xf2] sm:$0xff]
        %v2642 = vld [vmem:[%s2086 + $0xfa] sm:$0xff]
        %v2643 = vld [vmem:[%s2086 + $0x10a] sm:$0xff]
        %v2644 = vld [vmem:[%s2086 + $0x112] sm:$0xff]
        %v2645 = vld [vmem:[%s2086 + $0x122] sm:$0xff]
        %v2646 = vld [vmem:[%s2086 + $0x12a] sm:$0xff]
        %v2647 = vld [vmem:[%s2086 + $0x13a] sm:$0xff]
        %v2648 = vld [vmem:[%s2086 + $0x142] sm:$0xff]
        %v2649 = vld [vmem:[%s2086 + $0x152] sm:$0xff]
        %v2650 = vld [vmem:[%s2086 + $0x15a] sm:$0xff]
        %v2651 = vld [vmem:[%s2086 + $0x16a] sm:$0xff]
        %v2652 = vld [vmem:[%s2086 + $0x172] sm:$0xff]
        %v2653 = vlaneseq
        %v2654 = vshrl.u32 %v2653, 7
        %v2655 = vsub.s32 5, %v2654
        %v2656 = vrot.slane %v2119, %v2655
        %v2657 = vmul.f32 %v2656, %v2621
        %v2658 = vmul.f32 %v2656, %v2622
        %v2659 = vmul.f32 %v2656, %v2623
        %v2660 = vmul.f32 %v2656, %v2624
        %v2661 = vmul.f32 %v2656, %v2625
        %v2662 = vmul.f32 %v2656, %v2626
        %v2663 = vmul.f32 %v2656, %v2627
        %v2664 = vmul.f32 %v2656, %v2628
        %v2665 = vmul.f32 %v2656, %v2629
        %v2666 = vmul.f32 %v2656, %v2630
        %v2667 = vmul.f32 %v2656, %v2631
        %v2668 = vmul.f32 %v2656, %v2632
        %v2669 = vmul.f32 %v2656, %v2633
        %v2670 = vmul.f32 %v2656, %v2634
        %v2671 = vmul.f32 %v2656, %v2635
        %v2672 = vmul.f32 %v2656, %v2636
        %v2673 = vmul.f32 %v2656, %v2637
        %v2674 = vmul.f32 %v2656, %v2638
        %v2675 = vmul.f32 %v2656, %v2639
        %v2676 = vmul.f32 %v2656, %v2640
        %v2677 = vmul.f32 %v2656, %v2641
        %v2678 = vmul.f32 %v2656, %v2642
        %v2679 = vmul.f32 %v2656, %v2643
        %v2680 = vmul.f32 %v2656, %v2644
        %v2681 = vmul.f32 %v2656, %v2645
        %v2682 = vmul.f32 %v2656, %v2646
        %v2683 = vmul.f32 %v2656, %v2647
        %v2684 = vmul.f32 %v2656, %v2648
        %v2685 = vmul.f32 %v2656, %v2649
        %v2686 = vmul.f32 %v2656, %v2650
        %v2687 = vmul.f32 %v2656, %v2651
        %v2688 = vmul.f32 %v2656, %v2652
        %v2689 = vadd.f32 %v2589, %v2657
        %v2690 = vadd.f32 %v2590, %v2658
        %v2691 = vadd.f32 %v2591, %v2659
        %v2692 = vadd.f32 %v2592, %v2660
        %v2693 = vadd.f32 %v2593, %v2661
        %v2694 = vadd.f32 %v2594, %v2662
        %v2695 = vadd.f32 %v2595, %v2663
        %v2696 = vadd.f32 %v2596, %v2664
        %v2697 = vadd.f32 %v2597, %v2665
        %v2698 = vadd.f32 %v2598, %v2666
        %v2699 = vadd.f32 %v2599, %v2667
        %v2700 = vadd.f32 %v2600, %v2668
        %v2701 = vadd.f32 %v2601, %v2669
        %v2702 = vadd.f32 %v2602, %v2670
        %v2703 = vadd.f32 %v2603, %v2671
        %v2704 = vadd.f32 %v2604, %v2672
        %v2705 = vadd.f32 %v2605, %v2673
        %v2706 = vadd.f32 %v2606, %v2674
        %v2707 = vadd.f32 %v2607, %v2675
        %v2708 = vadd.f32 %v2608, %v2676
        %v2709 = vadd.f32 %v2609, %v2677
        %v2710 = vadd.f32 %v2610, %v2678
        %v2711 = vadd.f32 %v2611, %v2679
        %v2712 = vadd.f32 %v2612, %v2680
        %v2713 = vadd.f32 %v2613, %v2681
        %v2714 = vadd.f32 %v2614, %v2682
        %v2715 = vadd.f32 %v2615, %v2683
        %v2716 = vadd.f32 %v2616, %v2684
        %v2717 = vadd.f32 %v2617, %v2685
        %v2718 = vadd.f32 %v2618, %v2686
        %v2719 = vadd.f32 %v2619, %v2687
        %v2720 = vadd.f32 %v2620, %v2688
        %s2721 = scalar_lea.vmem [#allocation3], 48
        %v2722 = vld [vmem:[%s2721] sm:$0xff]
        %v2723 = vld [vmem:[%s2721 + $0x8] sm:$0xff]
        %v2724 = vld [vmem:[%s2721 + $0x18] sm:$0xff]
        %v2725 = vld [vmem:[%s2721 + $0x20] sm:$0xff]
        %v2726 = vld [vmem:[%s2721 + $0x30] sm:$0xff]
        %v2727 = vld [vmem:[%s2721 + $0x38] sm:$0xff]
        %v2728 = vld [vmem:[%s2721 + $0x48] sm:$0xff]
        %v2729 = vld [vmem:[%s2721 + $0x50] sm:$0xff]
        %v2730 = vld [vmem:[%s2721 + $0x60] sm:$0xff]
        %v2731 = vld [vmem:[%s2721 + $0x68] sm:$0xff]
        %v2732 = vld [vmem:[%s2721 + $0x78] sm:$0xff]
        %v2733 = vld [vmem:[%s2721 + $0x80] sm:$0xff]
        %v2734 = vld [vmem:[%s2721 + $0x90] sm:$0xff]
        %v2735 = vld [vmem:[%s2721 + $0x98] sm:$0xff]
        %v2736 = vld [vmem:[%s2721 + $0xa8] sm:$0xff]
        %v2737 = vld [vmem:[%s2721 + $0xb0] sm:$0xff]
        %v2738 = vld [vmem:[%s2721 + $0xc0] sm:$0xff]
        %v2739 = vld [vmem:[%s2721 + $0xc8] sm:$0xff]
        %v2740 = vld [vmem:[%s2721 + $0xd8] sm:$0xff]
        %v2741 = vld [vmem:[%s2721 + $0xe0] sm:$0xff]
        %v2742 = vld [vmem:[%s2721 + $0xf0] sm:$0xff]
        %v2743 = vld [vmem:[%s2721 + $0xf8] sm:$0xff]
        %v2744 = vld [vmem:[%s2721 + $0x108] sm:$0xff]
        %v2745 = vld [vmem:[%s2721 + $0x110] sm:$0xff]
        %v2746 = vld [vmem:[%s2721 + $0x120] sm:$0xff]
        %v2747 = vld [vmem:[%s2721 + $0x128] sm:$0xff]
        %v2748 = vld [vmem:[%s2721 + $0x138] sm:$0xff]
        %v2749 = vld [vmem:[%s2721 + $0x140] sm:$0xff]
        %v2750 = vld [vmem:[%s2721 + $0x150] sm:$0xff]
        %v2751 = vld [vmem:[%s2721 + $0x158] sm:$0xff]
        %v2752 = vld [vmem:[%s2721 + $0x168] sm:$0xff]
        %v2753 = vld [vmem:[%s2721 + $0x170] sm:$0xff]
        %v2754 = vlaneseq
        %v2755 = vshrl.u32 %v2754, 7
        %v2756 = vsub.s32 6, %v2755
        %v2757 = vrot.slane %v2119, %v2756
        %v2758 = vmul.f32 %v2757, %v2722
        %v2759 = vmul.f32 %v2757, %v2723
        %v2760 = vmul.f32 %v2757, %v2724
        %v2761 = vmul.f32 %v2757, %v2725
        %v2762 = vmul.f32 %v2757, %v2726
        %v2763 = vmul.f32 %v2757, %v2727
        %v2764 = vmul.f32 %v2757, %v2728
        %v2765 = vmul.f32 %v2757, %v2729
        %v2766 = vmul.f32 %v2757, %v2730
        %v2767 = vmul.f32 %v2757, %v2731
        %v2768 = vmul.f32 %v2757, %v2732
        %v2769 = vmul.f32 %v2757, %v2733
        %v2770 = vmul.f32 %v2757, %v2734
        %v2771 = vmul.f32 %v2757, %v2735
        %v2772 = vmul.f32 %v2757, %v2736
        %v2773 = vmul.f32 %v2757, %v2737
        %v2774 = vmul.f32 %v2757, %v2738
        %v2775 = vmul.f32 %v2757, %v2739
        %v2776 = vmul.f32 %v2757, %v2740
        %v2777 = vmul.f32 %v2757, %v2741
        %v2778 = vmul.f32 %v2757, %v2742
        %v2779 = vmul.f32 %v2757, %v2743
        %v2780 = vmul.f32 %v2757, %v2744
        %v2781 = vmul.f32 %v2757, %v2745
        %v2782 = vmul.f32 %v2757, %v2746
        %v2783 = vmul.f32 %v2757, %v2747
        %v2784 = vmul.f32 %v2757, %v2748
        %v2785 = vmul.f32 %v2757, %v2749
        %v2786 = vmul.f32 %v2757, %v2750
        %v2787 = vmul.f32 %v2757, %v2751
        %v2788 = vmul.f32 %v2757, %v2752
        %v2789 = vmul.f32 %v2757, %v2753
        %v2790 = vadd.f32 %v2689, %v2758
        %v2791 = vadd.f32 %v2690, %v2759
        %v2792 = vadd.f32 %v2691, %v2760
        %v2793 = vadd.f32 %v2692, %v2761
        %v2794 = vadd.f32 %v2693, %v2762
        %v2795 = vadd.f32 %v2694, %v2763
        %v2796 = vadd.f32 %v2695, %v2764
        %v2797 = vadd.f32 %v2696, %v2765
        %v2798 = vadd.f32 %v2697, %v2766
        %v2799 = vadd.f32 %v2698, %v2767
        %v2800 = vadd.f32 %v2699, %v2768
        %v2801 = vadd.f32 %v2700, %v2769
        %v2802 = vadd.f32 %v2701, %v2770
        %v2803 = vadd.f32 %v2702, %v2771
        %v2804 = vadd.f32 %v2703, %v2772
        %v2805 = vadd.f32 %v2704, %v2773
        %v2806 = vadd.f32 %v2705, %v2774
        %v2807 = vadd.f32 %v2706, %v2775
        %v2808 = vadd.f32 %v2707, %v2776
        %v2809 = vadd.f32 %v2708, %v2777
        %v2810 = vadd.f32 %v2709, %v2778
        %v2811 = vadd.f32 %v2710, %v2779
        %v2812 = vadd.f32 %v2711, %v2780
        %v2813 = vadd.f32 %v2712, %v2781
        %v2814 = vadd.f32 %v2713, %v2782
        %v2815 = vadd.f32 %v2714, %v2783
        %v2816 = vadd.f32 %v2715, %v2784
        %v2817 = vadd.f32 %v2716, %v2785
        %v2818 = vadd.f32 %v2717, %v2786
        %v2819 = vadd.f32 %v2718, %v2787
        %v2820 = vadd.f32 %v2719, %v2788
        %v2821 = vadd.f32 %v2720, %v2789
        %v2822 = vld [vmem:[%s2721 + $0x1] sm:$0xff]
        %v2823 = vld [vmem:[%s2721 + $0x9] sm:$0xff]
        %v2824 = vld [vmem:[%s2721 + $0x19] sm:$0xff]
        %v2825 = vld [vmem:[%s2721 + $0x21] sm:$0xff]
        %v2826 = vld [vmem:[%s2721 + $0x31] sm:$0xff]
        %v2827 = vld [vmem:[%s2721 + $0x39] sm:$0xff]
        %v2828 = vld [vmem:[%s2721 + $0x49] sm:$0xff]
        %v2829 = vld [vmem:[%s2721 + $0x51] sm:$0xff]
        %v2830 = vld [vmem:[%s2721 + $0x61] sm:$0xff]
        %v2831 = vld [vmem:[%s2721 + $0x69] sm:$0xff]
        %v2832 = vld [vmem:[%s2721 + $0x79] sm:$0xff]
        %v2833 = vld [vmem:[%s2721 + $0x81] sm:$0xff]
        %v2834 = vld [vmem:[%s2721 + $0x91] sm:$0xff]
        %v2835 = vld [vmem:[%s2721 + $0x99] sm:$0xff]
        %v2836 = vld [vmem:[%s2721 + $0xa9] sm:$0xff]
        %v2837 = vld [vmem:[%s2721 + $0xb1] sm:$0xff]
        %v2838 = vld [vmem:[%s2721 + $0xc1] sm:$0xff]
        %v2839 = vld [vmem:[%s2721 + $0xc9] sm:$0xff]
        %v2840 = vld [vmem:[%s2721 + $0xd9] sm:$0xff]
        %v2841 = vld [vmem:[%s2721 + $0xe1] sm:$0xff]
        %v2842 = vld [vmem:[%s2721 + $0xf1] sm:$0xff]
        %v2843 = vld [vmem:[%s2721 + $0xf9] sm:$0xff]
        %v2844 = vld [vmem:[%s2721 + $0x109] sm:$0xff]
        %v2845 = vld [vmem:[%s2721 + $0x111] sm:$0xff]
        %v2846 = vld [vmem:[%s2721 + $0x121] sm:$0xff]
        %v2847 = vld [vmem:[%s2721 + $0x129] sm:$0xff]
        %v2848 = vld [vmem:[%s2721 + $0x139] sm:$0xff]
        %v2849 = vld [vmem:[%s2721 + $0x141] sm:$0xff]
        %v2850 = vld [vmem:[%s2721 + $0x151] sm:$0xff]
        %v2851 = vld [vmem:[%s2721 + $0x159] sm:$0xff]
        %v2852 = vld [vmem:[%s2721 + $0x169] sm:$0xff]
        %v2853 = vld [vmem:[%s2721 + $0x171] sm:$0xff]
        %v2854 = vlaneseq
        %v2855 = vshrl.u32 %v2854, 7
        %v2856 = vsub.s32 7, %v2855
        %v2857 = vrot.slane %v2119, %v2856
        %v2858 = vmul.f32 %v2857, %v2822
        %v2859 = vmul.f32 %v2857, %v2823
        %v2860 = vmul.f32 %v2857, %v2824
        %v2861 = vmul.f32 %v2857, %v2825
        %v2862 = vmul.f32 %v2857, %v2826
        %v2863 = vmul.f32 %v2857, %v2827
        %v2864 = vmul.f32 %v2857, %v2828
        %v2865 = vmul.f32 %v2857, %v2829
        %v2866 = vmul.f32 %v2857, %v2830
        %v2867 = vmul.f32 %v2857, %v2831
        %v2868 = vmul.f32 %v2857, %v2832
        %v2869 = vmul.f32 %v2857, %v2833
        %v2870 = vmul.f32 %v2857, %v2834
        %v2871 = vmul.f32 %v2857, %v2835
        %v2872 = vmul.f32 %v2857, %v2836
        %v2873 = vmul.f32 %v2857, %v2837
        %v2874 = vmul.f32 %v2857, %v2838
        %v2875 = vmul.f32 %v2857, %v2839
        %v2876 = vmul.f32 %v2857, %v2840
        %v2877 = vmul.f32 %v2857, %v2841
        %v2878 = vmul.f32 %v2857, %v2842
        %v2879 = vmul.f32 %v2857, %v2843
        %v2880 = vmul.f32 %v2857, %v2844
        %v2881 = vmul.f32 %v2857, %v2845
        %v2882 = vmul.f32 %v2857, %v2846
        %v2883 = vmul.f32 %v2857, %v2847
        %v2884 = vmul.f32 %v2857, %v2848
        %v2885 = vmul.f32 %v2857, %v2849
        %v2886 = vmul.f32 %v2857, %v2850
        %v2887 = vmul.f32 %v2857, %v2851
        %v2888 = vmul.f32 %v2857, %v2852
        %v2889 = vmul.f32 %v2857, %v2853
        %v2890 = vadd.f32 %v2790, %v2858
        %v2891 = vadd.f32 %v2791, %v2859
        %v2892 = vadd.f32 %v2792, %v2860
        %v2893 = vadd.f32 %v2793, %v2861
        %v2894 = vadd.f32 %v2794, %v2862
        %v2895 = vadd.f32 %v2795, %v2863
        %v2896 = vadd.f32 %v2796, %v2864
        %v2897 = vadd.f32 %v2797, %v2865
        %v2898 = vadd.f32 %v2798, %v2866
        %v2899 = vadd.f32 %v2799, %v2867
        %v2900 = vadd.f32 %v2800, %v2868
        %v2901 = vadd.f32 %v2801, %v2869
        %v2902 = vadd.f32 %v2802, %v2870
        %v2903 = vadd.f32 %v2803, %v2871
        %v2904 = vadd.f32 %v2804, %v2872
        %v2905 = vadd.f32 %v2805, %v2873
        %v2906 = vadd.f32 %v2806, %v2874
        %v2907 = vadd.f32 %v2807, %v2875
        %v2908 = vadd.f32 %v2808, %v2876
        %v2909 = vadd.f32 %v2809, %v2877
        %v2910 = vadd.f32 %v2810, %v2878
        %v2911 = vadd.f32 %v2811, %v2879
        %v2912 = vadd.f32 %v2812, %v2880
        %v2913 = vadd.f32 %v2813, %v2881
        %v2914 = vadd.f32 %v2814, %v2882
        %v2915 = vadd.f32 %v2815, %v2883
        %v2916 = vadd.f32 %v2816, %v2884
        %v2917 = vadd.f32 %v2817, %v2885
        %v2918 = vadd.f32 %v2818, %v2886
        %v2919 = vadd.f32 %v2819, %v2887
        %v2920 = vadd.f32 %v2820, %v2888
        %v2921 = vadd.f32 %v2821, %v2889
        %v2922 = vld [vmem:[%s2721 + $0x2] sm:$0xff]
        %v2923 = vld [vmem:[%s2721 + $0xa] sm:$0xff]
        %v2924 = vld [vmem:[%s2721 + $0x1a] sm:$0xff]
        %v2925 = vld [vmem:[%s2721 + $0x22] sm:$0xff]
        %v2926 = vld [vmem:[%s2721 + $0x32] sm:$0xff]
        %v2927 = vld [vmem:[%s2721 + $0x3a] sm:$0xff]
        %v2928 = vld [vmem:[%s2721 + $0x4a] sm:$0xff]
        %v2929 = vld [vmem:[%s2721 + $0x52] sm:$0xff]
        %v2930 = vld [vmem:[%s2721 + $0x62] sm:$0xff]
        %v2931 = vld [vmem:[%s2721 + $0x6a] sm:$0xff]
        %v2932 = vld [vmem:[%s2721 + $0x7a] sm:$0xff]
        %v2933 = vld [vmem:[%s2721 + $0x82] sm:$0xff]
        %v2934 = vld [vmem:[%s2721 + $0x92] sm:$0xff]
        %v2935 = vld [vmem:[%s2721 + $0x9a] sm:$0xff]
        %v2936 = vld [vmem:[%s2721 + $0xaa] sm:$0xff]
        %v2937 = vld [vmem:[%s2721 + $0xb2] sm:$0xff]
        %v2938 = vld [vmem:[%s2721 + $0xc2] sm:$0xff]
        %v2939 = vld [vmem:[%s2721 + $0xca] sm:$0xff]
        %v2940 = vld [vmem:[%s2721 + $0xda] sm:$0xff]
        %v2941 = vld [vmem:[%s2721 + $0xe2] sm:$0xff]
        %v2942 = vld [vmem:[%s2721 + $0xf2] sm:$0xff]
        %v2943 = vld [vmem:[%s2721 + $0xfa] sm:$0xff]
        %v2944 = vld [vmem:[%s2721 + $0x10a] sm:$0xff]
        %v2945 = vld [vmem:[%s2721 + $0x112] sm:$0xff]
        %v2946 = vld [vmem:[%s2721 + $0x122] sm:$0xff]
        %v2947 = vld [vmem:[%s2721 + $0x12a] sm:$0xff]
        %v2948 = vld [vmem:[%s2721 + $0x13a] sm:$0xff]
        %v2949 = vld [vmem:[%s2721 + $0x142] sm:$0xff]
        %v2950 = vld [vmem:[%s2721 + $0x152] sm:$0xff]
        %v2951 = vld [vmem:[%s2721 + $0x15a] sm:$0xff]
        %v2952 = vld [vmem:[%s2721 + $0x16a] sm:$0xff]
        %v2953 = vld [vmem:[%s2721 + $0x172] sm:$0xff]
        %v2954 = vlaneseq
        %v2955 = vshrl.u32 %v2954, 7
        %v2956 = vsub.s32 0, %v2955
        %v2957 = vrot.slane %v2120, %v2956
        %v2958 = vmul.f32 %v2957, %v2922
        %v2959 = vmul.f32 %v2957, %v2923
        %v2960 = vmul.f32 %v2957, %v2924
        %v2961 = vmul.f32 %v2957, %v2925
        %v2962 = vmul.f32 %v2957, %v2926
        %v2963 = vmul.f32 %v2957, %v2927
        %v2964 = vmul.f32 %v2957, %v2928
        %v2965 = vmul.f32 %v2957, %v2929
        %v2966 = vmul.f32 %v2957, %v2930
        %v2967 = vmul.f32 %v2957, %v2931
        %v2968 = vmul.f32 %v2957, %v2932
        %v2969 = vmul.f32 %v2957, %v2933
        %v2970 = vmul.f32 %v2957, %v2934
        %v2971 = vmul.f32 %v2957, %v2935
        %v2972 = vmul.f32 %v2957, %v2936
        %v2973 = vmul.f32 %v2957, %v2937
        %v2974 = vmul.f32 %v2957, %v2938
        %v2975 = vmul.f32 %v2957, %v2939
        %v2976 = vmul.f32 %v2957, %v2940
        %v2977 = vmul.f32 %v2957, %v2941
        %v2978 = vmul.f32 %v2957, %v2942
        %v2979 = vmul.f32 %v2957, %v2943
        %v2980 = vmul.f32 %v2957, %v2944
        %v2981 = vmul.f32 %v2957, %v2945
        %v2982 = vmul.f32 %v2957, %v2946
        %v2983 = vmul.f32 %v2957, %v2947
        %v2984 = vmul.f32 %v2957, %v2948
        %v2985 = vmul.f32 %v2957, %v2949
        %v2986 = vmul.f32 %v2957, %v2950
        %v2987 = vmul.f32 %v2957, %v2951
        %v2988 = vmul.f32 %v2957, %v2952
        %v2989 = vmul.f32 %v2957, %v2953
        %v2990 = vadd.f32 %v2890, %v2958
        %v2991 = vadd.f32 %v2891, %v2959
        %v2992 = vadd.f32 %v2892, %v2960
        %v2993 = vadd.f32 %v2893, %v2961
        %v2994 = vadd.f32 %v2894, %v2962
        %v2995 = vadd.f32 %v2895, %v2963
        %v2996 = vadd.f32 %v2896, %v2964
        %v2997 = vadd.f32 %v2897, %v2965
        %v2998 = vadd.f32 %v2898, %v2966
        %v2999 = vadd.f32 %v2899, %v2967
        %v3000 = vadd.f32 %v2900, %v2968
        %v3001 = vadd.f32 %v2901, %v2969
        %v3002 = vadd.f32 %v2902, %v2970
        %v3003 = vadd.f32 %v2903, %v2971
        %v3004 = vadd.f32 %v2904, %v2972
        %v3005 = vadd.f32 %v2905, %v2973
        %v3006 = vadd.f32 %v2906, %v2974
        %v3007 = vadd.f32 %v2907, %v2975
        %v3008 = vadd.f32 %v2908, %v2976
        %v3009 = vadd.f32 %v2909, %v2977
        %v3010 = vadd.f32 %v2910, %v2978
        %v3011 = vadd.f32 %v2911, %v2979
        %v3012 = vadd.f32 %v2912, %v2980
        %v3013 = vadd.f32 %v2913, %v2981
        %v3014 = vadd.f32 %v2914, %v2982
        %v3015 = vadd.f32 %v2915, %v2983
        %v3016 = vadd.f32 %v2916, %v2984
        %v3017 = vadd.f32 %v2917, %v2985
        %v3018 = vadd.f32 %v2918, %v2986
        %v3019 = vadd.f32 %v2919, %v2987
        %v3020 = vadd.f32 %v2920, %v2988
        %v3021 = vadd.f32 %v2921, %v2989
        %v3022 = vld [vmem:[%s8] sm:$0x1]
        %v3024 = vlaneseq
        %v3025 = vshrl.u32 %v3024, 7
        %v3026 = vsub.s32 0, %v3025
        %v3027 = vrot.slane %v3022, %v3026
        %v3029 = vadd.f32 %v2990, %v3027
        %v3030 = vadd.f32 %v2991, %v3027
        %v3031 = vadd.f32 %v2992, %v3027
        %v3032 = vadd.f32 %v2993, %v3027
        %v3033 = vadd.f32 %v2994, %v3027
        %v3034 = vadd.f32 %v2995, %v3027
        %v3035 = vadd.f32 %v2996, %v3027
        %v3036 = vadd.f32 %v2997, %v3027
        %v3037 = vadd.f32 %v2998, %v3027
        %v3038 = vadd.f32 %v2999, %v3027
        %v3039 = vadd.f32 %v3000, %v3027
        %v3040 = vadd.f32 %v3001, %v3027
        %v3041 = vadd.f32 %v3002, %v3027
        %v3042 = vadd.f32 %v3003, %v3027
        %v3043 = vadd.f32 %v3004, %v3027
        %v3044 = vadd.f32 %v3005, %v3027
        %v3045 = vadd.f32 %v3006, %v3027
        %v3046 = vadd.f32 %v3007, %v3027
        %v3047 = vadd.f32 %v3008, %v3027
        %v3048 = vadd.f32 %v3009, %v3027
        %v3049 = vadd.f32 %v3010, %v3027
        %v3050 = vadd.f32 %v3011, %v3027
        %v3051 = vadd.f32 %v3012, %v3027
        %v3052 = vadd.f32 %v3013, %v3027
        %v3053 = vadd.f32 %v3014, %v3027
        %v3054 = vadd.f32 %v3015, %v3027
        %v3055 = vadd.f32 %v3016, %v3027
        %v3056 = vadd.f32 %v3017, %v3027
        %v3057 = vadd.f32 %v3018, %v3027
        %v3058 = vadd.f32 %v3019, %v3027
        %v3059 = vadd.f32 %v3020, %v3027
        %v3060 = vadd.f32 %v3021, %v3027
        %3061 = vst.msk [vmem:[%s350] sm:$0xff] %vm352, %v3029
        %3062 = vst.msk [vmem:[%s350 + $0x8] sm:$0xff] %vm352, %v3030
        %3063 = vst.msk [vmem:[%s350 + $0x10] sm:$0xff] %vm352, %v3031
        %3064 = vst.msk [vmem:[%s350 + $0x18] sm:$0xff] %vm352, %v3032
        %3065 = vst.msk [vmem:[%s350 + $0x20] sm:$0xff] %vm352, %v3033
        %3066 = vst.msk [vmem:[%s350 + $0x28] sm:$0xff] %vm352, %v3034
        %3067 = vst.msk [vmem:[%s350 + $0x30] sm:$0xff] %vm352, %v3035
        %3068 = vst.msk [vmem:[%s350 + $0x38] sm:$0xff] %vm352, %v3036
        %3069 = vst.msk [vmem:[%s350 + $0x40] sm:$0xff] %vm352, %v3037
        %3070 = vst.msk [vmem:[%s350 + $0x48] sm:$0xff] %vm352, %v3038
        %3071 = vst.msk [vmem:[%s350 + $0x50] sm:$0xff] %vm352, %v3039
        %3072 = vst.msk [vmem:[%s350 + $0x58] sm:$0xff] %vm352, %v3040
        %3073 = vst.msk [vmem:[%s350 + $0x60] sm:$0xff] %vm352, %v3041
        %3074 = vst.msk [vmem:[%s350 + $0x68] sm:$0xff] %vm352, %v3042
        %3075 = vst.msk [vmem:[%s350 + $0x70] sm:$0xff] %vm352, %v3043
        %3076 = vst.msk [vmem:[%s350 + $0x78] sm:$0xff] %vm352, %v3044
        %3077 = vst.msk [vmem:[%s350 + $0x80] sm:$0xff] %vm352, %v3045
        %3078 = vst.msk [vmem:[%s350 + $0x88] sm:$0xff] %vm352, %v3046
        %3079 = vst.msk [vmem:[%s350 + $0x90] sm:$0xff] %vm352, %v3047
        %3080 = vst.msk [vmem:[%s350 + $0x98] sm:$0xff] %vm352, %v3048
        %3081 = vst.msk [vmem:[%s350 + $0xa0] sm:$0xff] %vm352, %v3049
        %3082 = vst.msk [vmem:[%s350 + $0xa8] sm:$0xff] %vm352, %v3050
        %3083 = vst.msk [vmem:[%s350 + $0xb0] sm:$0xff] %vm352, %v3051
        %3084 = vst.msk [vmem:[%s350 + $0xb8] sm:$0xff] %vm352, %v3052
        %3085 = vst.msk [vmem:[%s350 + $0xc0] sm:$0xff] %vm352, %v3053
        %3086 = vst.msk [vmem:[%s350 + $0xc8] sm:$0xff] %vm352, %v3054
        %3087 = vst.msk [vmem:[%s350 + $0xd0] sm:$0xff] %vm352, %v3055
        %3088 = vst.msk [vmem:[%s350 + $0xd8] sm:$0xff] %vm352, %v3056
        %3089 = vst.msk [vmem:[%s350 + $0xe0] sm:$0xff] %vm352, %v3057
        %3090 = vst.msk [vmem:[%s350 + $0xe8] sm:$0xff] %vm352, %v3058
        %3091 = vst.msk [vmem:[%s350 + $0xf0] sm:$0xff] %vm352, %v3059
        %3092 = vst.msk [vmem:[%s350 + $0xf8] sm:$0xff] %vm352, %v3060
        %s3093 = sand.u32 %s228, 1
        %s3094 = scalar_lea.sflag [#allocation6], %s3093
        %s3095 = sand.u32 %s228, 1
        %s3096 = smul.addr %s3095, 256
        %s3097 = scalar_lea.vmem [#allocation7], %s3096
        // Predicated region
        $region61: #{tpu_custom_call.1} parent=55 // pred_check
          %p3098 = pneg %p238
        $region62: #{tpu_custom_call.1} parent=55 // pred_check_branch
          %3100 = sbr.rel (%p3098) target = $region64
        $region63: #{tpu_custom_call.1} parent=55 // pred_region
          %s3102 = ssub.s32 4096, 4096
          %3103 = vsyncadd %s3094, %s3102
          %s3104 = smul.addr %s26, 32
          %s3105 = smul.addr %s3104, 128
          %s3106 = scalar_lea.hbm %s9, %s3105
          %s3107 = sshll.u32 %s3097, 4
          %s3108 = int_to_ptr.vmem [resolvable:$true] %s3107
          %3113 = dma.vmem_to_hbm [thread:$0]  %s3108, 4096, %s3106, %s3094, 128, 128, 8
        $region64: #{tpu_custom_call.1} parent=55 // pred_fallthru
          _
      $region56: #{tpu_custom_call.1} parent=5 // pred_fallthru
        _
      %p3114 = scmp.le.s32.totalorder 2, %s21
      // Predicated region
      $region65: #{tpu_custom_call.1} parent=5 // pred_check
        %p3115 = pneg %p3114
      $region66: #{tpu_custom_call.1} parent=5 // pred_check_branch
        %3117 = sbr.rel (%p3115) target = $region68
      $region67: #{tpu_custom_call.1} parent=5 // pred_region
        %s3118 = ssub.s32 %s21, 2
        // Predicated region
        $region69: #{tpu_custom_call.1} parent=67 // pred_check
          %p3119 = pneg %p244
        $region70: #{tpu_custom_call.1} parent=67 // pred_check_branch
          %3121 = sbr.rel (%p3119) target = $region72
        $region71: #{tpu_custom_call.1} parent=67 // pred_region
          %s3122 = sand.u32 %s229, 1
          %s3123 = scalar_lea.sflag [#allocation6], %s3122
          %s3124 = sand.u32 %s229, 1
          %s3125 = smul.addr %s3124, 256
          %s3126 = scalar_lea.vmem [#allocation7], %s3125
          %3127 = dma.done %s3123, 4096
        $region72: #{tpu_custom_call.1} parent=67 // pred_fallthru
          _
      $region68: #{tpu_custom_call.1} parent=5 // pred_fallthru
        _
    $region6: #{tpu_custom_call.1} parent=1 // loop_footer
      %s25 = sadd.s32 1, %s21
    $region7: #{tpu_custom_call.1} parent=1 // loop_footer_branch
      %20 = sbr.rel target = $region3
    $region8: #{tpu_custom_call.1} parent=1 // loop_exit
      _
    %3128 = vsyncpa [#allocation5], 1
    %s3129 = scalar_lea.sflag [#allocation5], 1
    %3130 = vsyncpa %s3129, 1
    %3131 = vsyncpa [#allocation6], 1
    %s3132 = scalar_lea.sflag [#allocation6], 1
    %3133 = vsyncpa %s3132, 1

</llo_original>
